<compile_context>
chip_gen: v5e
topology: v5e:2x2
jax: 0.10.0
libtpu: 0.0.40
codegen_flags: <defaults>
</compile_context>

<pallas_src>
import math
import numpy as np
import jax
import jax.numpy as jnp
from jax import lax
from jax.experimental import pallas as pl
from jax.experimental.pallas import tpu as pltpu
from jax.scipy.special import gammaln

EPSILON = 1e-8

SUBLANES = 8                      # rows per probe tile -> (8,128) f32 = 1 vreg
LANES = 128
PROBE_TILE = SUBLANES * LANES     # 1024 probes per grid step
ATOM_BLOCK = 8                    # atoms unrolled per inner grid step

# ---------------------------------------------------------------------------
# GTOs.__init__  (deterministic synthetic basis; buffers computed in numpy)
# ---------------------------------------------------------------------------
Ls_np = np.array([0, 0, 1, 2], dtype=np.int64)
expos_np = np.array([0.50, 1.25, 0.80, 1.60], dtype=np.float32)
gto_coeffs_np = np.array([1.0, 0.7, 1.3, 0.9], dtype=np.float32)  # unused (normalize=True)
NORMALIZE = True
LMAX = int(Ls_np.max())
assert LMAX <= 2, "spherical harmonics implemented up to L=2 for this basis"

rad_idx_np = np.repeat(np.arange(len(Ls_np)), 2 * Ls_np + 1)                       # (outdim,)
sph_idx_np = np.concatenate([np.arange(l * l, l * l + 2 * l + 1) for l in Ls_np])  # (outdim,)
OUTDIM = int(np.sum(2 * Ls_np + 1))
N_ORB = len(Ls_np)


def _generate_lognorm(Ls, expos):
    power = Ls.astype(np.float64) + 1.5
    ln = 0.5 * (np.log(2.0) + power * np.log(2.0 * expos.astype(np.float64))
                - np.asarray(gammaln(power)))
    return ln.astype(np.float32)


lognorm_np = _generate_lognorm(Ls_np, expos_np)

# Per-orbital constants baked into the kernels as PYTHON scalars (previously
# captured f32[10] jnp arrays -> pallas trace error).
_EXPO = [float(v) for v in expos_np]
_LOGNORM = [float(v) for v in lognorm_np]
_L = [int(v) for v in Ls_np]
_RAD_IDX = [int(v) for v in rad_idx_np]
_SPH_IDX = [int(v) for v in sph_idx_np]

# e3nn real spherical harmonics, normalization='integral', reorder=False.
_K0 = 0.5 / math.sqrt(math.pi)            # Y_00
_K1 = math.sqrt(3.0) * _K0                # l=1 (x, y, z)
_K2 = math.sqrt(15.0) * _K0               # l=2 xz / xy / yz / (z^2-x^2)/2
_K2B = math.sqrt(5.0) * _K0               # l=2 m=0 term


# ---------------------------------------------------------------------------
# Kernel-side compute
# ---------------------------------------------------------------------------
def _sh_rows(x, y, z):
    """e3nn real SH rows (integral norm, reorder=False), flattened l=0..LMAX.
    Entry 0 is a python float (the constant Y00); others are (8,128) tiles."""
    rows = [_K0]
    if LMAX >= 1:
        rows += [_K1 * x, _K1 * y, _K1 * z]
    if LMAX >= 2:
        rows += [_K2 * (x * z),
                 _K2 * (x * y),
                 _K2B * (y * y - 0.5 * (x * x + z * z)),
                 _K2 * (y * z),
                 (0.5 * _K2) * (z * z - x * x)]
    return rows


def _atom_terms(px, py, pz, pb, ab, ax, ay, az):
    """Masked unique-orbital radials + SH rows for one atom vs one probe tile."""
    vx = px - ax
    vy = py - ay
    vz = pz - az
    r2 = vx * vx + vy * vy + vz * vz
    rn = jnp.sqrt(r2)                          # |vec|
    inv_rn = lax.rsqrt(r2 + 1e-24)             # direction normalization (no divide)
    # NOTE: at r->0 the l>=1 harmonics go to 0 here, while e3nn would give NaN.
    x = vx * inv_rn
    y = vy * inv_rn
    z = vz * inv_rn
    r = rn + EPSILON                           # torch: norm + EPSILON
    rr = r * r
    same_batch = pb == ab                      # cross-batch / padding -> 0 contribution
    rad = []
    for k in range(N_ORB):                     # one exp per UNIQUE orbital (4 here)
        g = jnp.exp(_LOGNORM[k] - _EXPO[k] * rr)
        if _L[k] == 1:
            g = g * r                          # r^L by multiplication (no log)
        elif _L[k] == 2:
            g = g * rr
        rad.append(jnp.where(same_batch, g, 0.0))
    return rad, _sh_rows(x, y, z)


def gto_contract_kernel(pcoord_ref, pbatch_ref, abatch_ref, axyz_ref, acoef_ref, out_ref):
    """out[probe] += sum_atoms sum_ch GTO_ch(probe - atom) * coeffs[atom, ch]."""
    j = pl.program_id(1)

    @pl.when(j == 0)
    def _init():
        out_ref[...] = jnp.zeros_like(out_ref)

    px = pcoord_ref[0]                        # (8,128) tiles
    py = pcoord_ref[1]
    pz = pcoord_ref[2]
    pb = pbatch_ref[...]

    acc = jnp.zeros_like(px)
    for k in range(ATOM_BLOCK):               # static unroll over the atom block
        a = j * ATOM_BLOCK + k
        ab = abatch_ref[a]                    # SMEM scalar reads (once per tile-atom)
        ax = axyz_ref[a * 3]
        ay = axyz_ref[a * 3 + 1]
        az = axyz_ref[a * 3 + 2]
        rad, sh = _atom_terms(px, py, pz, pb, ab, ax, ay, az)
        for ch in range(OUTDIM):              # per-channel accumulation, no concat/reduce
            c = acoef_ref[a * OUTDIM + ch]
            acc = acc + (c * sh[_SPH_IDX[ch]]) * rad[_RAD_IDX[ch]]
    out_ref[...] += acc


def gto_feat_kernel(pcoord_ref, pbatch_ref, abatch_ref, axyz_ref, out_ref):
    """out[ch, probe] += sum_atoms GTO_ch(probe - atom)   (coeffs=None path)."""
    j = pl.program_id(1)

    @pl.when(j == 0)
    def _init():
        out_ref[...] = jnp.zeros_like(out_ref)

    px = pcoord_ref[0]
    py = pcoord_ref[1]
    pz = pcoord_ref[2]
    pb = pbatch_ref[...]

    acc = [jnp.zeros_like(px) for _ in range(OUTDIM)]
    for k in range(ATOM_BLOCK):
        a = j * ATOM_BLOCK + k
        ab = abatch_ref[a]
        ax = axyz_ref[a * 3]
        ay = axyz_ref[a * 3 + 1]
        az = axyz_ref[a * 3 + 2]
        rad, sh = _atom_terms(px, py, pz, pb, ab, ax, ay, az)
        for ch in range(OUTDIM):
            acc[ch] = acc[ch] + sh[_SPH_IDX[ch]] * rad[_RAD_IDX[ch]]
    for ch in range(OUTDIM):
        out_ref[ch] += acc[ch]


# ---------------------------------------------------------------------------
# GTOs.forward  (pbc=False, cutoff=None, expo_scaling=None)
# ---------------------------------------------------------------------------
def _round_up(n, m):
    return ((n + m - 1) // m) * m


def gtos_forward(probe_coords, atom_coords, n_probes, n_atoms, coeffs=None):
    n_probes = np.asarray(n_probes, dtype=np.int64)
    n_atoms = np.asarray(n_atoms, dtype=np.int64)
    bsz = n_probes.shape[0]
    P = int(n_probes.sum())
    A = int(n_atoms.sum())

    # Batch-id masking replaces the torch pair-index construction: summing the
    # masked same-batch contributions over all atoms == pair-list + scatter.
    probe_batch = np.repeat(np.arange(bsz, dtype=np.int32), n_probes)
    atom_batch = np.repeat(np.arange(bsz, dtype=np.int32), n_atoms)

    P_pad = _round_up(max(P, 1), PROBE_TILE)
    R_pad = P_pad // LANES
    A_pad = _round_up(max(A, 1), ATOM_BLOCK)

    # probes: (3, R_pad, 128) f32 tiles (probe p -> row p//128, lane p%128)
    pcoord = jnp.pad(probe_coords.astype(jnp.float32), ((0, P_pad - P), (0, 0)))
    pcoord = jnp.transpose(pcoord).reshape(3, R_pad, LANES)
    pbatch_np = np.full((P_pad,), -1, dtype=np.int32)      # -1 = padded probe
    pbatch_np[:P] = probe_batch
    pbatch = jnp.asarray(pbatch_np.reshape(R_pad, LANES))

    # atoms: small flat SMEM tables, padded atoms get batch -2 (never matched)
    abatch_np = np.full((A_pad,), -2, dtype=np.int32)
    abatch_np[:A] = atom_batch
    abatch = jnp.asarray(abatch_np)
    axyz = jnp.pad(atom_coords.astype(jnp.float32), ((0, A_pad - A), (0, 0))).reshape(-1)
    # TODO(synk): for very large atom counts, chunk/DMA the atom tables instead
    #             of holding them in SMEM in one piece.

    grid = (R_pad // SUBLANES, A_pad // ATOM_BLOCK)        # (parallel, reduction-last)
    probe_spec = pl.BlockSpec((3, SUBLANES, LANES), lambda i, j: (0, i, 0))
    pbatch_spec = pl.BlockSpec((SUBLANES, LANES), lambda i, j: (i, 0))
    smem_spec = pl.BlockSpec(memory_space=pltpu.MemorySpace.SMEM)
    cparams = pltpu.CompilerParams(dimension_semantics=("parallel", "arbitrary"))

    if coeffs is not None:
        acoef = jnp.pad(coeffs.astype(jnp.float32), ((0, A_pad - A), (0, 0))).reshape(-1)
        out = pl.pallas_call(
            gto_contract_kernel,
            out_shape=jax.ShapeDtypeStruct((R_pad, LANES), jnp.float32),
            grid=grid,
            in_specs=[probe_spec, pbatch_spec, smem_spec, smem_spec, smem_spec],
            out_specs=pl.BlockSpec((SUBLANES, LANES), lambda i, j: (i, 0)),
            compiler_params=cparams,
        )(pcoord, pbatch, abatch, axyz, acoef)
        return out.reshape(P_pad)[:P]                      # (total_probes,)
    else:
        out = pl.pallas_call(
            gto_feat_kernel,
            out_shape=jax.ShapeDtypeStruct((OUTDIM, R_pad, LANES), jnp.float32),
            grid=grid,
            in_specs=[probe_spec, pbatch_spec, smem_spec, smem_spec],
            out_specs=pl.BlockSpec((OUTDIM, SUBLANES, LANES), lambda i, j: (0, i, 0)),
            compiler_params=cparams,
        )(pcoord, pbatch, abatch, axyz)
        # only the tiny per-probe result is transposed (never pair-sized data)
        return jnp.transpose(out.reshape(OUTDIM, P_pad)[:, :P])   # (total_probes, OUTDIM)


# ---------------------------------------------------------------------------
# Pure-JAX reference (direct port of the torch pair-list forward) for checks
# ---------------------------------------------------------------------------
def _reference_forward(probe_coords, atom_coords, n_probes, n_atoms, coeffs=None):
    n_probes = np.asarray(n_probes, dtype=np.int64)
    n_atoms = np.asarray(n_atoms, dtype=np.int64)
    n_pairs = n_probes * n_atoms
    off_p = np.repeat(np.cumsum(n_probes) - n_probes, n_pairs)
    off_a = np.repeat(np.cumsum(n_atoms) - n_atoms, n_pairs)
    off_pair = np.repeat(np.cumsum(n_pairs) - n_pairs, n_pairs)
    total = int(n_pairs.sum())
    cnt = np.arange(total) - off_pair
    nae = np.repeat(n_atoms, n_pairs)
    idx_p = (cnt // nae + off_p).astype(np.int32)
    idx_a = (cnt % nae + off_a).astype(np.int32)

    vecs = probe_coords[idx_p] - atom_coords[idx_a]                 # (Npair, 3)
    rn = jnp.linalg.norm(vecs, axis=-1, keepdims=True)
    r = rn + EPSILON
    u = vecs / rn
    x, y, z = u[:, 0:1], u[:, 1:2], u[:, 2:3]
    sh = jnp.concatenate(
        [jnp.full_like(x, _K0), _K1 * x, _K1 * y, _K1 * z,
         _K2 * x * z, _K2 * x * y, _K2B * (y * y - 0.5 * (x * x + z * z)),
         _K2 * y * z, (0.5 * _K2) * (z * z - x * x)], axis=1)       # (Npair, 9)
    log_rad = (-jnp.asarray(expos_np) * (r * r)
               + jnp.asarray(Ls_np, jnp.float32) * jnp.log(r)
               + jnp.asarray(lognorm_np))                           # (Npair, 4)
    radial = jnp.exp(log_rad)
    unc = radial[:, rad_idx_np] * sh[:, sph_idx_np]                 # (Npair, OUTDIM)
    seg = jnp.asarray(idx_p)
    num_p = int(n_probes.sum())
    if coeffs is not None:
        per_pair = jnp.sum(unc * coeffs[idx_a], axis=1)
        return jax.ops.segment_sum(per_pair, seg, num_segments=num_p)
    return jax.ops.segment_sum(unc, seg, num_segments=num_p)


# ---------------------------------------------------------------------------
if __name__ == "__main__":
    key = jax.random.PRNGKey(0)
    k1, k2, k3 = jax.random.split(key, 3)

    n_probes = np.array([700, 900], dtype=np.int32)    # bsz = 2 -> 2 probe tiles
    n_atoms = np.array([5, 7], dtype=np.int32)         # 12 atoms -> 2 atom blocks
    P = int(n_probes.sum())
    A = int(n_atoms.sum())

    probe_coords = jax.random.normal(k1, (P, 3), dtype=jnp.float32)
    atom_coords = jax.random.normal(k2, (A, 3), dtype=jnp.float32)
    coeffs = jax.random.normal(k3, (A, OUTDIM), dtype=jnp.float32)

    out = jax.block_until_ready(
        gtos_forward(probe_coords, atom_coords, n_probes, n_atoms, coeffs=coeffs))
    feats = jax.block_until_ready(
        gtos_forward(probe_coords, atom_coords, n_probes, n_atoms, coeffs=None))

    assert out.shape == (P,)
    assert feats.shape == (P, OUTDIM)
    assert bool(jnp.all(jnp.isfinite(out))) and bool(jnp.all(jnp.isfinite(feats)))

    ref_out = _reference_forward(probe_coords, atom_coords, n_probes, n_atoms, coeffs=coeffs)
    ref_feats = _reference_forward(probe_coords, atom_coords, n_probes, n_atoms, coeffs=None)
    assert bool(jnp.allclose(out, ref_out, rtol=1e-2, atol=1e-3)), \
        float(jnp.max(jnp.abs(out - ref_out)))
    assert bool(jnp.allclose(feats, ref_feats, rtol=1e-2, atol=1e-3)), \
        float(jnp.max(jnp.abs(feats - ref_feats)))

    print("KERNEL_OK")
</pallas_src>

<mosaic_0001>
module attributes {stable_mosaic.version = 11 : i64} {
  func.func @gto_contract_kernel(%arg0: i32, %arg1: i32, %arg2: memref<3x8x128xf32, #tpu.memory_space<vmem>>, %arg3: memref<8x128xi32, #tpu.memory_space<vmem>>, %arg4: memref<16xi32, #tpu.memory_space<smem>>, %arg5: memref<48xf32, #tpu.memory_space<smem>>, %arg6: memref<160xf32, #tpu.memory_space<smem>>, %arg7: memref<8x128xf32, #tpu.memory_space<vmem>>) attributes {dimension_semantics = [#tpu.dimension_semantics<parallel>, #tpu.dimension_semantics<arbitrary>], iteration_bounds = array<i64: 2, 2>, scalar_prefetch = 0 : i64, scratch_operands = 0 : i64, tpu.core_type = #tpu.core_type<tc>, window_params = [{transform_indices = @transform_0, window_bounds = array<i64: 3, 8, 128>}, {transform_indices = @transform_1, window_bounds = array<i64: 8, 128>}, {transform_indices = @transform_2, window_bounds = array<i64: 16>}, {transform_indices = @transform_3, window_bounds = array<i64: 48>}, {transform_indices = @transform_4, window_bounds = array<i64: 160>}, {transform_indices = @transform_5, window_bounds = array<i64: 8, 128>}]} {
    %c0_i32 = arith.constant 0 : i32
    %0 = arith.cmpi eq, %arg1, %c0_i32 : i32
    %1 = arith.extui %0 : i1 to i32
    %c0_i32_0 = arith.constant 0 : i32
    %2 = arith.cmpi ne, %1, %c0_i32_0 : i32
    scf.if %2 {
      %cst_419 = arith.constant 0.000000e+00 : f32
      %1430 = vector.broadcast %cst_419 : f32 to vector<8x128xf32>
      %c0_420 = arith.constant 0 : index
      %c0_421 = arith.constant 0 : index
      %1431 = vector.load %arg7[%c0_420, %c0_421] : memref<8x128xf32, #tpu.memory_space<vmem>>, vector<8x128xf32>
      tpu.vector_store %arg7[%c0_420, %c0_421], %1430 {strides = array<i32>} : memref<8x128xf32, #tpu.memory_space<vmem>>, vector<8x128xf32>,
    } else {
    }
    %c0 = arith.constant 0 : index
    %c0_1 = arith.constant 0 : index
    %c0_2 = arith.constant 0 : index
    %3 = vector.load %arg2[%c0, %c0_1, %c0_2] : memref<3x8x128xf32, #tpu.memory_space<vmem>>, vector<1x8x128xf32>
    %4 = vector.shape_cast %3 : vector<1x8x128xf32> to vector<8x128xf32>
    %c1 = arith.constant 1 : index
    %c0_3 = arith.constant 0 : index
    %c0_4 = arith.constant 0 : index
    %5 = vector.load %arg2[%c1, %c0_3, %c0_4] : memref<3x8x128xf32, #tpu.memory_space<vmem>>, vector<1x8x128xf32>
    %6 = vector.shape_cast %5 : vector<1x8x128xf32> to vector<8x128xf32>
    %c2 = arith.constant 2 : index
    %c0_5 = arith.constant 0 : index
    %c0_6 = arith.constant 0 : index
    %7 = vector.load %arg2[%c2, %c0_5, %c0_6] : memref<3x8x128xf32, #tpu.memory_space<vmem>>, vector<1x8x128xf32>
    %8 = vector.shape_cast %7 : vector<1x8x128xf32> to vector<8x128xf32>
    %c0_7 = arith.constant 0 : index
    %c0_8 = arith.constant 0 : index
    %9 = vector.load %arg3[%c0_7, %c0_8] : memref<8x128xi32, #tpu.memory_space<vmem>>, vector<8x128xi32>
    %cst = arith.constant 0.000000e+00 : f32
    %10 = vector.broadcast %cst : f32 to vector<8x128xf32>
    %c8_i32 = arith.constant 8 : i32
    %11 = arith.muli %arg1, %c8_i32 : i32
    %c0_i32_9 = arith.constant 0 : i32
    %12 = arith.addi %11, %c0_i32_9 : i32
    %13 = arith.index_cast %12 : i32 to index
    %14 = memref.load %arg4[%13] : memref<16xi32, #tpu.memory_space<smem>>
    %c3_i32 = arith.constant 3 : i32
    %15 = arith.muli %12, %c3_i32 : i32
    %16 = arith.index_cast %15 : i32 to index
    %17 = memref.load %arg5[%16] : memref<48xf32, #tpu.memory_space<smem>>
    %c3_i32_10 = arith.constant 3 : i32
    %18 = arith.muli %12, %c3_i32_10 : i32
    %c1_i32 = arith.constant 1 : i32
    %19 = arith.addi %18, %c1_i32 : i32
    %20 = arith.index_cast %19 : i32 to index
    %21 = memref.load %arg5[%20] : memref<48xf32, #tpu.memory_space<smem>>
    %c3_i32_11 = arith.constant 3 : i32
    %22 = arith.muli %12, %c3_i32_11 : i32
    %c2_i32 = arith.constant 2 : i32
    %23 = arith.addi %22, %c2_i32 : i32
    %24 = arith.index_cast %23 : i32 to index
    %25 = memref.load %arg5[%24] : memref<48xf32, #tpu.memory_space<smem>>
    %26 = vector.broadcast %17 : f32 to vector<8x128xf32>
    %27 = arith.subf %4, %26 : vector<8x128xf32>
    %28 = vector.broadcast %21 : f32 to vector<8x128xf32>
    %29 = arith.subf %6, %28 : vector<8x128xf32>
    %30 = vector.broadcast %25 : f32 to vector<8x128xf32>
    %31 = arith.subf %8, %30 : vector<8x128xf32>
    %32 = arith.mulf %27, %27 : vector<8x128xf32>
    %33 = arith.mulf %29, %29 : vector<8x128xf32>
    %34 = arith.addf %32, %33 : vector<8x128xf32>
    %35 = arith.mulf %31, %31 : vector<8x128xf32>
    %36 = arith.addf %34, %35 : vector<8x128xf32>
    %37 = math.sqrt %36 : vector<8x128xf32>
    %cst_12 = arith.constant 1.000000e-24 : f32
    %38 = vector.broadcast %cst_12 : f32 to vector<8x128xf32>
    %39 = arith.addf %36, %38 : vector<8x128xf32>
    %40 = math.rsqrt %39 : vector<8x128xf32>
    %41 = arith.mulf %27, %40 : vector<8x128xf32>
    %42 = arith.mulf %29, %40 : vector<8x128xf32>
    %43 = arith.mulf %31, %40 : vector<8x128xf32>
    %cst_13 = arith.constant 9.99999993E-9 : f32
    %44 = vector.broadcast %cst_13 : f32 to vector<8x128xf32>
    %45 = arith.addf %37, %44 : vector<8x128xf32>
    %46 = arith.mulf %45, %45 : vector<8x128xf32>
    %47 = vector.broadcast %14 : i32 to vector<8x128xi32>
    %48 = arith.cmpi eq, %9, %47 : vector<8x128xi32>
    %cst_14 = arith.constant 5.000000e-01 : f32
    %49 = vector.broadcast %cst_14 : f32 to vector<8x128xf32>
    %50 = arith.mulf %49, %46 : vector<8x128xf32>
    %cst_15 = arith.constant 0.40696454 : f32
    %51 = vector.broadcast %cst_15 : f32 to vector<8x128xf32>
    %52 = arith.subf %51, %50 : vector<8x128xf32>
    %53 = math.exp %52 : vector<8x128xf32>
    %cst_16 = arith.constant 0.000000e+00 : f32
    %54 = vector.broadcast %cst_16 : f32 to vector<8x128xf32>
    %55 = arith.select %48, %53, %54 : vector<8x128xi1>, vector<8x128xf32>
    %cst_17 = arith.constant 1.250000e+00 : f32
    %56 = vector.broadcast %cst_17 : f32 to vector<8x128xf32>
    %57 = arith.mulf %56, %46 : vector<8x128xf32>
    %cst_18 = arith.constant 1.09418261 : f32
    %58 = vector.broadcast %cst_18 : f32 to vector<8x128xf32>
    %59 = arith.subf %58, %57 : vector<8x128xf32>
    %60 = math.exp %59 : vector<8x128xf32>
    %cst_19 = arith.constant 0.000000e+00 : f32
    %61 = vector.broadcast %cst_19 : f32 to vector<8x128xf32>
    %62 = arith.select %48, %60, %61 : vector<8x128xi1>, vector<8x128xf32>
    %cst_20 = arith.constant 8.000000e-01 : f32
    %63 = vector.broadcast %cst_20 : f32 to vector<8x128xf32>
    %64 = arith.mulf %63, %46 : vector<8x128xf32>
    %cst_21 = arith.constant 0.791736662 : f32
    %65 = vector.broadcast %cst_21 : f32 to vector<8x128xf32>
    %66 = arith.subf %65, %64 : vector<8x128xf32>
    %67 = math.exp %66 : vector<8x128xf32>
    %68 = arith.mulf %67, %45 : vector<8x128xf32>
    %cst_22 = arith.constant 0.000000e+00 : f32
    %69 = vector.broadcast %cst_22 : f32 to vector<8x128xf32>
    %70 = arith.select %48, %68, %69 : vector<8x128xi1>, vector<8x128xf32>
    %cst_23 = arith.constant 1.600000e+00 : f32
    %71 = vector.broadcast %cst_23 : f32 to vector<8x128xf32>
    %72 = arith.mulf %71, %46 : vector<8x128xf32>
    %cst_24 = arith.constant 1.78160071 : f32
    %73 = vector.broadcast %cst_24 : f32 to vector<8x128xf32>
    %74 = arith.subf %73, %72 : vector<8x128xf32>
    %75 = math.exp %74 : vector<8x128xf32>
    %76 = arith.mulf %75, %46 : vector<8x128xf32>
    %cst_25 = arith.constant 0.000000e+00 : f32
    %77 = vector.broadcast %cst_25 : f32 to vector<8x128xf32>
    %78 = arith.select %48, %76, %77 : vector<8x128xi1>, vector<8x128xf32>
    %cst_26 = arith.constant 0.488602519 : f32
    %79 = vector.broadcast %cst_26 : f32 to vector<8x128xf32>
    %80 = arith.mulf %79, %41 : vector<8x128xf32>
    %cst_27 = arith.constant 0.488602519 : f32
    %81 = vector.broadcast %cst_27 : f32 to vector<8x128xf32>
    %82 = arith.mulf %81, %42 : vector<8x128xf32>
    %cst_28 = arith.constant 0.488602519 : f32
    %83 = vector.broadcast %cst_28 : f32 to vector<8x128xf32>
    %84 = arith.mulf %83, %43 : vector<8x128xf32>
    %85 = arith.mulf %41, %43 : vector<8x128xf32>
    %cst_29 = arith.constant 1.09254849 : f32
    %86 = vector.broadcast %cst_29 : f32 to vector<8x128xf32>
    %87 = arith.mulf %86, %85 : vector<8x128xf32>
    %88 = arith.mulf %41, %42 : vector<8x128xf32>
    %cst_30 = arith.constant 1.09254849 : f32
    %89 = vector.broadcast %cst_30 : f32 to vector<8x128xf32>
    %90 = arith.mulf %89, %88 : vector<8x128xf32>
    %91 = arith.mulf %42, %42 : vector<8x128xf32>
    %92 = arith.mulf %41, %41 : vector<8x128xf32>
    %93 = arith.mulf %43, %43 : vector<8x128xf32>
    %94 = arith.addf %92, %93 : vector<8x128xf32>
    %cst_31 = arith.constant 5.000000e-01 : f32
    %95 = vector.broadcast %cst_31 : f32 to vector<8x128xf32>
    %96 = arith.mulf %95, %94 : vector<8x128xf32>
    %97 = arith.subf %91, %96 : vector<8x128xf32>
    %cst_32 = arith.constant 0.63078314 : f32
    %98 = vector.broadcast %cst_32 : f32 to vector<8x128xf32>
    %99 = arith.mulf %98, %97 : vector<8x128xf32>
    %100 = arith.mulf %42, %43 : vector<8x128xf32>
    %cst_33 = arith.constant 1.09254849 : f32
    %101 = vector.broadcast %cst_33 : f32 to vector<8x128xf32>
    %102 = arith.mulf %101, %100 : vector<8x128xf32>
    %103 = arith.mulf %43, %43 : vector<8x128xf32>
    %104 = arith.mulf %41, %41 : vector<8x128xf32>
    %105 = arith.subf %103, %104 : vector<8x128xf32>
    %cst_34 = arith.constant 0.546274245 : f32
    %106 = vector.broadcast %cst_34 : f32 to vector<8x128xf32>
    %107 = arith.mulf %106, %105 : vector<8x128xf32>
    %c10_i32 = arith.constant 10 : i32
    %108 = arith.muli %12, %c10_i32 : i32
    %c0_i32_35 = arith.constant 0 : i32
    %109 = arith.addi %108, %c0_i32_35 : i32
    %110 = arith.index_cast %109 : i32 to index
    %111 = memref.load %arg6[%110] : memref<160xf32, #tpu.memory_space<smem>>
    %cst_36 = arith.constant 0.282094806 : f32
    %112 = arith.mulf %111, %cst_36 : f32
    %113 = vector.broadcast %112 : f32 to vector<8x128xf32>
    %114 = arith.mulf %113, %55 : vector<8x128xf32>
    %115 = arith.addf %10, %114 : vector<8x128xf32>
    %c10_i32_37 = arith.constant 10 : i32
    %116 = arith.muli %12, %c10_i32_37 : i32
    %c1_i32_38 = arith.constant 1 : i32
    %117 = arith.addi %116, %c1_i32_38 : i32
    %118 = arith.index_cast %117 : i32 to index
    %119 = memref.load %arg6[%118] : memref<160xf32, #tpu.memory_space<smem>>
    %cst_39 = arith.constant 0.282094806 : f32
    %120 = arith.mulf %119, %cst_39 : f32
    %121 = vector.broadcast %120 : f32 to vector<8x128xf32>
    %122 = arith.mulf %121, %62 : vector<8x128xf32>
    %123 = arith.addf %115, %122 : vector<8x128xf32>
    %c10_i32_40 = arith.constant 10 : i32
    %124 = arith.muli %12, %c10_i32_40 : i32
    %c2_i32_41 = arith.constant 2 : i32
    %125 = arith.addi %124, %c2_i32_41 : i32
    %126 = arith.index_cast %125 : i32 to index
    %127 = memref.load %arg6[%126] : memref<160xf32, #tpu.memory_space<smem>>
    %128 = vector.broadcast %127 : f32 to vector<8x128xf32>
    %129 = arith.mulf %128, %80 : vector<8x128xf32>
    %130 = arith.mulf %129, %70 : vector<8x128xf32>
    %131 = arith.addf %123, %130 : vector<8x128xf32>
    %c10_i32_42 = arith.constant 10 : i32
    %132 = arith.muli %12, %c10_i32_42 : i32
    %c3_i32_43 = arith.constant 3 : i32
    %133 = arith.addi %132, %c3_i32_43 : i32
    %134 = arith.index_cast %133 : i32 to index
    %135 = memref.load %arg6[%134] : memref<160xf32, #tpu.memory_space<smem>>
    %136 = vector.broadcast %135 : f32 to vector<8x128xf32>
    %137 = arith.mulf %136, %82 : vector<8x128xf32>
    %138 = arith.mulf %137, %70 : vector<8x128xf32>
    %139 = arith.addf %131, %138 : vector<8x128xf32>
    %c10_i32_44 = arith.constant 10 : i32
    %140 = arith.muli %12, %c10_i32_44 : i32
    %c4_i32 = arith.constant 4 : i32
    %141 = arith.addi %140, %c4_i32 : i32
    %142 = arith.index_cast %141 : i32 to index
    %143 = memref.load %arg6[%142] : memref<160xf32, #tpu.memory_space<smem>>
    %144 = vector.broadcast %143 : f32 to vector<8x128xf32>
    %145 = arith.mulf %144, %84 : vector<8x128xf32>
    %146 = arith.mulf %145, %70 : vector<8x128xf32>
    %147 = arith.addf %139, %146 : vector<8x128xf32>
    %c10_i32_45 = arith.constant 10 : i32
    %148 = arith.muli %12, %c10_i32_45 : i32
    %c5_i32 = arith.constant 5 : i32
    %149 = arith.addi %148, %c5_i32 : i32
    %150 = arith.index_cast %149 : i32 to index
    %151 = memref.load %arg6[%150] : memref<160xf32, #tpu.memory_space<smem>>
    %152 = vector.broadcast %151 : f32 to vector<8x128xf32>
    %153 = arith.mulf %152, %87 : vector<8x128xf32>
    %154 = arith.mulf %153, %78 : vector<8x128xf32>
    %155 = arith.addf %147, %154 : vector<8x128xf32>
    %c10_i32_46 = arith.constant 10 : i32
    %156 = arith.muli %12, %c10_i32_46 : i32
    %c6_i32 = arith.constant 6 : i32
    %157 = arith.addi %156, %c6_i32 : i32
    %158 = arith.index_cast %157 : i32 to index
    %159 = memref.load %arg6[%158] : memref<160xf32, #tpu.memory_space<smem>>
    %160 = vector.broadcast %159 : f32 to vector<8x128xf32>
    %161 = arith.mulf %160, %90 : vector<8x128xf32>
    %162 = arith.mulf %161, %78 : vector<8x128xf32>
    %163 = arith.addf %155, %162 : vector<8x128xf32>
    %c10_i32_47 = arith.constant 10 : i32
    %164 = arith.muli %12, %c10_i32_47 : i32
    %c7_i32 = arith.constant 7 : i32
    %165 = arith.addi %164, %c7_i32 : i32
    %166 = arith.index_cast %165 : i32 to index
    %167 = memref.load %arg6[%166] : memref<160xf32, #tpu.memory_space<smem>>
    %168 = vector.broadcast %167 : f32 to vector<8x128xf32>
    %169 = arith.mulf %168, %99 : vector<8x128xf32>
    %170 = arith.mulf %169, %78 : vector<8x128xf32>
    %171 = arith.addf %163, %170 : vector<8x128xf32>
    %c10_i32_48 = arith.constant 10 : i32
    %172 = arith.muli %12, %c10_i32_48 : i32
    %c8_i32_49 = arith.constant 8 : i32
    %173 = arith.addi %172, %c8_i32_49 : i32
    %174 = arith.index_cast %173 : i32 to index
    %175 = memref.load %arg6[%174] : memref<160xf32, #tpu.memory_space<smem>>
    %176 = vector.broadcast %175 : f32 to vector<8x128xf32>
    %177 = arith.mulf %176, %102 : vector<8x128xf32>
    %178 = arith.mulf %177, %78 : vector<8x128xf32>
    %179 = arith.addf %171, %178 : vector<8x128xf32>
    %c10_i32_50 = arith.constant 10 : i32
    %180 = arith.muli %12, %c10_i32_50 : i32
    %c9_i32 = arith.constant 9 : i32
    %181 = arith.addi %180, %c9_i32 : i32
    %182 = arith.index_cast %181 : i32 to index
    %183 = memref.load %arg6[%182] : memref<160xf32, #tpu.memory_space<smem>>
    %184 = vector.broadcast %183 : f32 to vector<8x128xf32>
    %185 = arith.mulf %184, %107 : vector<8x128xf32>
    %186 = arith.mulf %185, %78 : vector<8x128xf32>
    %187 = arith.addf %179, %186 : vector<8x128xf32>
    %c8_i32_51 = arith.constant 8 : i32
    %188 = arith.muli %arg1, %c8_i32_51 : i32
    %c1_i32_52 = arith.constant 1 : i32
    %189 = arith.addi %188, %c1_i32_52 : i32
    %190 = arith.index_cast %189 : i32 to index
    %191 = memref.load %arg4[%190] : memref<16xi32, #tpu.memory_space<smem>>
    %c3_i32_53 = arith.constant 3 : i32
    %192 = arith.muli %189, %c3_i32_53 : i32
    %193 = arith.index_cast %192 : i32 to index
    %194 = memref.load %arg5[%193] : memref<48xf32, #tpu.memory_space<smem>>
    %c3_i32_54 = arith.constant 3 : i32
    %195 = arith.muli %189, %c3_i32_54 : i32
    %c1_i32_55 = arith.constant 1 : i32
    %196 = arith.addi %195, %c1_i32_55 : i32
    %197 = arith.index_cast %196 : i32 to index
    %198 = memref.load %arg5[%197] : memref<48xf32, #tpu.memory_space<smem>>
    %c3_i32_56 = arith.constant 3 : i32
    %199 = arith.muli %189, %c3_i32_56 : i32
    %c2_i32_57 = arith.constant 2 : i32
    %200 = arith.addi %199, %c2_i32_57 : i32
    %201 = arith.index_cast %200 : i32 to index
    %202 = memref.load %arg5[%201] : memref<48xf32, #tpu.memory_space<smem>>
    %203 = vector.broadcast %194 : f32 to vector<8x128xf32>
    %204 = arith.subf %4, %203 : vector<8x128xf32>
    %205 = vector.broadcast %198 : f32 to vector<8x128xf32>
    %206 = arith.subf %6, %205 : vector<8x128xf32>
    %207 = vector.broadcast %202 : f32 to vector<8x128xf32>
    %208 = arith.subf %8, %207 : vector<8x128xf32>
    %209 = arith.mulf %204, %204 : vector<8x128xf32>
    %210 = arith.mulf %206, %206 : vector<8x128xf32>
    %211 = arith.addf %209, %210 : vector<8x128xf32>
    %212 = arith.mulf %208, %208 : vector<8x128xf32>
    %213 = arith.addf %211, %212 : vector<8x128xf32>
    %214 = math.sqrt %213 : vector<8x128xf32>
    %cst_58 = arith.constant 1.000000e-24 : f32
    %215 = vector.broadcast %cst_58 : f32 to vector<8x128xf32>
    %216 = arith.addf %213, %215 : vector<8x128xf32>
    %217 = math.rsqrt %216 : vector<8x128xf32>
    %218 = arith.mulf %204, %217 : vector<8x128xf32>
    %219 = arith.mulf %206, %217 : vector<8x128xf32>
    %220 = arith.mulf %208, %217 : vector<8x128xf32>
    %cst_59 = arith.constant 9.99999993E-9 : f32
    %221 = vector.broadcast %cst_59 : f32 to vector<8x128xf32>
    %222 = arith.addf %214, %221 : vector<8x128xf32>
    %223 = arith.mulf %222, %222 : vector<8x128xf32>
    %224 = vector.broadcast %191 : i32 to vector<8x128xi32>
    %225 = arith.cmpi eq, %9, %224 : vector<8x128xi32>
    %cst_60 = arith.constant 5.000000e-01 : f32
    %226 = vector.broadcast %cst_60 : f32 to vector<8x128xf32>
    %227 = arith.mulf %226, %223 : vector<8x128xf32>
    %cst_61 = arith.constant 0.40696454 : f32
    %228 = vector.broadcast %cst_61 : f32 to vector<8x128xf32>
    %229 = arith.subf %228, %227 : vector<8x128xf32>
    %230 = math.exp %229 : vector<8x128xf32>
    %cst_62 = arith.constant 0.000000e+00 : f32
    %231 = vector.broadcast %cst_62 : f32 to vector<8x128xf32>
    %232 = arith.select %225, %230, %231 : vector<8x128xi1>, vector<8x128xf32>
    %cst_63 = arith.constant 1.250000e+00 : f32
    %233 = vector.broadcast %cst_63 : f32 to vector<8x128xf32>
    %234 = arith.mulf %233, %223 : vector<8x128xf32>
    %cst_64 = arith.constant 1.09418261 : f32
    %235 = vector.broadcast %cst_64 : f32 to vector<8x128xf32>
    %236 = arith.subf %235, %234 : vector<8x128xf32>
    %237 = math.exp %236 : vector<8x128xf32>
    %cst_65 = arith.constant 0.000000e+00 : f32
    %238 = vector.broadcast %cst_65 : f32 to vector<8x128xf32>
    %239 = arith.select %225, %237, %238 : vector<8x128xi1>, vector<8x128xf32>
    %cst_66 = arith.constant 8.000000e-01 : f32
    %240 = vector.broadcast %cst_66 : f32 to vector<8x128xf32>
    %241 = arith.mulf %240, %223 : vector<8x128xf32>
    %cst_67 = arith.constant 0.791736662 : f32
    %242 = vector.broadcast %cst_67 : f32 to vector<8x128xf32>
    %243 = arith.subf %242, %241 : vector<8x128xf32>
    %244 = math.exp %243 : vector<8x128xf32>
    %245 = arith.mulf %244, %222 : vector<8x128xf32>
    %cst_68 = arith.constant 0.000000e+00 : f32
    %246 = vector.broadcast %cst_68 : f32 to vector<8x128xf32>
    %247 = arith.select %225, %245, %246 : vector<8x128xi1>, vector<8x128xf32>
    %cst_69 = arith.constant 1.600000e+00 : f32
    %248 = vector.broadcast %cst_69 : f32 to vector<8x128xf32>
    %249 = arith.mulf %248, %223 : vector<8x128xf32>
    %cst_70 = arith.constant 1.78160071 : f32
    %250 = vector.broadcast %cst_70 : f32 to vector<8x128xf32>
    %251 = arith.subf %250, %249 : vector<8x128xf32>
    %252 = math.exp %251 : vector<8x128xf32>
    %253 = arith.mulf %252, %223 : vector<8x128xf32>
    %cst_71 = arith.constant 0.000000e+00 : f32
    %254 = vector.broadcast %cst_71 : f32 to vector<8x128xf32>
    %255 = arith.select %225, %253, %254 : vector<8x128xi1>, vector<8x128xf32>
    %cst_72 = arith.constant 0.488602519 : f32
    %256 = vector.broadcast %cst_72 : f32 to vector<8x128xf32>
    %257 = arith.mulf %256, %218 : vector<8x128xf32>
    %cst_73 = arith.constant 0.488602519 : f32
    %258 = vector.broadcast %cst_73 : f32 to vector<8x128xf32>
    %259 = arith.mulf %258, %219 : vector<8x128xf32>
    %cst_74 = arith.constant 0.488602519 : f32
    %260 = vector.broadcast %cst_74 : f32 to vector<8x128xf32>
    %261 = arith.mulf %260, %220 : vector<8x128xf32>
    %262 = arith.mulf %218, %220 : vector<8x128xf32>
    %cst_75 = arith.constant 1.09254849 : f32
    %263 = vector.broadcast %cst_75 : f32 to vector<8x128xf32>
    %264 = arith.mulf %263, %262 : vector<8x128xf32>
    %265 = arith.mulf %218, %219 : vector<8x128xf32>
    %cst_76 = arith.constant 1.09254849 : f32
    %266 = vector.broadcast %cst_76 : f32 to vector<8x128xf32>
    %267 = arith.mulf %266, %265 : vector<8x128xf32>
    %268 = arith.mulf %219, %219 : vector<8x128xf32>
    %269 = arith.mulf %218, %218 : vector<8x128xf32>
    %270 = arith.mulf %220, %220 : vector<8x128xf32>
    %271 = arith.addf %269, %270 : vector<8x128xf32>
    %cst_77 = arith.constant 5.000000e-01 : f32
    %272 = vector.broadcast %cst_77 : f32 to vector<8x128xf32>
    %273 = arith.mulf %272, %271 : vector<8x128xf32>
    %274 = arith.subf %268, %273 : vector<8x128xf32>
    %cst_78 = arith.constant 0.63078314 : f32
    %275 = vector.broadcast %cst_78 : f32 to vector<8x128xf32>
    %276 = arith.mulf %275, %274 : vector<8x128xf32>
    %277 = arith.mulf %219, %220 : vector<8x128xf32>
    %cst_79 = arith.constant 1.09254849 : f32
    %278 = vector.broadcast %cst_79 : f32 to vector<8x128xf32>
    %279 = arith.mulf %278, %277 : vector<8x128xf32>
    %280 = arith.mulf %220, %220 : vector<8x128xf32>
    %281 = arith.mulf %218, %218 : vector<8x128xf32>
    %282 = arith.subf %280, %281 : vector<8x128xf32>
    %cst_80 = arith.constant 0.546274245 : f32
    %283 = vector.broadcast %cst_80 : f32 to vector<8x128xf32>
    %284 = arith.mulf %283, %282 : vector<8x128xf32>
    %c10_i32_81 = arith.constant 10 : i32
    %285 = arith.muli %189, %c10_i32_81 : i32
    %c0_i32_82 = arith.constant 0 : i32
    %286 = arith.addi %285, %c0_i32_82 : i32
    %287 = arith.index_cast %286 : i32 to index
    %288 = memref.load %arg6[%287] : memref<160xf32, #tpu.memory_space<smem>>
    %cst_83 = arith.constant 0.282094806 : f32
    %289 = arith.mulf %288, %cst_83 : f32
    %290 = vector.broadcast %289 : f32 to vector<8x128xf32>
    %291 = arith.mulf %290, %232 : vector<8x128xf32>
    %292 = arith.addf %187, %291 : vector<8x128xf32>
    %c10_i32_84 = arith.constant 10 : i32
    %293 = arith.muli %189, %c10_i32_84 : i32
    %c1_i32_85 = arith.constant 1 : i32
    %294 = arith.addi %293, %c1_i32_85 : i32
    %295 = arith.index_cast %294 : i32 to index
    %296 = memref.load %arg6[%295] : memref<160xf32, #tpu.memory_space<smem>>
    %cst_86 = arith.constant 0.282094806 : f32
    %297 = arith.mulf %296, %cst_86 : f32
    %298 = vector.broadcast %297 : f32 to vector<8x128xf32>
    %299 = arith.mulf %298, %239 : vector<8x128xf32>
    %300 = arith.addf %292, %299 : vector<8x128xf32>
    %c10_i32_87 = arith.constant 10 : i32
    %301 = arith.muli %189, %c10_i32_87 : i32
    %c2_i32_88 = arith.constant 2 : i32
    %302 = arith.addi %301, %c2_i32_88 : i32
    %303 = arith.index_cast %302 : i32 to index
    %304 = memref.load %arg6[%303] : memref<160xf32, #tpu.memory_space<smem>>
    %305 = vector.broadcast %304 : f32 to vector<8x128xf32>
    %306 = arith.mulf %305, %257 : vector<8x128xf32>
    %307 = arith.mulf %306, %247 : vector<8x128xf32>
    %308 = arith.addf %300, %307 : vector<8x128xf32>
    %c10_i32_89 = arith.constant 10 : i32
    %309 = arith.muli %189, %c10_i32_89 : i32
    %c3_i32_90 = arith.constant 3 : i32
    %310 = arith.addi %309, %c3_i32_90 : i32
    %311 = arith.index_cast %310 : i32 to index
    %312 = memref.load %arg6[%311] : memref<160xf32, #tpu.memory_space<smem>>
    %313 = vector.broadcast %312 : f32 to vector<8x128xf32>
    %314 = arith.mulf %313, %259 : vector<8x128xf32>
    %315 = arith.mulf %314, %247 : vector<8x128xf32>
    %316 = arith.addf %308, %315 : vector<8x128xf32>
    %c10_i32_91 = arith.constant 10 : i32
    %317 = arith.muli %189, %c10_i32_91 : i32
    %c4_i32_92 = arith.constant 4 : i32
    %318 = arith.addi %317, %c4_i32_92 : i32
    %319 = arith.index_cast %318 : i32 to index
    %320 = memref.load %arg6[%319] : memref<160xf32, #tpu.memory_space<smem>>
    %321 = vector.broadcast %320 : f32 to vector<8x128xf32>
    %322 = arith.mulf %321, %261 : vector<8x128xf32>
    %323 = arith.mulf %322, %247 : vector<8x128xf32>
    %324 = arith.addf %316, %323 : vector<8x128xf32>
    %c10_i32_93 = arith.constant 10 : i32
    %325 = arith.muli %189, %c10_i32_93 : i32
    %c5_i32_94 = arith.constant 5 : i32
    %326 = arith.addi %325, %c5_i32_94 : i32
    %327 = arith.index_cast %326 : i32 to index
    %328 = memref.load %arg6[%327] : memref<160xf32, #tpu.memory_space<smem>>
    %329 = vector.broadcast %328 : f32 to vector<8x128xf32>
    %330 = arith.mulf %329, %264 : vector<8x128xf32>
    %331 = arith.mulf %330, %255 : vector<8x128xf32>
    %332 = arith.addf %324, %331 : vector<8x128xf32>
    %c10_i32_95 = arith.constant 10 : i32
    %333 = arith.muli %189, %c10_i32_95 : i32
    %c6_i32_96 = arith.constant 6 : i32
    %334 = arith.addi %333, %c6_i32_96 : i32
    %335 = arith.index_cast %334 : i32 to index
    %336 = memref.load %arg6[%335] : memref<160xf32, #tpu.memory_space<smem>>
    %337 = vector.broadcast %336 : f32 to vector<8x128xf32>
    %338 = arith.mulf %337, %267 : vector<8x128xf32>
    %339 = arith.mulf %338, %255 : vector<8x128xf32>
    %340 = arith.addf %332, %339 : vector<8x128xf32>
    %c10_i32_97 = arith.constant 10 : i32
    %341 = arith.muli %189, %c10_i32_97 : i32
    %c7_i32_98 = arith.constant 7 : i32
    %342 = arith.addi %341, %c7_i32_98 : i32
    %343 = arith.index_cast %342 : i32 to index
    %344 = memref.load %arg6[%343] : memref<160xf32, #tpu.memory_space<smem>>
    %345 = vector.broadcast %344 : f32 to vector<8x128xf32>
    %346 = arith.mulf %345, %276 : vector<8x128xf32>
    %347 = arith.mulf %346, %255 : vector<8x128xf32>
    %348 = arith.addf %340, %347 : vector<8x128xf32>
    %c10_i32_99 = arith.constant 10 : i32
    %349 = arith.muli %189, %c10_i32_99 : i32
    %c8_i32_100 = arith.constant 8 : i32
    %350 = arith.addi %349, %c8_i32_100 : i32
    %351 = arith.index_cast %350 : i32 to index
    %352 = memref.load %arg6[%351] : memref<160xf32, #tpu.memory_space<smem>>
    %353 = vector.broadcast %352 : f32 to vector<8x128xf32>
    %354 = arith.mulf %353, %279 : vector<8x128xf32>
    %355 = arith.mulf %354, %255 : vector<8x128xf32>
    %356 = arith.addf %348, %355 : vector<8x128xf32>
    %c10_i32_101 = arith.constant 10 : i32
    %357 = arith.muli %189, %c10_i32_101 : i32
    %c9_i32_102 = arith.constant 9 : i32
    %358 = arith.addi %357, %c9_i32_102 : i32
    %359 = arith.index_cast %358 : i32 to index
    %360 = memref.load %arg6[%359] : memref<160xf32, #tpu.memory_space<smem>>
    %361 = vector.broadcast %360 : f32 to vector<8x128xf32>
    %362 = arith.mulf %361, %284 : vector<8x128xf32>
    %363 = arith.mulf %362, %255 : vector<8x128xf32>
    %364 = arith.addf %356, %363 : vector<8x128xf32>
    %c8_i32_103 = arith.constant 8 : i32
    %365 = arith.muli %arg1, %c8_i32_103 : i32
    %c2_i32_104 = arith.constant 2 : i32
    %366 = arith.addi %365, %c2_i32_104 : i32
    %367 = arith.index_cast %366 : i32 to index
    %368 = memref.load %arg4[%367] : memref<16xi32, #tpu.memory_space<smem>>
    %c3_i32_105 = arith.constant 3 : i32
    %369 = arith.muli %366, %c3_i32_105 : i32
    %370 = arith.index_cast %369 : i32 to index
    %371 = memref.load %arg5[%370] : memref<48xf32, #tpu.memory_space<smem>>
    %c3_i32_106 = arith.constant 3 : i32
    %372 = arith.muli %366, %c3_i32_106 : i32
    %c1_i32_107 = arith.constant 1 : i32
    %373 = arith.addi %372, %c1_i32_107 : i32
    %374 = arith.index_cast %373 : i32 to index
    %375 = memref.load %arg5[%374] : memref<48xf32, #tpu.memory_space<smem>>
    %c3_i32_108 = arith.constant 3 : i32
    %376 = arith.muli %366, %c3_i32_108 : i32
    %c2_i32_109 = arith.constant 2 : i32
    %377 = arith.addi %376, %c2_i32_109 : i32
    %378 = arith.index_cast %377 : i32 to index
    %379 = memref.load %arg5[%378] : memref<48xf32, #tpu.memory_space<smem>>
    %380 = vector.broadcast %371 : f32 to vector<8x128xf32>
    %381 = arith.subf %4, %380 : vector<8x128xf32>
    %382 = vector.broadcast %375 : f32 to vector<8x128xf32>
    %383 = arith.subf %6, %382 : vector<8x128xf32>
    %384 = vector.broadcast %379 : f32 to vector<8x128xf32>
    %385 = arith.subf %8, %384 : vector<8x128xf32>
    %386 = arith.mulf %381, %381 : vector<8x128xf32>
    %387 = arith.mulf %383, %383 : vector<8x128xf32>
    %388 = arith.addf %386, %387 : vector<8x128xf32>
    %389 = arith.mulf %385, %385 : vector<8x128xf32>
    %390 = arith.addf %388, %389 : vector<8x128xf32>
    %391 = math.sqrt %390 : vector<8x128xf32>
    %cst_110 = arith.constant 1.000000e-24 : f32
    %392 = vector.broadcast %cst_110 : f32 to vector<8x128xf32>
    %393 = arith.addf %390, %392 : vector<8x128xf32>
    %394 = math.rsqrt %393 : vector<8x128xf32>
    %395 = arith.mulf %381, %394 : vector<8x128xf32>
    %396 = arith.mulf %383, %394 : vector<8x128xf32>
    %397 = arith.mulf %385, %394 : vector<8x128xf32>
    %cst_111 = arith.constant 9.99999993E-9 : f32
    %398 = vector.broadcast %cst_111 : f32 to vector<8x128xf32>
    %399 = arith.addf %391, %398 : vector<8x128xf32>
    %400 = arith.mulf %399, %399 : vector<8x128xf32>
    %401 = vector.broadcast %368 : i32 to vector<8x128xi32>
    %402 = arith.cmpi eq, %9, %401 : vector<8x128xi32>
    %cst_112 = arith.constant 5.000000e-01 : f32
    %403 = vector.broadcast %cst_112 : f32 to vector<8x128xf32>
    %404 = arith.mulf %403, %400 : vector<8x128xf32>
    %cst_113 = arith.constant 0.40696454 : f32
    %405 = vector.broadcast %cst_113 : f32 to vector<8x128xf32>
    %406 = arith.subf %405, %404 : vector<8x128xf32>
    %407 = math.exp %406 : vector<8x128xf32>
    %cst_114 = arith.constant 0.000000e+00 : f32
    %408 = vector.broadcast %cst_114 : f32 to vector<8x128xf32>
    %409 = arith.select %402, %407, %408 : vector<8x128xi1>, vector<8x128xf32>
    %cst_115 = arith.constant 1.250000e+00 : f32
    %410 = vector.broadcast %cst_115 : f32 to vector<8x128xf32>
    %411 = arith.mulf %410, %400 : vector<8x128xf32>
    %cst_116 = arith.constant 1.09418261 : f32
    %412 = vector.broadcast %cst_116 : f32 to vector<8x128xf32>
    %413 = arith.subf %412, %411 : vector<8x128xf32>
    %414 = math.exp %413 : vector<8x128xf32>
    %cst_117 = arith.constant 0.000000e+00 : f32
    %415 = vector.broadcast %cst_117 : f32 to vector<8x128xf32>
    %416 = arith.select %402, %414, %415 : vector<8x128xi1>, vector<8x128xf32>
    %cst_118 = arith.constant 8.000000e-01 : f32
    %417 = vector.broadcast %cst_118 : f32 to vector<8x128xf32>
    %418 = arith.mulf %417, %400 : vector<8x128xf32>
    %cst_119 = arith.constant 0.791736662 : f32
    %419 = vector.broadcast %cst_119 : f32 to vector<8x128xf32>
    %420 = arith.subf %419, %418 : vector<8x128xf32>
    %421 = math.exp %420 : vector<8x128xf32>
    %422 = arith.mulf %421, %399 : vector<8x128xf32>
    %cst_120 = arith.constant 0.000000e+00 : f32
    %423 = vector.broadcast %cst_120 : f32 to vector<8x128xf32>
    %424 = arith.select %402, %422, %423 : vector<8x128xi1>, vector<8x128xf32>
    %cst_121 = arith.constant 1.600000e+00 : f32
    %425 = vector.broadcast %cst_121 : f32 to vector<8x128xf32>
    %426 = arith.mulf %425, %400 : vector<8x128xf32>
    %cst_122 = arith.constant 1.78160071 : f32
    %427 = vector.broadcast %cst_122 : f32 to vector<8x128xf32>
    %428 = arith.subf %427, %426 : vector<8x128xf32>
    %429 = math.exp %428 : vector<8x128xf32>
    %430 = arith.mulf %429, %400 : vector<8x128xf32>
    %cst_123 = arith.constant 0.000000e+00 : f32
    %431 = vector.broadcast %cst_123 : f32 to vector<8x128xf32>
    %432 = arith.select %402, %430, %431 : vector<8x128xi1>, vector<8x128xf32>
    %cst_124 = arith.constant 0.488602519 : f32
    %433 = vector.broadcast %cst_124 : f32 to vector<8x128xf32>
    %434 = arith.mulf %433, %395 : vector<8x128xf32>
    %cst_125 = arith.constant 0.488602519 : f32
    %435 = vector.broadcast %cst_125 : f32 to vector<8x128xf32>
    %436 = arith.mulf %435, %396 : vector<8x128xf32>
    %cst_126 = arith.constant 0.488602519 : f32
    %437 = vector.broadcast %cst_126 : f32 to vector<8x128xf32>
    %438 = arith.mulf %437, %397 : vector<8x128xf32>
    %439 = arith.mulf %395, %397 : vector<8x128xf32>
    %cst_127 = arith.constant 1.09254849 : f32
    %440 = vector.broadcast %cst_127 : f32 to vector<8x128xf32>
    %441 = arith.mulf %440, %439 : vector<8x128xf32>
    %442 = arith.mulf %395, %396 : vector<8x128xf32>
    %cst_128 = arith.constant 1.09254849 : f32
    %443 = vector.broadcast %cst_128 : f32 to vector<8x128xf32>
    %444 = arith.mulf %443, %442 : vector<8x128xf32>
    %445 = arith.mulf %396, %396 : vector<8x128xf32>
    %446 = arith.mulf %395, %395 : vector<8x128xf32>
    %447 = arith.mulf %397, %397 : vector<8x128xf32>
    %448 = arith.addf %446, %447 : vector<8x128xf32>
    %cst_129 = arith.constant 5.000000e-01 : f32
    %449 = vector.broadcast %cst_129 : f32 to vector<8x128xf32>
    %450 = arith.mulf %449, %448 : vector<8x128xf32>
    %451 = arith.subf %445, %450 : vector<8x128xf32>
    %cst_130 = arith.constant 0.63078314 : f32
    %452 = vector.broadcast %cst_130 : f32 to vector<8x128xf32>
    %453 = arith.mulf %452, %451 : vector<8x128xf32>
    %454 = arith.mulf %396, %397 : vector<8x128xf32>
    %cst_131 = arith.constant 1.09254849 : f32
    %455 = vector.broadcast %cst_131 : f32 to vector<8x128xf32>
    %456 = arith.mulf %455, %454 : vector<8x128xf32>
    %457 = arith.mulf %397, %397 : vector<8x128xf32>
    %458 = arith.mulf %395, %395 : vector<8x128xf32>
    %459 = arith.subf %457, %458 : vector<8x128xf32>
    %cst_132 = arith.constant 0.546274245 : f32
    %460 = vector.broadcast %cst_132 : f32 to vector<8x128xf32>
    %461 = arith.mulf %460, %459 : vector<8x128xf32>
    %c10_i32_133 = arith.constant 10 : i32
    %462 = arith.muli %366, %c10_i32_133 : i32
    %c0_i32_134 = arith.constant 0 : i32
    %463 = arith.addi %462, %c0_i32_134 : i32
    %464 = arith.index_cast %463 : i32 to index
    %465 = memref.load %arg6[%464] : memref<160xf32, #tpu.memory_space<smem>>
    %cst_135 = arith.constant 0.282094806 : f32
    %466 = arith.mulf %465, %cst_135 : f32
    %467 = vector.broadcast %466 : f32 to vector<8x128xf32>
    %468 = arith.mulf %467, %409 : vector<8x128xf32>
    %469 = arith.addf %364, %468 : vector<8x128xf32>
    %c10_i32_136 = arith.constant 10 : i32
    %470 = arith.muli %366, %c10_i32_136 : i32
    %c1_i32_137 = arith.constant 1 : i32
    %471 = arith.addi %470, %c1_i32_137 : i32
    %472 = arith.index_cast %471 : i32 to index
    %473 = memref.load %arg6[%472] : memref<160xf32, #tpu.memory_space<smem>>
    %cst_138 = arith.constant 0.282094806 : f32
    %474 = arith.mulf %473, %cst_138 : f32
    %475 = vector.broadcast %474 : f32 to vector<8x128xf32>
    %476 = arith.mulf %475, %416 : vector<8x128xf32>
    %477 = arith.addf %469, %476 : vector<8x128xf32>
    %c10_i32_139 = arith.constant 10 : i32
    %478 = arith.muli %366, %c10_i32_139 : i32
    %c2_i32_140 = arith.constant 2 : i32
    %479 = arith.addi %478, %c2_i32_140 : i32
    %480 = arith.index_cast %479 : i32 to index
    %481 = memref.load %arg6[%480] : memref<160xf32, #tpu.memory_space<smem>>
    %482 = vector.broadcast %481 : f32 to vector<8x128xf32>
    %483 = arith.mulf %482, %434 : vector<8x128xf32>
    %484 = arith.mulf %483, %424 : vector<8x128xf32>
    %485 = arith.addf %477, %484 : vector<8x128xf32>
    %c10_i32_141 = arith.constant 10 : i32
    %486 = arith.muli %366, %c10_i32_141 : i32
    %c3_i32_142 = arith.constant 3 : i32
    %487 = arith.addi %486, %c3_i32_142 : i32
    %488 = arith.index_cast %487 : i32 to index
    %489 = memref.load %arg6[%488] : memref<160xf32, #tpu.memory_space<smem>>
    %490 = vector.broadcast %489 : f32 to vector<8x128xf32>
    %491 = arith.mulf %490, %436 : vector<8x128xf32>
    %492 = arith.mulf %491, %424 : vector<8x128xf32>
    %493 = arith.addf %485, %492 : vector<8x128xf32>
    %c10_i32_143 = arith.constant 10 : i32
    %494 = arith.muli %366, %c10_i32_143 : i32
    %c4_i32_144 = arith.constant 4 : i32
    %495 = arith.addi %494, %c4_i32_144 : i32
    %496 = arith.index_cast %495 : i32 to index
    %497 = memref.load %arg6[%496] : memref<160xf32, #tpu.memory_space<smem>>
    %498 = vector.broadcast %497 : f32 to vector<8x128xf32>
    %499 = arith.mulf %498, %438 : vector<8x128xf32>
    %500 = arith.mulf %499, %424 : vector<8x128xf32>
    %501 = arith.addf %493, %500 : vector<8x128xf32>
    %c10_i32_145 = arith.constant 10 : i32
    %502 = arith.muli %366, %c10_i32_145 : i32
    %c5_i32_146 = arith.constant 5 : i32
    %503 = arith.addi %502, %c5_i32_146 : i32
    %504 = arith.index_cast %503 : i32 to index
    %505 = memref.load %arg6[%504] : memref<160xf32, #tpu.memory_space<smem>>
    %506 = vector.broadcast %505 : f32 to vector<8x128xf32>
    %507 = arith.mulf %506, %441 : vector<8x128xf32>
    %508 = arith.mulf %507, %432 : vector<8x128xf32>
    %509 = arith.addf %501, %508 : vector<8x128xf32>
    %c10_i32_147 = arith.constant 10 : i32
    %510 = arith.muli %366, %c10_i32_147 : i32
    %c6_i32_148 = arith.constant 6 : i32
    %511 = arith.addi %510, %c6_i32_148 : i32
    %512 = arith.index_cast %511 : i32 to index
    %513 = memref.load %arg6[%512] : memref<160xf32, #tpu.memory_space<smem>>
    %514 = vector.broadcast %513 : f32 to vector<8x128xf32>
    %515 = arith.mulf %514, %444 : vector<8x128xf32>
    %516 = arith.mulf %515, %432 : vector<8x128xf32>
    %517 = arith.addf %509, %516 : vector<8x128xf32>
    %c10_i32_149 = arith.constant 10 : i32
    %518 = arith.muli %366, %c10_i32_149 : i32
    %c7_i32_150 = arith.constant 7 : i32
    %519 = arith.addi %518, %c7_i32_150 : i32
    %520 = arith.index_cast %519 : i32 to index
    %521 = memref.load %arg6[%520] : memref<160xf32, #tpu.memory_space<smem>>
    %522 = vector.broadcast %521 : f32 to vector<8x128xf32>
    %523 = arith.mulf %522, %453 : vector<8x128xf32>
    %524 = arith.mulf %523, %432 : vector<8x128xf32>
    %525 = arith.addf %517, %524 : vector<8x128xf32>
    %c10_i32_151 = arith.constant 10 : i32
    %526 = arith.muli %366, %c10_i32_151 : i32
    %c8_i32_152 = arith.constant 8 : i32
    %527 = arith.addi %526, %c8_i32_152 : i32
    %528 = arith.index_cast %527 : i32 to index
    %529 = memref.load %arg6[%528] : memref<160xf32, #tpu.memory_space<smem>>
    %530 = vector.broadcast %529 : f32 to vector<8x128xf32>
    %531 = arith.mulf %530, %456 : vector<8x128xf32>
    %532 = arith.mulf %531, %432 : vector<8x128xf32>
    %533 = arith.addf %525, %532 : vector<8x128xf32>
    %c10_i32_153 = arith.constant 10 : i32
    %534 = arith.muli %366, %c10_i32_153 : i32
    %c9_i32_154 = arith.constant 9 : i32
    %535 = arith.addi %534, %c9_i32_154 : i32
    %536 = arith.index_cast %535 : i32 to index
    %537 = memref.load %arg6[%536] : memref<160xf32, #tpu.memory_space<smem>>
    %538 = vector.broadcast %537 : f32 to vector<8x128xf32>
    %539 = arith.mulf %538, %461 : vector<8x128xf32>
    %540 = arith.mulf %539, %432 : vector<8x128xf32>
    %541 = arith.addf %533, %540 : vector<8x128xf32>
    %c8_i32_155 = arith.constant 8 : i32
    %542 = arith.muli %arg1, %c8_i32_155 : i32
    %c3_i32_156 = arith.constant 3 : i32
    %543 = arith.addi %542, %c3_i32_156 : i32
    %544 = arith.index_cast %543 : i32 to index
    %545 = memref.load %arg4[%544] : memref<16xi32, #tpu.memory_space<smem>>
    %c3_i32_157 = arith.constant 3 : i32
    %546 = arith.muli %543, %c3_i32_157 : i32
    %547 = arith.index_cast %546 : i32 to index
    %548 = memref.load %arg5[%547] : memref<48xf32, #tpu.memory_space<smem>>
    %c3_i32_158 = arith.constant 3 : i32
    %549 = arith.muli %543, %c3_i32_158 : i32
    %c1_i32_159 = arith.constant 1 : i32
    %550 = arith.addi %549, %c1_i32_159 : i32
    %551 = arith.index_cast %550 : i32 to index
    %552 = memref.load %arg5[%551] : memref<48xf32, #tpu.memory_space<smem>>
    %c3_i32_160 = arith.constant 3 : i32
    %553 = arith.muli %543, %c3_i32_160 : i32
    %c2_i32_161 = arith.constant 2 : i32
    %554 = arith.addi %553, %c2_i32_161 : i32
    %555 = arith.index_cast %554 : i32 to index
    %556 = memref.load %arg5[%555] : memref<48xf32, #tpu.memory_space<smem>>
    %557 = vector.broadcast %548 : f32 to vector<8x128xf32>
    %558 = arith.subf %4, %557 : vector<8x128xf32>
    %559 = vector.broadcast %552 : f32 to vector<8x128xf32>
    %560 = arith.subf %6, %559 : vector<8x128xf32>
    %561 = vector.broadcast %556 : f32 to vector<8x128xf32>
    %562 = arith.subf %8, %561 : vector<8x128xf32>
    %563 = arith.mulf %558, %558 : vector<8x128xf32>
    %564 = arith.mulf %560, %560 : vector<8x128xf32>
    %565 = arith.addf %563, %564 : vector<8x128xf32>
    %566 = arith.mulf %562, %562 : vector<8x128xf32>
    %567 = arith.addf %565, %566 : vector<8x128xf32>
    %568 = math.sqrt %567 : vector<8x128xf32>
    %cst_162 = arith.constant 1.000000e-24 : f32
    %569 = vector.broadcast %cst_162 : f32 to vector<8x128xf32>
    %570 = arith.addf %567, %569 : vector<8x128xf32>
    %571 = math.rsqrt %570 : vector<8x128xf32>
    %572 = arith.mulf %558, %571 : vector<8x128xf32>
    %573 = arith.mulf %560, %571 : vector<8x128xf32>
    %574 = arith.mulf %562, %571 : vector<8x128xf32>
    %cst_163 = arith.constant 9.99999993E-9 : f32
    %575 = vector.broadcast %cst_163 : f32 to vector<8x128xf32>
    %576 = arith.addf %568, %575 : vector<8x128xf32>
    %577 = arith.mulf %576, %576 : vector<8x128xf32>
    %578 = vector.broadcast %545 : i32 to vector<8x128xi32>
    %579 = arith.cmpi eq, %9, %578 : vector<8x128xi32>
    %cst_164 = arith.constant 5.000000e-01 : f32
    %580 = vector.broadcast %cst_164 : f32 to vector<8x128xf32>
    %581 = arith.mulf %580, %577 : vector<8x128xf32>
    %cst_165 = arith.constant 0.40696454 : f32
    %582 = vector.broadcast %cst_165 : f32 to vector<8x128xf32>
    %583 = arith.subf %582, %581 : vector<8x128xf32>
    %584 = math.exp %583 : vector<8x128xf32>
    %cst_166 = arith.constant 0.000000e+00 : f32
    %585 = vector.broadcast %cst_166 : f32 to vector<8x128xf32>
    %586 = arith.select %579, %584, %585 : vector<8x128xi1>, vector<8x128xf32>
    %cst_167 = arith.constant 1.250000e+00 : f32
    %587 = vector.broadcast %cst_167 : f32 to vector<8x128xf32>
    %588 = arith.mulf %587, %577 : vector<8x128xf32>
    %cst_168 = arith.constant 1.09418261 : f32
    %589 = vector.broadcast %cst_168 : f32 to vector<8x128xf32>
    %590 = arith.subf %589, %588 : vector<8x128xf32>
    %591 = math.exp %590 : vector<8x128xf32>
    %cst_169 = arith.constant 0.000000e+00 : f32
    %592 = vector.broadcast %cst_169 : f32 to vector<8x128xf32>
    %593 = arith.select %579, %591, %592 : vector<8x128xi1>, vector<8x128xf32>
    %cst_170 = arith.constant 8.000000e-01 : f32
    %594 = vector.broadcast %cst_170 : f32 to vector<8x128xf32>
    %595 = arith.mulf %594, %577 : vector<8x128xf32>
    %cst_171 = arith.constant 0.791736662 : f32
    %596 = vector.broadcast %cst_171 : f32 to vector<8x128xf32>
    %597 = arith.subf %596, %595 : vector<8x128xf32>
    %598 = math.exp %597 : vector<8x128xf32>
    %599 = arith.mulf %598, %576 : vector<8x128xf32>
    %cst_172 = arith.constant 0.000000e+00 : f32
    %600 = vector.broadcast %cst_172 : f32 to vector<8x128xf32>
    %601 = arith.select %579, %599, %600 : vector<8x128xi1>, vector<8x128xf32>
    %cst_173 = arith.constant 1.600000e+00 : f32
    %602 = vector.broadcast %cst_173 : f32 to vector<8x128xf32>
    %603 = arith.mulf %602, %577 : vector<8x128xf32>
    %cst_174 = arith.constant 1.78160071 : f32
    %604 = vector.broadcast %cst_174 : f32 to vector<8x128xf32>
    %605 = arith.subf %604, %603 : vector<8x128xf32>
    %606 = math.exp %605 : vector<8x128xf32>
    %607 = arith.mulf %606, %577 : vector<8x128xf32>
    %cst_175 = arith.constant 0.000000e+00 : f32
    %608 = vector.broadcast %cst_175 : f32 to vector<8x128xf32>
    %609 = arith.select %579, %607, %608 : vector<8x128xi1>, vector<8x128xf32>
    %cst_176 = arith.constant 0.488602519 : f32
    %610 = vector.broadcast %cst_176 : f32 to vector<8x128xf32>
    %611 = arith.mulf %610, %572 : vector<8x128xf32>
    %cst_177 = arith.constant 0.488602519 : f32
    %612 = vector.broadcast %cst_177 : f32 to vector<8x128xf32>
    %613 = arith.mulf %612, %573 : vector<8x128xf32>
    %cst_178 = arith.constant 0.488602519 : f32
    %614 = vector.broadcast %cst_178 : f32 to vector<8x128xf32>
    %615 = arith.mulf %614, %574 : vector<8x128xf32>
    %616 = arith.mulf %572, %574 : vector<8x128xf32>
    %cst_179 = arith.constant 1.09254849 : f32
    %617 = vector.broadcast %cst_179 : f32 to vector<8x128xf32>
    %618 = arith.mulf %617, %616 : vector<8x128xf32>
    %619 = arith.mulf %572, %573 : vector<8x128xf32>
    %cst_180 = arith.constant 1.09254849 : f32
    %620 = vector.broadcast %cst_180 : f32 to vector<8x128xf32>
    %621 = arith.mulf %620, %619 : vector<8x128xf32>
    %622 = arith.mulf %573, %573 : vector<8x128xf32>
    %623 = arith.mulf %572, %572 : vector<8x128xf32>
    %624 = arith.mulf %574, %574 : vector<8x128xf32>
    %625 = arith.addf %623, %624 : vector<8x128xf32>
    %cst_181 = arith.constant 5.000000e-01 : f32
    %626 = vector.broadcast %cst_181 : f32 to vector<8x128xf32>
    %627 = arith.mulf %626, %625 : vector<8x128xf32>
    %628 = arith.subf %622, %627 : vector<8x128xf32>
    %cst_182 = arith.constant 0.63078314 : f32
    %629 = vector.broadcast %cst_182 : f32 to vector<8x128xf32>
    %630 = arith.mulf %629, %628 : vector<8x128xf32>
    %631 = arith.mulf %573, %574 : vector<8x128xf32>
    %cst_183 = arith.constant 1.09254849 : f32
    %632 = vector.broadcast %cst_183 : f32 to vector<8x128xf32>
    %633 = arith.mulf %632, %631 : vector<8x128xf32>
    %634 = arith.mulf %574, %574 : vector<8x128xf32>
    %635 = arith.mulf %572, %572 : vector<8x128xf32>
    %636 = arith.subf %634, %635 : vector<8x128xf32>
    %cst_184 = arith.constant 0.546274245 : f32
    %637 = vector.broadcast %cst_184 : f32 to vector<8x128xf32>
    %638 = arith.mulf %637, %636 : vector<8x128xf32>
    %c10_i32_185 = arith.constant 10 : i32
    %639 = arith.muli %543, %c10_i32_185 : i32
    %c0_i32_186 = arith.constant 0 : i32
    %640 = arith.addi %639, %c0_i32_186 : i32
    %641 = arith.index_cast %640 : i32 to index
    %642 = memref.load %arg6[%641] : memref<160xf32, #tpu.memory_space<smem>>
    %cst_187 = arith.constant 0.282094806 : f32
    %643 = arith.mulf %642, %cst_187 : f32
    %644 = vector.broadcast %643 : f32 to vector<8x128xf32>
    %645 = arith.mulf %644, %586 : vector<8x128xf32>
    %646 = arith.addf %541, %645 : vector<8x128xf32>
    %c10_i32_188 = arith.constant 10 : i32
    %647 = arith.muli %543, %c10_i32_188 : i32
    %c1_i32_189 = arith.constant 1 : i32
    %648 = arith.addi %647, %c1_i32_189 : i32
    %649 = arith.index_cast %648 : i32 to index
    %650 = memref.load %arg6[%649] : memref<160xf32, #tpu.memory_space<smem>>
    %cst_190 = arith.constant 0.282094806 : f32
    %651 = arith.mulf %650, %cst_190 : f32
    %652 = vector.broadcast %651 : f32 to vector<8x128xf32>
    %653 = arith.mulf %652, %593 : vector<8x128xf32>
    %654 = arith.addf %646, %653 : vector<8x128xf32>
    %c10_i32_191 = arith.constant 10 : i32
    %655 = arith.muli %543, %c10_i32_191 : i32
    %c2_i32_192 = arith.constant 2 : i32
    %656 = arith.addi %655, %c2_i32_192 : i32
    %657 = arith.index_cast %656 : i32 to index
    %658 = memref.load %arg6[%657] : memref<160xf32, #tpu.memory_space<smem>>
    %659 = vector.broadcast %658 : f32 to vector<8x128xf32>
    %660 = arith.mulf %659, %611 : vector<8x128xf32>
    %661 = arith.mulf %660, %601 : vector<8x128xf32>
    %662 = arith.addf %654, %661 : vector<8x128xf32>
    %c10_i32_193 = arith.constant 10 : i32
    %663 = arith.muli %543, %c10_i32_193 : i32
    %c3_i32_194 = arith.constant 3 : i32
    %664 = arith.addi %663, %c3_i32_194 : i32
    %665 = arith.index_cast %664 : i32 to index
    %666 = memref.load %arg6[%665] : memref<160xf32, #tpu.memory_space<smem>>
    %667 = vector.broadcast %666 : f32 to vector<8x128xf32>
    %668 = arith.mulf %667, %613 : vector<8x128xf32>
    %669 = arith.mulf %668, %601 : vector<8x128xf32>
    %670 = arith.addf %662, %669 : vector<8x128xf32>
    %c10_i32_195 = arith.constant 10 : i32
    %671 = arith.muli %543, %c10_i32_195 : i32
    %c4_i32_196 = arith.constant 4 : i32
    %672 = arith.addi %671, %c4_i32_196 : i32
    %673 = arith.index_cast %672 : i32 to index
    %674 = memref.load %arg6[%673] : memref<160xf32, #tpu.memory_space<smem>>
    %675 = vector.broadcast %674 : f32 to vector<8x128xf32>
    %676 = arith.mulf %675, %615 : vector<8x128xf32>
    %677 = arith.mulf %676, %601 : vector<8x128xf32>
    %678 = arith.addf %670, %677 : vector<8x128xf32>
    %c10_i32_197 = arith.constant 10 : i32
    %679 = arith.muli %543, %c10_i32_197 : i32
    %c5_i32_198 = arith.constant 5 : i32
    %680 = arith.addi %679, %c5_i32_198 : i32
    %681 = arith.index_cast %680 : i32 to index
    %682 = memref.load %arg6[%681] : memref<160xf32, #tpu.memory_space<smem>>
    %683 = vector.broadcast %682 : f32 to vector<8x128xf32>
    %684 = arith.mulf %683, %618 : vector<8x128xf32>
    %685 = arith.mulf %684, %609 : vector<8x128xf32>
    %686 = arith.addf %678, %685 : vector<8x128xf32>
    %c10_i32_199 = arith.constant 10 : i32
    %687 = arith.muli %543, %c10_i32_199 : i32
    %c6_i32_200 = arith.constant 6 : i32
    %688 = arith.addi %687, %c6_i32_200 : i32
    %689 = arith.index_cast %688 : i32 to index
    %690 = memref.load %arg6[%689] : memref<160xf32, #tpu.memory_space<smem>>
    %691 = vector.broadcast %690 : f32 to vector<8x128xf32>
    %692 = arith.mulf %691, %621 : vector<8x128xf32>
    %693 = arith.mulf %692, %609 : vector<8x128xf32>
    %694 = arith.addf %686, %693 : vector<8x128xf32>
    %c10_i32_201 = arith.constant 10 : i32
    %695 = arith.muli %543, %c10_i32_201 : i32
    %c7_i32_202 = arith.constant 7 : i32
    %696 = arith.addi %695, %c7_i32_202 : i32
    %697 = arith.index_cast %696 : i32 to index
    %698 = memref.load %arg6[%697] : memref<160xf32, #tpu.memory_space<smem>>
    %699 = vector.broadcast %698 : f32 to vector<8x128xf32>
    %700 = arith.mulf %699, %630 : vector<8x128xf32>
    %701 = arith.mulf %700, %609 : vector<8x128xf32>
    %702 = arith.addf %694, %701 : vector<8x128xf32>
    %c10_i32_203 = arith.constant 10 : i32
    %703 = arith.muli %543, %c10_i32_203 : i32
    %c8_i32_204 = arith.constant 8 : i32
    %704 = arith.addi %703, %c8_i32_204 : i32
    %705 = arith.index_cast %704 : i32 to index
    %706 = memref.load %arg6[%705] : memref<160xf32, #tpu.memory_space<smem>>
    %707 = vector.broadcast %706 : f32 to vector<8x128xf32>
    %708 = arith.mulf %707, %633 : vector<8x128xf32>
    %709 = arith.mulf %708, %609 : vector<8x128xf32>
    %710 = arith.addf %702, %709 : vector<8x128xf32>
    %c10_i32_205 = arith.constant 10 : i32
    %711 = arith.muli %543, %c10_i32_205 : i32
    %c9_i32_206 = arith.constant 9 : i32
    %712 = arith.addi %711, %c9_i32_206 : i32
    %713 = arith.index_cast %712 : i32 to index
    %714 = memref.load %arg6[%713] : memref<160xf32, #tpu.memory_space<smem>>
    %715 = vector.broadcast %714 : f32 to vector<8x128xf32>
    %716 = arith.mulf %715, %638 : vector<8x128xf32>
    %717 = arith.mulf %716, %609 : vector<8x128xf32>
    %718 = arith.addf %710, %717 : vector<8x128xf32>
    %c8_i32_207 = arith.constant 8 : i32
    %719 = arith.muli %arg1, %c8_i32_207 : i32
    %c4_i32_208 = arith.constant 4 : i32
    %720 = arith.addi %719, %c4_i32_208 : i32
    %721 = arith.index_cast %720 : i32 to index
    %722 = memref.load %arg4[%721] : memref<16xi32, #tpu.memory_space<smem>>
    %c3_i32_209 = arith.constant 3 : i32
    %723 = arith.muli %720, %c3_i32_209 : i32
    %724 = arith.index_cast %723 : i32 to index
    %725 = memref.load %arg5[%724] : memref<48xf32, #tpu.memory_space<smem>>
    %c3_i32_210 = arith.constant 3 : i32
    %726 = arith.muli %720, %c3_i32_210 : i32
    %c1_i32_211 = arith.constant 1 : i32
    %727 = arith.addi %726, %c1_i32_211 : i32
    %728 = arith.index_cast %727 : i32 to index
    %729 = memref.load %arg5[%728] : memref<48xf32, #tpu.memory_space<smem>>
    %c3_i32_212 = arith.constant 3 : i32
    %730 = arith.muli %720, %c3_i32_212 : i32
    %c2_i32_213 = arith.constant 2 : i32
    %731 = arith.addi %730, %c2_i32_213 : i32
    %732 = arith.index_cast %731 : i32 to index
    %733 = memref.load %arg5[%732] : memref<48xf32, #tpu.memory_space<smem>>
    %734 = vector.broadcast %725 : f32 to vector<8x128xf32>
    %735 = arith.subf %4, %734 : vector<8x128xf32>
    %736 = vector.broadcast %729 : f32 to vector<8x128xf32>
    %737 = arith.subf %6, %736 : vector<8x128xf32>
    %738 = vector.broadcast %733 : f32 to vector<8x128xf32>
    %739 = arith.subf %8, %738 : vector<8x128xf32>
    %740 = arith.mulf %735, %735 : vector<8x128xf32>
    %741 = arith.mulf %737, %737 : vector<8x128xf32>
    %742 = arith.addf %740, %741 : vector<8x128xf32>
    %743 = arith.mulf %739, %739 : vector<8x128xf32>
    %744 = arith.addf %742, %743 : vector<8x128xf32>
    %745 = math.sqrt %744 : vector<8x128xf32>
    %cst_214 = arith.constant 1.000000e-24 : f32
    %746 = vector.broadcast %cst_214 : f32 to vector<8x128xf32>
    %747 = arith.addf %744, %746 : vector<8x128xf32>
    %748 = math.rsqrt %747 : vector<8x128xf32>
    %749 = arith.mulf %735, %748 : vector<8x128xf32>
    %750 = arith.mulf %737, %748 : vector<8x128xf32>
    %751 = arith.mulf %739, %748 : vector<8x128xf32>
    %cst_215 = arith.constant 9.99999993E-9 : f32
    %752 = vector.broadcast %cst_215 : f32 to vector<8x128xf32>
    %753 = arith.addf %745, %752 : vector<8x128xf32>
    %754 = arith.mulf %753, %753 : vector<8x128xf32>
    %755 = vector.broadcast %722 : i32 to vector<8x128xi32>
    %756 = arith.cmpi eq, %9, %755 : vector<8x128xi32>
    %cst_216 = arith.constant 5.000000e-01 : f32
    %757 = vector.broadcast %cst_216 : f32 to vector<8x128xf32>
    %758 = arith.mulf %757, %754 : vector<8x128xf32>
    %cst_217 = arith.constant 0.40696454 : f32
    %759 = vector.broadcast %cst_217 : f32 to vector<8x128xf32>
    %760 = arith.subf %759, %758 : vector<8x128xf32>
    %761 = math.exp %760 : vector<8x128xf32>
    %cst_218 = arith.constant 0.000000e+00 : f32
    %762 = vector.broadcast %cst_218 : f32 to vector<8x128xf32>
    %763 = arith.select %756, %761, %762 : vector<8x128xi1>, vector<8x128xf32>
    %cst_219 = arith.constant 1.250000e+00 : f32
    %764 = vector.broadcast %cst_219 : f32 to vector<8x128xf32>
    %765 = arith.mulf %764, %754 : vector<8x128xf32>
    %cst_220 = arith.constant 1.09418261 : f32
    %766 = vector.broadcast %cst_220 : f32 to vector<8x128xf32>
    %767 = arith.subf %766, %765 : vector<8x128xf32>
    %768 = math.exp %767 : vector<8x128xf32>
    %cst_221 = arith.constant 0.000000e+00 : f32
    %769 = vector.broadcast %cst_221 : f32 to vector<8x128xf32>
    %770 = arith.select %756, %768, %769 : vector<8x128xi1>, vector<8x128xf32>
    %cst_222 = arith.constant 8.000000e-01 : f32
    %771 = vector.broadcast %cst_222 : f32 to vector<8x128xf32>
    %772 = arith.mulf %771, %754 : vector<8x128xf32>
    %cst_223 = arith.constant 0.791736662 : f32
    %773 = vector.broadcast %cst_223 : f32 to vector<8x128xf32>
    %774 = arith.subf %773, %772 : vector<8x128xf32>
    %775 = math.exp %774 : vector<8x128xf32>
    %776 = arith.mulf %775, %753 : vector<8x128xf32>
    %cst_224 = arith.constant 0.000000e+00 : f32
    %777 = vector.broadcast %cst_224 : f32 to vector<8x128xf32>
    %778 = arith.select %756, %776, %777 : vector<8x128xi1>, vector<8x128xf32>
    %cst_225 = arith.constant 1.600000e+00 : f32
    %779 = vector.broadcast %cst_225 : f32 to vector<8x128xf32>
    %780 = arith.mulf %779, %754 : vector<8x128xf32>
    %cst_226 = arith.constant 1.78160071 : f32
    %781 = vector.broadcast %cst_226 : f32 to vector<8x128xf32>
    %782 = arith.subf %781, %780 : vector<8x128xf32>
    %783 = math.exp %782 : vector<8x128xf32>
    %784 = arith.mulf %783, %754 : vector<8x128xf32>
    %cst_227 = arith.constant 0.000000e+00 : f32
    %785 = vector.broadcast %cst_227 : f32 to vector<8x128xf32>
    %786 = arith.select %756, %784, %785 : vector<8x128xi1>, vector<8x128xf32>
    %cst_228 = arith.constant 0.488602519 : f32
    %787 = vector.broadcast %cst_228 : f32 to vector<8x128xf32>
    %788 = arith.mulf %787, %749 : vector<8x128xf32>
    %cst_229 = arith.constant 0.488602519 : f32
    %789 = vector.broadcast %cst_229 : f32 to vector<8x128xf32>
    %790 = arith.mulf %789, %750 : vector<8x128xf32>
    %cst_230 = arith.constant 0.488602519 : f32
    %791 = vector.broadcast %cst_230 : f32 to vector<8x128xf32>
    %792 = arith.mulf %791, %751 : vector<8x128xf32>
    %793 = arith.mulf %749, %751 : vector<8x128xf32>
    %cst_231 = arith.constant 1.09254849 : f32
    %794 = vector.broadcast %cst_231 : f32 to vector<8x128xf32>
    %795 = arith.mulf %794, %793 : vector<8x128xf32>
    %796 = arith.mulf %749, %750 : vector<8x128xf32>
    %cst_232 = arith.constant 1.09254849 : f32
    %797 = vector.broadcast %cst_232 : f32 to vector<8x128xf32>
    %798 = arith.mulf %797, %796 : vector<8x128xf32>
    %799 = arith.mulf %750, %750 : vector<8x128xf32>
    %800 = arith.mulf %749, %749 : vector<8x128xf32>
    %801 = arith.mulf %751, %751 : vector<8x128xf32>
    %802 = arith.addf %800, %801 : vector<8x128xf32>
    %cst_233 = arith.constant 5.000000e-01 : f32
    %803 = vector.broadcast %cst_233 : f32 to vector<8x128xf32>
    %804 = arith.mulf %803, %802 : vector<8x128xf32>
    %805 = arith.subf %799, %804 : vector<8x128xf32>
    %cst_234 = arith.constant 0.63078314 : f32
    %806 = vector.broadcast %cst_234 : f32 to vector<8x128xf32>
    %807 = arith.mulf %806, %805 : vector<8x128xf32>
    %808 = arith.mulf %750, %751 : vector<8x128xf32>
    %cst_235 = arith.constant 1.09254849 : f32
    %809 = vector.broadcast %cst_235 : f32 to vector<8x128xf32>
    %810 = arith.mulf %809, %808 : vector<8x128xf32>
    %811 = arith.mulf %751, %751 : vector<8x128xf32>
    %812 = arith.mulf %749, %749 : vector<8x128xf32>
    %813 = arith.subf %811, %812 : vector<8x128xf32>
    %cst_236 = arith.constant 0.546274245 : f32
    %814 = vector.broadcast %cst_236 : f32 to vector<8x128xf32>
    %815 = arith.mulf %814, %813 : vector<8x128xf32>
    %c10_i32_237 = arith.constant 10 : i32
    %816 = arith.muli %720, %c10_i32_237 : i32
    %c0_i32_238 = arith.constant 0 : i32
    %817 = arith.addi %816, %c0_i32_238 : i32
    %818 = arith.index_cast %817 : i32 to index
    %819 = memref.load %arg6[%818] : memref<160xf32, #tpu.memory_space<smem>>
    %cst_239 = arith.constant 0.282094806 : f32
    %820 = arith.mulf %819, %cst_239 : f32
    %821 = vector.broadcast %820 : f32 to vector<8x128xf32>
    %822 = arith.mulf %821, %763 : vector<8x128xf32>
    %823 = arith.addf %718, %822 : vector<8x128xf32>
    %c10_i32_240 = arith.constant 10 : i32
    %824 = arith.muli %720, %c10_i32_240 : i32
    %c1_i32_241 = arith.constant 1 : i32
    %825 = arith.addi %824, %c1_i32_241 : i32
    %826 = arith.index_cast %825 : i32 to index
    %827 = memref.load %arg6[%826] : memref<160xf32, #tpu.memory_space<smem>>
    %cst_242 = arith.constant 0.282094806 : f32
    %828 = arith.mulf %827, %cst_242 : f32
    %829 = vector.broadcast %828 : f32 to vector<8x128xf32>
    %830 = arith.mulf %829, %770 : vector<8x128xf32>
    %831 = arith.addf %823, %830 : vector<8x128xf32>
    %c10_i32_243 = arith.constant 10 : i32
    %832 = arith.muli %720, %c10_i32_243 : i32
    %c2_i32_244 = arith.constant 2 : i32
    %833 = arith.addi %832, %c2_i32_244 : i32
    %834 = arith.index_cast %833 : i32 to index
    %835 = memref.load %arg6[%834] : memref<160xf32, #tpu.memory_space<smem>>
    %836 = vector.broadcast %835 : f32 to vector<8x128xf32>
    %837 = arith.mulf %836, %788 : vector<8x128xf32>
    %838 = arith.mulf %837, %778 : vector<8x128xf32>
    %839 = arith.addf %831, %838 : vector<8x128xf32>
    %c10_i32_245 = arith.constant 10 : i32
    %840 = arith.muli %720, %c10_i32_245 : i32
    %c3_i32_246 = arith.constant 3 : i32
    %841 = arith.addi %840, %c3_i32_246 : i32
    %842 = arith.index_cast %841 : i32 to index
    %843 = memref.load %arg6[%842] : memref<160xf32, #tpu.memory_space<smem>>
    %844 = vector.broadcast %843 : f32 to vector<8x128xf32>
    %845 = arith.mulf %844, %790 : vector<8x128xf32>
    %846 = arith.mulf %845, %778 : vector<8x128xf32>
    %847 = arith.addf %839, %846 : vector<8x128xf32>
    %c10_i32_247 = arith.constant 10 : i32
    %848 = arith.muli %720, %c10_i32_247 : i32
    %c4_i32_248 = arith.constant 4 : i32
    %849 = arith.addi %848, %c4_i32_248 : i32
    %850 = arith.index_cast %849 : i32 to index
    %851 = memref.load %arg6[%850] : memref<160xf32, #tpu.memory_space<smem>>
    %852 = vector.broadcast %851 : f32 to vector<8x128xf32>
    %853 = arith.mulf %852, %792 : vector<8x128xf32>
    %854 = arith.mulf %853, %778 : vector<8x128xf32>
    %855 = arith.addf %847, %854 : vector<8x128xf32>
    %c10_i32_249 = arith.constant 10 : i32
    %856 = arith.muli %720, %c10_i32_249 : i32
    %c5_i32_250 = arith.constant 5 : i32
    %857 = arith.addi %856, %c5_i32_250 : i32
    %858 = arith.index_cast %857 : i32 to index
    %859 = memref.load %arg6[%858] : memref<160xf32, #tpu.memory_space<smem>>
    %860 = vector.broadcast %859 : f32 to vector<8x128xf32>
    %861 = arith.mulf %860, %795 : vector<8x128xf32>
    %862 = arith.mulf %861, %786 : vector<8x128xf32>
    %863 = arith.addf %855, %862 : vector<8x128xf32>
    %c10_i32_251 = arith.constant 10 : i32
    %864 = arith.muli %720, %c10_i32_251 : i32
    %c6_i32_252 = arith.constant 6 : i32
    %865 = arith.addi %864, %c6_i32_252 : i32
    %866 = arith.index_cast %865 : i32 to index
    %867 = memref.load %arg6[%866] : memref<160xf32, #tpu.memory_space<smem>>
    %868 = vector.broadcast %867 : f32 to vector<8x128xf32>
    %869 = arith.mulf %868, %798 : vector<8x128xf32>
    %870 = arith.mulf %869, %786 : vector<8x128xf32>
    %871 = arith.addf %863, %870 : vector<8x128xf32>
    %c10_i32_253 = arith.constant 10 : i32
    %872 = arith.muli %720, %c10_i32_253 : i32
    %c7_i32_254 = arith.constant 7 : i32
    %873 = arith.addi %872, %c7_i32_254 : i32
    %874 = arith.index_cast %873 : i32 to index
    %875 = memref.load %arg6[%874] : memref<160xf32, #tpu.memory_space<smem>>
    %876 = vector.broadcast %875 : f32 to vector<8x128xf32>
    %877 = arith.mulf %876, %807 : vector<8x128xf32>
    %878 = arith.mulf %877, %786 : vector<8x128xf32>
    %879 = arith.addf %871, %878 : vector<8x128xf32>
    %c10_i32_255 = arith.constant 10 : i32
    %880 = arith.muli %720, %c10_i32_255 : i32
    %c8_i32_256 = arith.constant 8 : i32
    %881 = arith.addi %880, %c8_i32_256 : i32
    %882 = arith.index_cast %881 : i32 to index
    %883 = memref.load %arg6[%882] : memref<160xf32, #tpu.memory_space<smem>>
    %884 = vector.broadcast %883 : f32 to vector<8x128xf32>
    %885 = arith.mulf %884, %810 : vector<8x128xf32>
    %886 = arith.mulf %885, %786 : vector<8x128xf32>
    %887 = arith.addf %879, %886 : vector<8x128xf32>
    %c10_i32_257 = arith.constant 10 : i32
    %888 = arith.muli %720, %c10_i32_257 : i32
    %c9_i32_258 = arith.constant 9 : i32
    %889 = arith.addi %888, %c9_i32_258 : i32
    %890 = arith.index_cast %889 : i32 to index
    %891 = memref.load %arg6[%890] : memref<160xf32, #tpu.memory_space<smem>>
    %892 = vector.broadcast %891 : f32 to vector<8x128xf32>
    %893 = arith.mulf %892, %815 : vector<8x128xf32>
    %894 = arith.mulf %893, %786 : vector<8x128xf32>
    %895 = arith.addf %887, %894 : vector<8x128xf32>
    %c8_i32_259 = arith.constant 8 : i32
    %896 = arith.muli %arg1, %c8_i32_259 : i32
    %c5_i32_260 = arith.constant 5 : i32
    %897 = arith.addi %896, %c5_i32_260 : i32
    %898 = arith.index_cast %897 : i32 to index
    %899 = memref.load %arg4[%898] : memref<16xi32, #tpu.memory_space<smem>>
    %c3_i32_261 = arith.constant 3 : i32
    %900 = arith.muli %897, %c3_i32_261 : i32
    %901 = arith.index_cast %900 : i32 to index
    %902 = memref.load %arg5[%901] : memref<48xf32, #tpu.memory_space<smem>>
    %c3_i32_262 = arith.constant 3 : i32
    %903 = arith.muli %897, %c3_i32_262 : i32
    %c1_i32_263 = arith.constant 1 : i32
    %904 = arith.addi %903, %c1_i32_263 : i32
    %905 = arith.index_cast %904 : i32 to index
    %906 = memref.load %arg5[%905] : memref<48xf32, #tpu.memory_space<smem>>
    %c3_i32_264 = arith.constant 3 : i32
    %907 = arith.muli %897, %c3_i32_264 : i32
    %c2_i32_265 = arith.constant 2 : i32
    %908 = arith.addi %907, %c2_i32_265 : i32
    %909 = arith.index_cast %908 : i32 to index
    %910 = memref.load %arg5[%909] : memref<48xf32, #tpu.memory_space<smem>>
    %911 = vector.broadcast %902 : f32 to vector<8x128xf32>
    %912 = arith.subf %4, %911 : vector<8x128xf32>
    %913 = vector.broadcast %906 : f32 to vector<8x128xf32>
    %914 = arith.subf %6, %913 : vector<8x128xf32>
    %915 = vector.broadcast %910 : f32 to vector<8x128xf32>
    %916 = arith.subf %8, %915 : vector<8x128xf32>
    %917 = arith.mulf %912, %912 : vector<8x128xf32>
    %918 = arith.mulf %914, %914 : vector<8x128xf32>
    %919 = arith.addf %917, %918 : vector<8x128xf32>
    %920 = arith.mulf %916, %916 : vector<8x128xf32>
    %921 = arith.addf %919, %920 : vector<8x128xf32>
    %922 = math.sqrt %921 : vector<8x128xf32>
    %cst_266 = arith.constant 1.000000e-24 : f32
    %923 = vector.broadcast %cst_266 : f32 to vector<8x128xf32>
    %924 = arith.addf %921, %923 : vector<8x128xf32>
    %925 = math.rsqrt %924 : vector<8x128xf32>
    %926 = arith.mulf %912, %925 : vector<8x128xf32>
    %927 = arith.mulf %914, %925 : vector<8x128xf32>
    %928 = arith.mulf %916, %925 : vector<8x128xf32>
    %cst_267 = arith.constant 9.99999993E-9 : f32
    %929 = vector.broadcast %cst_267 : f32 to vector<8x128xf32>
    %930 = arith.addf %922, %929 : vector<8x128xf32>
    %931 = arith.mulf %930, %930 : vector<8x128xf32>
    %932 = vector.broadcast %899 : i32 to vector<8x128xi32>
    %933 = arith.cmpi eq, %9, %932 : vector<8x128xi32>
    %cst_268 = arith.constant 5.000000e-01 : f32
    %934 = vector.broadcast %cst_268 : f32 to vector<8x128xf32>
    %935 = arith.mulf %934, %931 : vector<8x128xf32>
    %cst_269 = arith.constant 0.40696454 : f32
    %936 = vector.broadcast %cst_269 : f32 to vector<8x128xf32>
    %937 = arith.subf %936, %935 : vector<8x128xf32>
    %938 = math.exp %937 : vector<8x128xf32>
    %cst_270 = arith.constant 0.000000e+00 : f32
    %939 = vector.broadcast %cst_270 : f32 to vector<8x128xf32>
    %940 = arith.select %933, %938, %939 : vector<8x128xi1>, vector<8x128xf32>
    %cst_271 = arith.constant 1.250000e+00 : f32
    %941 = vector.broadcast %cst_271 : f32 to vector<8x128xf32>
    %942 = arith.mulf %941, %931 : vector<8x128xf32>
    %cst_272 = arith.constant 1.09418261 : f32
    %943 = vector.broadcast %cst_272 : f32 to vector<8x128xf32>
    %944 = arith.subf %943, %942 : vector<8x128xf32>
    %945 = math.exp %944 : vector<8x128xf32>
    %cst_273 = arith.constant 0.000000e+00 : f32
    %946 = vector.broadcast %cst_273 : f32 to vector<8x128xf32>
    %947 = arith.select %933, %945, %946 : vector<8x128xi1>, vector<8x128xf32>
    %cst_274 = arith.constant 8.000000e-01 : f32
    %948 = vector.broadcast %cst_274 : f32 to vector<8x128xf32>
    %949 = arith.mulf %948, %931 : vector<8x128xf32>
    %cst_275 = arith.constant 0.791736662 : f32
    %950 = vector.broadcast %cst_275 : f32 to vector<8x128xf32>
    %951 = arith.subf %950, %949 : vector<8x128xf32>
    %952 = math.exp %951 : vector<8x128xf32>
    %953 = arith.mulf %952, %930 : vector<8x128xf32>
    %cst_276 = arith.constant 0.000000e+00 : f32
    %954 = vector.broadcast %cst_276 : f32 to vector<8x128xf32>
    %955 = arith.select %933, %953, %954 : vector<8x128xi1>, vector<8x128xf32>
    %cst_277 = arith.constant 1.600000e+00 : f32
    %956 = vector.broadcast %cst_277 : f32 to vector<8x128xf32>
    %957 = arith.mulf %956, %931 : vector<8x128xf32>
    %cst_278 = arith.constant 1.78160071 : f32
    %958 = vector.broadcast %cst_278 : f32 to vector<8x128xf32>
    %959 = arith.subf %958, %957 : vector<8x128xf32>
    %960 = math.exp %959 : vector<8x128xf32>
    %961 = arith.mulf %960, %931 : vector<8x128xf32>
    %cst_279 = arith.constant 0.000000e+00 : f32
    %962 = vector.broadcast %cst_279 : f32 to vector<8x128xf32>
    %963 = arith.select %933, %961, %962 : vector<8x128xi1>, vector<8x128xf32>
    %cst_280 = arith.constant 0.488602519 : f32
    %964 = vector.broadcast %cst_280 : f32 to vector<8x128xf32>
    %965 = arith.mulf %964, %926 : vector<8x128xf32>
    %cst_281 = arith.constant 0.488602519 : f32
    %966 = vector.broadcast %cst_281 : f32 to vector<8x128xf32>
    %967 = arith.mulf %966, %927 : vector<8x128xf32>
    %cst_282 = arith.constant 0.488602519 : f32
    %968 = vector.broadcast %cst_282 : f32 to vector<8x128xf32>
    %969 = arith.mulf %968, %928 : vector<8x128xf32>
    %970 = arith.mulf %926, %928 : vector<8x128xf32>
    %cst_283 = arith.constant 1.09254849 : f32
    %971 = vector.broadcast %cst_283 : f32 to vector<8x128xf32>
    %972 = arith.mulf %971, %970 : vector<8x128xf32>
    %973 = arith.mulf %926, %927 : vector<8x128xf32>
    %cst_284 = arith.constant 1.09254849 : f32
    %974 = vector.broadcast %cst_284 : f32 to vector<8x128xf32>
    %975 = arith.mulf %974, %973 : vector<8x128xf32>
    %976 = arith.mulf %927, %927 : vector<8x128xf32>
    %977 = arith.mulf %926, %926 : vector<8x128xf32>
    %978 = arith.mulf %928, %928 : vector<8x128xf32>
    %979 = arith.addf %977, %978 : vector<8x128xf32>
    %cst_285 = arith.constant 5.000000e-01 : f32
    %980 = vector.broadcast %cst_285 : f32 to vector<8x128xf32>
    %981 = arith.mulf %980, %979 : vector<8x128xf32>
    %982 = arith.subf %976, %981 : vector<8x128xf32>
    %cst_286 = arith.constant 0.63078314 : f32
    %983 = vector.broadcast %cst_286 : f32 to vector<8x128xf32>
    %984 = arith.mulf %983, %982 : vector<8x128xf32>
    %985 = arith.mulf %927, %928 : vector<8x128xf32>
    %cst_287 = arith.constant 1.09254849 : f32
    %986 = vector.broadcast %cst_287 : f32 to vector<8x128xf32>
    %987 = arith.mulf %986, %985 : vector<8x128xf32>
    %988 = arith.mulf %928, %928 : vector<8x128xf32>
    %989 = arith.mulf %926, %926 : vector<8x128xf32>
    %990 = arith.subf %988, %989 : vector<8x128xf32>
    %cst_288 = arith.constant 0.546274245 : f32
    %991 = vector.broadcast %cst_288 : f32 to vector<8x128xf32>
    %992 = arith.mulf %991, %990 : vector<8x128xf32>
    %c10_i32_289 = arith.constant 10 : i32
    %993 = arith.muli %897, %c10_i32_289 : i32
    %c0_i32_290 = arith.constant 0 : i32
    %994 = arith.addi %993, %c0_i32_290 : i32
    %995 = arith.index_cast %994 : i32 to index
    %996 = memref.load %arg6[%995] : memref<160xf32, #tpu.memory_space<smem>>
    %cst_291 = arith.constant 0.282094806 : f32
    %997 = arith.mulf %996, %cst_291 : f32
    %998 = vector.broadcast %997 : f32 to vector<8x128xf32>
    %999 = arith.mulf %998, %940 : vector<8x128xf32>
    %1000 = arith.addf %895, %999 : vector<8x128xf32>
    %c10_i32_292 = arith.constant 10 : i32
    %1001 = arith.muli %897, %c10_i32_292 : i32
    %c1_i32_293 = arith.constant 1 : i32
    %1002 = arith.addi %1001, %c1_i32_293 : i32
    %1003 = arith.index_cast %1002 : i32 to index
    %1004 = memref.load %arg6[%1003] : memref<160xf32, #tpu.memory_space<smem>>
    %cst_294 = arith.constant 0.282094806 : f32
    %1005 = arith.mulf %1004, %cst_294 : f32
    %1006 = vector.broadcast %1005 : f32 to vector<8x128xf32>
    %1007 = arith.mulf %1006, %947 : vector<8x128xf32>
    %1008 = arith.addf %1000, %1007 : vector<8x128xf32>
    %c10_i32_295 = arith.constant 10 : i32
    %1009 = arith.muli %897, %c10_i32_295 : i32
    %c2_i32_296 = arith.constant 2 : i32
    %1010 = arith.addi %1009, %c2_i32_296 : i32
    %1011 = arith.index_cast %1010 : i32 to index
    %1012 = memref.load %arg6[%1011] : memref<160xf32, #tpu.memory_space<smem>>
    %1013 = vector.broadcast %1012 : f32 to vector<8x128xf32>
    %1014 = arith.mulf %1013, %965 : vector<8x128xf32>
    %1015 = arith.mulf %1014, %955 : vector<8x128xf32>
    %1016 = arith.addf %1008, %1015 : vector<8x128xf32>
    %c10_i32_297 = arith.constant 10 : i32
    %1017 = arith.muli %897, %c10_i32_297 : i32
    %c3_i32_298 = arith.constant 3 : i32
    %1018 = arith.addi %1017, %c3_i32_298 : i32
    %1019 = arith.index_cast %1018 : i32 to index
    %1020 = memref.load %arg6[%1019] : memref<160xf32, #tpu.memory_space<smem>>
    %1021 = vector.broadcast %1020 : f32 to vector<8x128xf32>
    %1022 = arith.mulf %1021, %967 : vector<8x128xf32>
    %1023 = arith.mulf %1022, %955 : vector<8x128xf32>
    %1024 = arith.addf %1016, %1023 : vector<8x128xf32>
    %c10_i32_299 = arith.constant 10 : i32
    %1025 = arith.muli %897, %c10_i32_299 : i32
    %c4_i32_300 = arith.constant 4 : i32
    %1026 = arith.addi %1025, %c4_i32_300 : i32
    %1027 = arith.index_cast %1026 : i32 to index
    %1028 = memref.load %arg6[%1027] : memref<160xf32, #tpu.memory_space<smem>>
    %1029 = vector.broadcast %1028 : f32 to vector<8x128xf32>
    %1030 = arith.mulf %1029, %969 : vector<8x128xf32>
    %1031 = arith.mulf %1030, %955 : vector<8x128xf32>
    %1032 = arith.addf %1024, %1031 : vector<8x128xf32>
    %c10_i32_301 = arith.constant 10 : i32
    %1033 = arith.muli %897, %c10_i32_301 : i32
    %c5_i32_302 = arith.constant 5 : i32
    %1034 = arith.addi %1033, %c5_i32_302 : i32
    %1035 = arith.index_cast %1034 : i32 to index
    %1036 = memref.load %arg6[%1035] : memref<160xf32, #tpu.memory_space<smem>>
    %1037 = vector.broadcast %1036 : f32 to vector<8x128xf32>
    %1038 = arith.mulf %1037, %972 : vector<8x128xf32>
    %1039 = arith.mulf %1038, %963 : vector<8x128xf32>
    %1040 = arith.addf %1032, %1039 : vector<8x128xf32>
    %c10_i32_303 = arith.constant 10 : i32
    %1041 = arith.muli %897, %c10_i32_303 : i32
    %c6_i32_304 = arith.constant 6 : i32
    %1042 = arith.addi %1041, %c6_i32_304 : i32
    %1043 = arith.index_cast %1042 : i32 to index
    %1044 = memref.load %arg6[%1043] : memref<160xf32, #tpu.memory_space<smem>>
    %1045 = vector.broadcast %1044 : f32 to vector<8x128xf32>
    %1046 = arith.mulf %1045, %975 : vector<8x128xf32>
    %1047 = arith.mulf %1046, %963 : vector<8x128xf32>
    %1048 = arith.addf %1040, %1047 : vector<8x128xf32>
    %c10_i32_305 = arith.constant 10 : i32
    %1049 = arith.muli %897, %c10_i32_305 : i32
    %c7_i32_306 = arith.constant 7 : i32
    %1050 = arith.addi %1049, %c7_i32_306 : i32
    %1051 = arith.index_cast %1050 : i32 to index
    %1052 = memref.load %arg6[%1051] : memref<160xf32, #tpu.memory_space<smem>>
    %1053 = vector.broadcast %1052 : f32 to vector<8x128xf32>
    %1054 = arith.mulf %1053, %984 : vector<8x128xf32>
    %1055 = arith.mulf %1054, %963 : vector<8x128xf32>
    %1056 = arith.addf %1048, %1055 : vector<8x128xf32>
    %c10_i32_307 = arith.constant 10 : i32
    %1057 = arith.muli %897, %c10_i32_307 : i32
    %c8_i32_308 = arith.constant 8 : i32
    %1058 = arith.addi %1057, %c8_i32_308 : i32
    %1059 = arith.index_cast %1058 : i32 to index
    %1060 = memref.load %arg6[%1059] : memref<160xf32, #tpu.memory_space<smem>>
    %1061 = vector.broadcast %1060 : f32 to vector<8x128xf32>
    %1062 = arith.mulf %1061, %987 : vector<8x128xf32>
    %1063 = arith.mulf %1062, %963 : vector<8x128xf32>
    %1064 = arith.addf %1056, %1063 : vector<8x128xf32>
    %c10_i32_309 = arith.constant 10 : i32
    %1065 = arith.muli %897, %c10_i32_309 : i32
    %c9_i32_310 = arith.constant 9 : i32
    %1066 = arith.addi %1065, %c9_i32_310 : i32
    %1067 = arith.index_cast %1066 : i32 to index
    %1068 = memref.load %arg6[%1067] : memref<160xf32, #tpu.memory_space<smem>>
    %1069 = vector.broadcast %1068 : f32 to vector<8x128xf32>
    %1070 = arith.mulf %1069, %992 : vector<8x128xf32>
    %1071 = arith.mulf %1070, %963 : vector<8x128xf32>
    %1072 = arith.addf %1064, %1071 : vector<8x128xf32>
    %c8_i32_311 = arith.constant 8 : i32
    %1073 = arith.muli %arg1, %c8_i32_311 : i32
    %c6_i32_312 = arith.constant 6 : i32
    %1074 = arith.addi %1073, %c6_i32_312 : i32
    %1075 = arith.index_cast %1074 : i32 to index
    %1076 = memref.load %arg4[%1075] : memref<16xi32, #tpu.memory_space<smem>>
    %c3_i32_313 = arith.constant 3 : i32
    %1077 = arith.muli %1074, %c3_i32_313 : i32
    %1078 = arith.index_cast %1077 : i32 to index
    %1079 = memref.load %arg5[%1078] : memref<48xf32, #tpu.memory_space<smem>>
    %c3_i32_314 = arith.constant 3 : i32
    %1080 = arith.muli %1074, %c3_i32_314 : i32
    %c1_i32_315 = arith.constant 1 : i32
    %1081 = arith.addi %1080, %c1_i32_315 : i32
    %1082 = arith.index_cast %1081 : i32 to index
    %1083 = memref.load %arg5[%1082] : memref<48xf32, #tpu.memory_space<smem>>
    %c3_i32_316 = arith.constant 3 : i32
    %1084 = arith.muli %1074, %c3_i32_316 : i32
    %c2_i32_317 = arith.constant 2 : i32
    %1085 = arith.addi %1084, %c2_i32_317 : i32
    %1086 = arith.index_cast %1085 : i32 to index
    %1087 = memref.load %arg5[%1086] : memref<48xf32, #tpu.memory_space<smem>>
    %1088 = vector.broadcast %1079 : f32 to vector<8x128xf32>
    %1089 = arith.subf %4, %1088 : vector<8x128xf32>
    %1090 = vector.broadcast %1083 : f32 to vector<8x128xf32>
    %1091 = arith.subf %6, %1090 : vector<8x128xf32>
    %1092 = vector.broadcast %1087 : f32 to vector<8x128xf32>
    %1093 = arith.subf %8, %1092 : vector<8x128xf32>
    %1094 = arith.mulf %1089, %1089 : vector<8x128xf32>
    %1095 = arith.mulf %1091, %1091 : vector<8x128xf32>
    %1096 = arith.addf %1094, %1095 : vector<8x128xf32>
    %1097 = arith.mulf %1093, %1093 : vector<8x128xf32>
    %1098 = arith.addf %1096, %1097 : vector<8x128xf32>
    %1099 = math.sqrt %1098 : vector<8x128xf32>
    %cst_318 = arith.constant 1.000000e-24 : f32
    %1100 = vector.broadcast %cst_318 : f32 to vector<8x128xf32>
    %1101 = arith.addf %1098, %1100 : vector<8x128xf32>
    %1102 = math.rsqrt %1101 : vector<8x128xf32>
    %1103 = arith.mulf %1089, %1102 : vector<8x128xf32>
    %1104 = arith.mulf %1091, %1102 : vector<8x128xf32>
    %1105 = arith.mulf %1093, %1102 : vector<8x128xf32>
    %cst_319 = arith.constant 9.99999993E-9 : f32
    %1106 = vector.broadcast %cst_319 : f32 to vector<8x128xf32>
    %1107 = arith.addf %1099, %1106 : vector<8x128xf32>
    %1108 = arith.mulf %1107, %1107 : vector<8x128xf32>
    %1109 = vector.broadcast %1076 : i32 to vector<8x128xi32>
    %1110 = arith.cmpi eq, %9, %1109 : vector<8x128xi32>
    %cst_320 = arith.constant 5.000000e-01 : f32
    %1111 = vector.broadcast %cst_320 : f32 to vector<8x128xf32>
    %1112 = arith.mulf %1111, %1108 : vector<8x128xf32>
    %cst_321 = arith.constant 0.40696454 : f32
    %1113 = vector.broadcast %cst_321 : f32 to vector<8x128xf32>
    %1114 = arith.subf %1113, %1112 : vector<8x128xf32>
    %1115 = math.exp %1114 : vector<8x128xf32>
    %cst_322 = arith.constant 0.000000e+00 : f32
    %1116 = vector.broadcast %cst_322 : f32 to vector<8x128xf32>
    %1117 = arith.select %1110, %1115, %1116 : vector<8x128xi1>, vector<8x128xf32>
    %cst_323 = arith.constant 1.250000e+00 : f32
    %1118 = vector.broadcast %cst_323 : f32 to vector<8x128xf32>
    %1119 = arith.mulf %1118, %1108 : vector<8x128xf32>
    %cst_324 = arith.constant 1.09418261 : f32
    %1120 = vector.broadcast %cst_324 : f32 to vector<8x128xf32>
    %1121 = arith.subf %1120, %1119 : vector<8x128xf32>
    %1122 = math.exp %1121 : vector<8x128xf32>
    %cst_325 = arith.constant 0.000000e+00 : f32
    %1123 = vector.broadcast %cst_325 : f32 to vector<8x128xf32>
    %1124 = arith.select %1110, %1122, %1123 : vector<8x128xi1>, vector<8x128xf32>
    %cst_326 = arith.constant 8.000000e-01 : f32
    %1125 = vector.broadcast %cst_326 : f32 to vector<8x128xf32>
    %1126 = arith.mulf %1125, %1108 : vector<8x128xf32>
    %cst_327 = arith.constant 0.791736662 : f32
    %1127 = vector.broadcast %cst_327 : f32 to vector<8x128xf32>
    %1128 = arith.subf %1127, %1126 : vector<8x128xf32>
    %1129 = math.exp %1128 : vector<8x128xf32>
    %1130 = arith.mulf %1129, %1107 : vector<8x128xf32>
    %cst_328 = arith.constant 0.000000e+00 : f32
    %1131 = vector.broadcast %cst_328 : f32 to vector<8x128xf32>
    %1132 = arith.select %1110, %1130, %1131 : vector<8x128xi1>, vector<8x128xf32>
    %cst_329 = arith.constant 1.600000e+00 : f32
    %1133 = vector.broadcast %cst_329 : f32 to vector<8x128xf32>
    %1134 = arith.mulf %1133, %1108 : vector<8x128xf32>
    %cst_330 = arith.constant 1.78160071 : f32
    %1135 = vector.broadcast %cst_330 : f32 to vector<8x128xf32>
    %1136 = arith.subf %1135, %1134 : vector<8x128xf32>
    %1137 = math.exp %1136 : vector<8x128xf32>
    %1138 = arith.mulf %1137, %1108 : vector<8x128xf32>
    %cst_331 = arith.constant 0.000000e+00 : f32
    %1139 = vector.broadcast %cst_331 : f32 to vector<8x128xf32>
    %1140 = arith.select %1110, %1138, %1139 : vector<8x128xi1>, vector<8x128xf32>
    %cst_332 = arith.constant 0.488602519 : f32
    %1141 = vector.broadcast %cst_332 : f32 to vector<8x128xf32>
    %1142 = arith.mulf %1141, %1103 : vector<8x128xf32>
    %cst_333 = arith.constant 0.488602519 : f32
    %1143 = vector.broadcast %cst_333 : f32 to vector<8x128xf32>
    %1144 = arith.mulf %1143, %1104 : vector<8x128xf32>
    %cst_334 = arith.constant 0.488602519 : f32
    %1145 = vector.broadcast %cst_334 : f32 to vector<8x128xf32>
    %1146 = arith.mulf %1145, %1105 : vector<8x128xf32>
    %1147 = arith.mulf %1103, %1105 : vector<8x128xf32>
    %cst_335 = arith.constant 1.09254849 : f32
    %1148 = vector.broadcast %cst_335 : f32 to vector<8x128xf32>
    %1149 = arith.mulf %1148, %1147 : vector<8x128xf32>
    %1150 = arith.mulf %1103, %1104 : vector<8x128xf32>
    %cst_336 = arith.constant 1.09254849 : f32
    %1151 = vector.broadcast %cst_336 : f32 to vector<8x128xf32>
    %1152 = arith.mulf %1151, %1150 : vector<8x128xf32>
    %1153 = arith.mulf %1104, %1104 : vector<8x128xf32>
    %1154 = arith.mulf %1103, %1103 : vector<8x128xf32>
    %1155 = arith.mulf %1105, %1105 : vector<8x128xf32>
    %1156 = arith.addf %1154, %1155 : vector<8x128xf32>
    %cst_337 = arith.constant 5.000000e-01 : f32
    %1157 = vector.broadcast %cst_337 : f32 to vector<8x128xf32>
    %1158 = arith.mulf %1157, %1156 : vector<8x128xf32>
    %1159 = arith.subf %1153, %1158 : vector<8x128xf32>
    %cst_338 = arith.constant 0.63078314 : f32
    %1160 = vector.broadcast %cst_338 : f32 to vector<8x128xf32>
    %1161 = arith.mulf %1160, %1159 : vector<8x128xf32>
    %1162 = arith.mulf %1104, %1105 : vector<8x128xf32>
    %cst_339 = arith.constant 1.09254849 : f32
    %1163 = vector.broadcast %cst_339 : f32 to vector<8x128xf32>
    %1164 = arith.mulf %1163, %1162 : vector<8x128xf32>
    %1165 = arith.mulf %1105, %1105 : vector<8x128xf32>
    %1166 = arith.mulf %1103, %1103 : vector<8x128xf32>
    %1167 = arith.subf %1165, %1166 : vector<8x128xf32>
    %cst_340 = arith.constant 0.546274245 : f32
    %1168 = vector.broadcast %cst_340 : f32 to vector<8x128xf32>
    %1169 = arith.mulf %1168, %1167 : vector<8x128xf32>
    %c10_i32_341 = arith.constant 10 : i32
    %1170 = arith.muli %1074, %c10_i32_341 : i32
    %c0_i32_342 = arith.constant 0 : i32
    %1171 = arith.addi %1170, %c0_i32_342 : i32
    %1172 = arith.index_cast %1171 : i32 to index
    %1173 = memref.load %arg6[%1172] : memref<160xf32, #tpu.memory_space<smem>>
    %cst_343 = arith.constant 0.282094806 : f32
    %1174 = arith.mulf %1173, %cst_343 : f32
    %1175 = vector.broadcast %1174 : f32 to vector<8x128xf32>
    %1176 = arith.mulf %1175, %1117 : vector<8x128xf32>
    %1177 = arith.addf %1072, %1176 : vector<8x128xf32>
    %c10_i32_344 = arith.constant 10 : i32
    %1178 = arith.muli %1074, %c10_i32_344 : i32
    %c1_i32_345 = arith.constant 1 : i32
    %1179 = arith.addi %1178, %c1_i32_345 : i32
    %1180 = arith.index_cast %1179 : i32 to index
    %1181 = memref.load %arg6[%1180] : memref<160xf32, #tpu.memory_space<smem>>
    %cst_346 = arith.constant 0.282094806 : f32
    %1182 = arith.mulf %1181, %cst_346 : f32
    %1183 = vector.broadcast %1182 : f32 to vector<8x128xf32>
    %1184 = arith.mulf %1183, %1124 : vector<8x128xf32>
    %1185 = arith.addf %1177, %1184 : vector<8x128xf32>
    %c10_i32_347 = arith.constant 10 : i32
    %1186 = arith.muli %1074, %c10_i32_347 : i32
    %c2_i32_348 = arith.constant 2 : i32
    %1187 = arith.addi %1186, %c2_i32_348 : i32
    %1188 = arith.index_cast %1187 : i32 to index
    %1189 = memref.load %arg6[%1188] : memref<160xf32, #tpu.memory_space<smem>>
    %1190 = vector.broadcast %1189 : f32 to vector<8x128xf32>
    %1191 = arith.mulf %1190, %1142 : vector<8x128xf32>
    %1192 = arith.mulf %1191, %1132 : vector<8x128xf32>
    %1193 = arith.addf %1185, %1192 : vector<8x128xf32>
    %c10_i32_349 = arith.constant 10 : i32
    %1194 = arith.muli %1074, %c10_i32_349 : i32
    %c3_i32_350 = arith.constant 3 : i32
    %1195 = arith.addi %1194, %c3_i32_350 : i32
    %1196 = arith.index_cast %1195 : i32 to index
    %1197 = memref.load %arg6[%1196] : memref<160xf32, #tpu.memory_space<smem>>
    %1198 = vector.broadcast %1197 : f32 to vector<8x128xf32>
    %1199 = arith.mulf %1198, %1144 : vector<8x128xf32>
    %1200 = arith.mulf %1199, %1132 : vector<8x128xf32>
    %1201 = arith.addf %1193, %1200 : vector<8x128xf32>
    %c10_i32_351 = arith.constant 10 : i32
    %1202 = arith.muli %1074, %c10_i32_351 : i32
    %c4_i32_352 = arith.constant 4 : i32
    %1203 = arith.addi %1202, %c4_i32_352 : i32
    %1204 = arith.index_cast %1203 : i32 to index
    %1205 = memref.load %arg6[%1204] : memref<160xf32, #tpu.memory_space<smem>>
    %1206 = vector.broadcast %1205 : f32 to vector<8x128xf32>
    %1207 = arith.mulf %1206, %1146 : vector<8x128xf32>
    %1208 = arith.mulf %1207, %1132 : vector<8x128xf32>
    %1209 = arith.addf %1201, %1208 : vector<8x128xf32>
    %c10_i32_353 = arith.constant 10 : i32
    %1210 = arith.muli %1074, %c10_i32_353 : i32
    %c5_i32_354 = arith.constant 5 : i32
    %1211 = arith.addi %1210, %c5_i32_354 : i32
    %1212 = arith.index_cast %1211 : i32 to index
    %1213 = memref.load %arg6[%1212] : memref<160xf32, #tpu.memory_space<smem>>
    %1214 = vector.broadcast %1213 : f32 to vector<8x128xf32>
    %1215 = arith.mulf %1214, %1149 : vector<8x128xf32>
    %1216 = arith.mulf %1215, %1140 : vector<8x128xf32>
    %1217 = arith.addf %1209, %1216 : vector<8x128xf32>
    %c10_i32_355 = arith.constant 10 : i32
    %1218 = arith.muli %1074, %c10_i32_355 : i32
    %c6_i32_356 = arith.constant 6 : i32
    %1219 = arith.addi %1218, %c6_i32_356 : i32
    %1220 = arith.index_cast %1219 : i32 to index
    %1221 = memref.load %arg6[%1220] : memref<160xf32, #tpu.memory_space<smem>>
    %1222 = vector.broadcast %1221 : f32 to vector<8x128xf32>
    %1223 = arith.mulf %1222, %1152 : vector<8x128xf32>
    %1224 = arith.mulf %1223, %1140 : vector<8x128xf32>
    %1225 = arith.addf %1217, %1224 : vector<8x128xf32>
    %c10_i32_357 = arith.constant 10 : i32
    %1226 = arith.muli %1074, %c10_i32_357 : i32
    %c7_i32_358 = arith.constant 7 : i32
    %1227 = arith.addi %1226, %c7_i32_358 : i32
    %1228 = arith.index_cast %1227 : i32 to index
    %1229 = memref.load %arg6[%1228] : memref<160xf32, #tpu.memory_space<smem>>
    %1230 = vector.broadcast %1229 : f32 to vector<8x128xf32>
    %1231 = arith.mulf %1230, %1161 : vector<8x128xf32>
    %1232 = arith.mulf %1231, %1140 : vector<8x128xf32>
    %1233 = arith.addf %1225, %1232 : vector<8x128xf32>
    %c10_i32_359 = arith.constant 10 : i32
    %1234 = arith.muli %1074, %c10_i32_359 : i32
    %c8_i32_360 = arith.constant 8 : i32
    %1235 = arith.addi %1234, %c8_i32_360 : i32
    %1236 = arith.index_cast %1235 : i32 to index
    %1237 = memref.load %arg6[%1236] : memref<160xf32, #tpu.memory_space<smem>>
    %1238 = vector.broadcast %1237 : f32 to vector<8x128xf32>
    %1239 = arith.mulf %1238, %1164 : vector<8x128xf32>
    %1240 = arith.mulf %1239, %1140 : vector<8x128xf32>
    %1241 = arith.addf %1233, %1240 : vector<8x128xf32>
    %c10_i32_361 = arith.constant 10 : i32
    %1242 = arith.muli %1074, %c10_i32_361 : i32
    %c9_i32_362 = arith.constant 9 : i32
    %1243 = arith.addi %1242, %c9_i32_362 : i32
    %1244 = arith.index_cast %1243 : i32 to index
    %1245 = memref.load %arg6[%1244] : memref<160xf32, #tpu.memory_space<smem>>
    %1246 = vector.broadcast %1245 : f32 to vector<8x128xf32>
    %1247 = arith.mulf %1246, %1169 : vector<8x128xf32>
    %1248 = arith.mulf %1247, %1140 : vector<8x128xf32>
    %1249 = arith.addf %1241, %1248 : vector<8x128xf32>
    %c8_i32_363 = arith.constant 8 : i32
    %1250 = arith.muli %arg1, %c8_i32_363 : i32
    %c7_i32_364 = arith.constant 7 : i32
    %1251 = arith.addi %1250, %c7_i32_364 : i32
    %1252 = arith.index_cast %1251 : i32 to index
    %1253 = memref.load %arg4[%1252] : memref<16xi32, #tpu.memory_space<smem>>
    %c3_i32_365 = arith.constant 3 : i32
    %1254 = arith.muli %1251, %c3_i32_365 : i32
    %1255 = arith.index_cast %1254 : i32 to index
    %1256 = memref.load %arg5[%1255] : memref<48xf32, #tpu.memory_space<smem>>
    %c3_i32_366 = arith.constant 3 : i32
    %1257 = arith.muli %1251, %c3_i32_366 : i32
    %c1_i32_367 = arith.constant 1 : i32
    %1258 = arith.addi %1257, %c1_i32_367 : i32
    %1259 = arith.index_cast %1258 : i32 to index
    %1260 = memref.load %arg5[%1259] : memref<48xf32, #tpu.memory_space<smem>>
    %c3_i32_368 = arith.constant 3 : i32
    %1261 = arith.muli %1251, %c3_i32_368 : i32
    %c2_i32_369 = arith.constant 2 : i32
    %1262 = arith.addi %1261, %c2_i32_369 : i32
    %1263 = arith.index_cast %1262 : i32 to index
    %1264 = memref.load %arg5[%1263] : memref<48xf32, #tpu.memory_space<smem>>
    %1265 = vector.broadcast %1256 : f32 to vector<8x128xf32>
    %1266 = arith.subf %4, %1265 : vector<8x128xf32>
    %1267 = vector.broadcast %1260 : f32 to vector<8x128xf32>
    %1268 = arith.subf %6, %1267 : vector<8x128xf32>
    %1269 = vector.broadcast %1264 : f32 to vector<8x128xf32>
    %1270 = arith.subf %8, %1269 : vector<8x128xf32>
    %1271 = arith.mulf %1266, %1266 : vector<8x128xf32>
    %1272 = arith.mulf %1268, %1268 : vector<8x128xf32>
    %1273 = arith.addf %1271, %1272 : vector<8x128xf32>
    %1274 = arith.mulf %1270, %1270 : vector<8x128xf32>
    %1275 = arith.addf %1273, %1274 : vector<8x128xf32>
    %1276 = math.sqrt %1275 : vector<8x128xf32>
    %cst_370 = arith.constant 1.000000e-24 : f32
    %1277 = vector.broadcast %cst_370 : f32 to vector<8x128xf32>
    %1278 = arith.addf %1275, %1277 : vector<8x128xf32>
    %1279 = math.rsqrt %1278 : vector<8x128xf32>
    %1280 = arith.mulf %1266, %1279 : vector<8x128xf32>
    %1281 = arith.mulf %1268, %1279 : vector<8x128xf32>
    %1282 = arith.mulf %1270, %1279 : vector<8x128xf32>
    %cst_371 = arith.constant 9.99999993E-9 : f32
    %1283 = vector.broadcast %cst_371 : f32 to vector<8x128xf32>
    %1284 = arith.addf %1276, %1283 : vector<8x128xf32>
    %1285 = arith.mulf %1284, %1284 : vector<8x128xf32>
    %1286 = vector.broadcast %1253 : i32 to vector<8x128xi32>
    %1287 = arith.cmpi eq, %9, %1286 : vector<8x128xi32>
    %cst_372 = arith.constant 5.000000e-01 : f32
    %1288 = vector.broadcast %cst_372 : f32 to vector<8x128xf32>
    %1289 = arith.mulf %1288, %1285 : vector<8x128xf32>
    %cst_373 = arith.constant 0.40696454 : f32
    %1290 = vector.broadcast %cst_373 : f32 to vector<8x128xf32>
    %1291 = arith.subf %1290, %1289 : vector<8x128xf32>
    %1292 = math.exp %1291 : vector<8x128xf32>
    %cst_374 = arith.constant 0.000000e+00 : f32
    %1293 = vector.broadcast %cst_374 : f32 to vector<8x128xf32>
    %1294 = arith.select %1287, %1292, %1293 : vector<8x128xi1>, vector<8x128xf32>
    %cst_375 = arith.constant 1.250000e+00 : f32
    %1295 = vector.broadcast %cst_375 : f32 to vector<8x128xf32>
    %1296 = arith.mulf %1295, %1285 : vector<8x128xf32>
    %cst_376 = arith.constant 1.09418261 : f32
    %1297 = vector.broadcast %cst_376 : f32 to vector<8x128xf32>
    %1298 = arith.subf %1297, %1296 : vector<8x128xf32>
    %1299 = math.exp %1298 : vector<8x128xf32>
    %cst_377 = arith.constant 0.000000e+00 : f32
    %1300 = vector.broadcast %cst_377 : f32 to vector<8x128xf32>
    %1301 = arith.select %1287, %1299, %1300 : vector<8x128xi1>, vector<8x128xf32>
    %cst_378 = arith.constant 8.000000e-01 : f32
    %1302 = vector.broadcast %cst_378 : f32 to vector<8x128xf32>
    %1303 = arith.mulf %1302, %1285 : vector<8x128xf32>
    %cst_379 = arith.constant 0.791736662 : f32
    %1304 = vector.broadcast %cst_379 : f32 to vector<8x128xf32>
    %1305 = arith.subf %1304, %1303 : vector<8x128xf32>
    %1306 = math.exp %1305 : vector<8x128xf32>
    %1307 = arith.mulf %1306, %1284 : vector<8x128xf32>
    %cst_380 = arith.constant 0.000000e+00 : f32
    %1308 = vector.broadcast %cst_380 : f32 to vector<8x128xf32>
    %1309 = arith.select %1287, %1307, %1308 : vector<8x128xi1>, vector<8x128xf32>
    %cst_381 = arith.constant 1.600000e+00 : f32
    %1310 = vector.broadcast %cst_381 : f32 to vector<8x128xf32>
    %1311 = arith.mulf %1310, %1285 : vector<8x128xf32>
    %cst_382 = arith.constant 1.78160071 : f32
    %1312 = vector.broadcast %cst_382 : f32 to vector<8x128xf32>
    %1313 = arith.subf %1312, %1311 : vector<8x128xf32>
    %1314 = math.exp %1313 : vector<8x128xf32>
    %1315 = arith.mulf %1314, %1285 : vector<8x128xf32>
    %cst_383 = arith.constant 0.000000e+00 : f32
    %1316 = vector.broadcast %cst_383 : f32 to vector<8x128xf32>
    %1317 = arith.select %1287, %1315, %1316 : vector<8x128xi1>, vector<8x128xf32>
    %cst_384 = arith.constant 0.488602519 : f32
    %1318 = vector.broadcast %cst_384 : f32 to vector<8x128xf32>
    %1319 = arith.mulf %1318, %1280 : vector<8x128xf32>
    %cst_385 = arith.constant 0.488602519 : f32
    %1320 = vector.broadcast %cst_385 : f32 to vector<8x128xf32>
    %1321 = arith.mulf %1320, %1281 : vector<8x128xf32>
    %cst_386 = arith.constant 0.488602519 : f32
    %1322 = vector.broadcast %cst_386 : f32 to vector<8x128xf32>
    %1323 = arith.mulf %1322, %1282 : vector<8x128xf32>
    %1324 = arith.mulf %1280, %1282 : vector<8x128xf32>
    %cst_387 = arith.constant 1.09254849 : f32
    %1325 = vector.broadcast %cst_387 : f32 to vector<8x128xf32>
    %1326 = arith.mulf %1325, %1324 : vector<8x128xf32>
    %1327 = arith.mulf %1280, %1281 : vector<8x128xf32>
    %cst_388 = arith.constant 1.09254849 : f32
    %1328 = vector.broadcast %cst_388 : f32 to vector<8x128xf32>
    %1329 = arith.mulf %1328, %1327 : vector<8x128xf32>
    %1330 = arith.mulf %1281, %1281 : vector<8x128xf32>
    %1331 = arith.mulf %1280, %1280 : vector<8x128xf32>
    %1332 = arith.mulf %1282, %1282 : vector<8x128xf32>
    %1333 = arith.addf %1331, %1332 : vector<8x128xf32>
    %cst_389 = arith.constant 5.000000e-01 : f32
    %1334 = vector.broadcast %cst_389 : f32 to vector<8x128xf32>
    %1335 = arith.mulf %1334, %1333 : vector<8x128xf32>
    %1336 = arith.subf %1330, %1335 : vector<8x128xf32>
    %cst_390 = arith.constant 0.63078314 : f32
    %1337 = vector.broadcast %cst_390 : f32 to vector<8x128xf32>
    %1338 = arith.mulf %1337, %1336 : vector<8x128xf32>
    %1339 = arith.mulf %1281, %1282 : vector<8x128xf32>
    %cst_391 = arith.constant 1.09254849 : f32
    %1340 = vector.broadcast %cst_391 : f32 to vector<8x128xf32>
    %1341 = arith.mulf %1340, %1339 : vector<8x128xf32>
    %1342 = arith.mulf %1282, %1282 : vector<8x128xf32>
    %1343 = arith.mulf %1280, %1280 : vector<8x128xf32>
    %1344 = arith.subf %1342, %1343 : vector<8x128xf32>
    %cst_392 = arith.constant 0.546274245 : f32
    %1345 = vector.broadcast %cst_392 : f32 to vector<8x128xf32>
    %1346 = arith.mulf %1345, %1344 : vector<8x128xf32>
    %c10_i32_393 = arith.constant 10 : i32
    %1347 = arith.muli %1251, %c10_i32_393 : i32
    %c0_i32_394 = arith.constant 0 : i32
    %1348 = arith.addi %1347, %c0_i32_394 : i32
    %1349 = arith.index_cast %1348 : i32 to index
    %1350 = memref.load %arg6[%1349] : memref<160xf32, #tpu.memory_space<smem>>
    %cst_395 = arith.constant 0.282094806 : f32
    %1351 = arith.mulf %1350, %cst_395 : f32
    %1352 = vector.broadcast %1351 : f32 to vector<8x128xf32>
    %1353 = arith.mulf %1352, %1294 : vector<8x128xf32>
    %1354 = arith.addf %1249, %1353 : vector<8x128xf32>
    %c10_i32_396 = arith.constant 10 : i32
    %1355 = arith.muli %1251, %c10_i32_396 : i32
    %c1_i32_397 = arith.constant 1 : i32
    %1356 = arith.addi %1355, %c1_i32_397 : i32
    %1357 = arith.index_cast %1356 : i32 to index
    %1358 = memref.load %arg6[%1357] : memref<160xf32, #tpu.memory_space<smem>>
    %cst_398 = arith.constant 0.282094806 : f32
    %1359 = arith.mulf %1358, %cst_398 : f32
    %1360 = vector.broadcast %1359 : f32 to vector<8x128xf32>
    %1361 = arith.mulf %1360, %1301 : vector<8x128xf32>
    %1362 = arith.addf %1354, %1361 : vector<8x128xf32>
    %c10_i32_399 = arith.constant 10 : i32
    %1363 = arith.muli %1251, %c10_i32_399 : i32
    %c2_i32_400 = arith.constant 2 : i32
    %1364 = arith.addi %1363, %c2_i32_400 : i32
    %1365 = arith.index_cast %1364 : i32 to index
    %1366 = memref.load %arg6[%1365] : memref<160xf32, #tpu.memory_space<smem>>
    %1367 = vector.broadcast %1366 : f32 to vector<8x128xf32>
    %1368 = arith.mulf %1367, %1319 : vector<8x128xf32>
    %1369 = arith.mulf %1368, %1309 : vector<8x128xf32>
    %1370 = arith.addf %1362, %1369 : vector<8x128xf32>
    %c10_i32_401 = arith.constant 10 : i32
    %1371 = arith.muli %1251, %c10_i32_401 : i32
    %c3_i32_402 = arith.constant 3 : i32
    %1372 = arith.addi %1371, %c3_i32_402 : i32
    %1373 = arith.index_cast %1372 : i32 to index
    %1374 = memref.load %arg6[%1373] : memref<160xf32, #tpu.memory_space<smem>>
    %1375 = vector.broadcast %1374 : f32 to vector<8x128xf32>
    %1376 = arith.mulf %1375, %1321 : vector<8x128xf32>
    %1377 = arith.mulf %1376, %1309 : vector<8x128xf32>
    %1378 = arith.addf %1370, %1377 : vector<8x128xf32>
    %c10_i32_403 = arith.constant 10 : i32
    %1379 = arith.muli %1251, %c10_i32_403 : i32
    %c4_i32_404 = arith.constant 4 : i32
    %1380 = arith.addi %1379, %c4_i32_404 : i32
    %1381 = arith.index_cast %1380 : i32 to index
    %1382 = memref.load %arg6[%1381] : memref<160xf32, #tpu.memory_space<smem>>
    %1383 = vector.broadcast %1382 : f32 to vector<8x128xf32>
    %1384 = arith.mulf %1383, %1323 : vector<8x128xf32>
    %1385 = arith.mulf %1384, %1309 : vector<8x128xf32>
    %1386 = arith.addf %1378, %1385 : vector<8x128xf32>
    %c10_i32_405 = arith.constant 10 : i32
    %1387 = arith.muli %1251, %c10_i32_405 : i32
    %c5_i32_406 = arith.constant 5 : i32
    %1388 = arith.addi %1387, %c5_i32_406 : i32
    %1389 = arith.index_cast %1388 : i32 to index
    %1390 = memref.load %arg6[%1389] : memref<160xf32, #tpu.memory_space<smem>>
    %1391 = vector.broadcast %1390 : f32 to vector<8x128xf32>
    %1392 = arith.mulf %1391, %1326 : vector<8x128xf32>
    %1393 = arith.mulf %1392, %1317 : vector<8x128xf32>
    %1394 = arith.addf %1386, %1393 : vector<8x128xf32>
    %c10_i32_407 = arith.constant 10 : i32
    %1395 = arith.muli %1251, %c10_i32_407 : i32
    %c6_i32_408 = arith.constant 6 : i32
    %1396 = arith.addi %1395, %c6_i32_408 : i32
    %1397 = arith.index_cast %1396 : i32 to index
    %1398 = memref.load %arg6[%1397] : memref<160xf32, #tpu.memory_space<smem>>
    %1399 = vector.broadcast %1398 : f32 to vector<8x128xf32>
    %1400 = arith.mulf %1399, %1329 : vector<8x128xf32>
    %1401 = arith.mulf %1400, %1317 : vector<8x128xf32>
    %1402 = arith.addf %1394, %1401 : vector<8x128xf32>
    %c10_i32_409 = arith.constant 10 : i32
    %1403 = arith.muli %1251, %c10_i32_409 : i32
    %c7_i32_410 = arith.constant 7 : i32
    %1404 = arith.addi %1403, %c7_i32_410 : i32
    %1405 = arith.index_cast %1404 : i32 to index
    %1406 = memref.load %arg6[%1405] : memref<160xf32, #tpu.memory_space<smem>>
    %1407 = vector.broadcast %1406 : f32 to vector<8x128xf32>
    %1408 = arith.mulf %1407, %1338 : vector<8x128xf32>
    %1409 = arith.mulf %1408, %1317 : vector<8x128xf32>
    %1410 = arith.addf %1402, %1409 : vector<8x128xf32>
    %c10_i32_411 = arith.constant 10 : i32
    %1411 = arith.muli %1251, %c10_i32_411 : i32
    %c8_i32_412 = arith.constant 8 : i32
    %1412 = arith.addi %1411, %c8_i32_412 : i32
    %1413 = arith.index_cast %1412 : i32 to index
    %1414 = memref.load %arg6[%1413] : memref<160xf32, #tpu.memory_space<smem>>
    %1415 = vector.broadcast %1414 : f32 to vector<8x128xf32>
    %1416 = arith.mulf %1415, %1341 : vector<8x128xf32>
    %1417 = arith.mulf %1416, %1317 : vector<8x128xf32>
    %1418 = arith.addf %1410, %1417 : vector<8x128xf32>
    %c10_i32_413 = arith.constant 10 : i32
    %1419 = arith.muli %1251, %c10_i32_413 : i32
    %c9_i32_414 = arith.constant 9 : i32
    %1420 = arith.addi %1419, %c9_i32_414 : i32
    %1421 = arith.index_cast %1420 : i32 to index
    %1422 = memref.load %arg6[%1421] : memref<160xf32, #tpu.memory_space<smem>>
    %1423 = vector.broadcast %1422 : f32 to vector<8x128xf32>
    %1424 = arith.mulf %1423, %1346 : vector<8x128xf32>
    %1425 = arith.mulf %1424, %1317 : vector<8x128xf32>
    %1426 = arith.addf %1418, %1425 : vector<8x128xf32>
    %c0_415 = arith.constant 0 : index
    %c0_416 = arith.constant 0 : index
    %1427 = vector.load %arg7[%c0_415, %c0_416] : memref<8x128xf32, #tpu.memory_space<vmem>>, vector<8x128xf32>
    %1428 = arith.addf %1427, %1426 : vector<8x128xf32>
    %c0_417 = arith.constant 0 : index
    %c0_418 = arith.constant 0 : index
    %1429 = vector.load %arg7[%c0_417, %c0_418] : memref<8x128xf32, #tpu.memory_space<vmem>>, vector<8x128xf32>
    tpu.vector_store %arg7[%c0_417, %c0_418], %1428 {strides = array<i32>} : memref<8x128xf32, #tpu.memory_space<vmem>>, vector<8x128xf32>,
    return
  }
  func.func @transform_0(%arg0: i32, %arg1: i32) -> (i32, i32, i32) {
    %c0_i32 = arith.constant 0 : i32
    %c0_i32_0 = arith.constant 0 : i32
    %c0_i32_1 = arith.constant 0 : i32
    return %c0_i32, %arg0, %c0_i32_0 : i32, i32, i32
  }
  func.func @transform_1(%arg0: i32, %arg1: i32) -> (i32, i32) {
    %c0_i32 = arith.constant 0 : i32
    %c0_i32_0 = arith.constant 0 : i32
    return %arg0, %c0_i32 : i32, i32
  }
  func.func @transform_2(%arg0: i32, %arg1: i32) -> i32 {
    %c0_i32 = arith.constant 0 : i32
    %c0_i32_0 = arith.constant 0 : i32
    return %c0_i32 : i32
  }
  func.func @transform_3(%arg0: i32, %arg1: i32) -> i32 {
    %c0_i32 = arith.constant 0 : i32
    %c0_i32_0 = arith.constant 0 : i32
    return %c0_i32 : i32
  }
  func.func @transform_4(%arg0: i32, %arg1: i32) -> i32 {
    %c0_i32 = arith.constant 0 : i32
    %c0_i32_0 = arith.constant 0 : i32
    return %c0_i32 : i32
  }
  func.func @transform_5(%arg0: i32, %arg1: i32) -> (i32, i32) {
    %c0_i32 = arith.constant 0 : i32
    %c0_i32_0 = arith.constant 0 : i32
    return %arg0, %c0_i32 : i32, i32
  }
}

</mosaic_0001>

<llo_original>
// kernel: tpu_custom_call.1
$region0: #{tpu_custom_call.1}
  #allocation0 [shape = 'u32[]', space=smem, size = 0x4, offset = 0x4, fixed_abs, tag = 'smem constant byte address 0x4 - core index']
  #allocation1 [shape = 'u32[72,128]{1,0:T(1,128)}', space=vmem, size = 0x9000, scoped, tag = 'internal scratch']
  %s0 = inlined_call_operand.hbm [shape: f32[3,16,128], index: 0, kind: input, shape index: {}]
  %s1 = inlined_call_operand.hbm [shape: s32[16,128], index: 1, kind: input, shape index: {}]
  %s2 = inlined_call_operand.vmem [shape: s32[16], index: 2, kind: input, shape index: {}]
  %s3 = inlined_call_operand.hbm [shape: f32[48], index: 3, kind: input, shape index: {}]
  %s4 = inlined_call_operand.vmem [shape: f32[160], index: 4, kind: input, shape index: {}]
  %s5 = inlined_call_operand.hbm [shape: f32[16,128], index: 5, kind: output, shape index: {}]
  %s6 = sld [smem:[#allocation0]]
  $region77: #{tpu_custom_call.1} parent=0
    _
  %s8 = ssub.s32 1, %s6
  %s9 = scalar_select 0, %s8, %s6
  $region1: #{tpu_custom_call.1} parent=0
    #allocation2 [shape = 'u8[24576]{0}', space=vmem, size = 0x6000, scoped, tag = 'input window, operand 0']
    #allocation3 [shape = 's32[2]{0}', space=sflag, size = 0x8, scoped, tag = 'scoped memory for tpu_custom_call.1']
    #allocation4 [shape = 's32[2]{0}', space=sflag, size = 0x8, scoped, tag = 'scoped memory for tpu_custom_call.1']
    #allocation5 [shape = 's32[2]{0}', space=sflag, size = 0x8, scoped, tag = 'scoped memory for tpu_custom_call.1']
    #allocation6 [shape = 's32[2]{0}', space=sflag, size = 0x8, scoped, tag = 'scoped memory for tpu_custom_call.1']
    #allocation7 [shape = 'u8[8192]{0}', space=vmem, size = 0x2000, scoped, tag = 'input window, operand 1']
    #allocation8 [shape = 's32[2]{0}', space=sflag, size = 0x8, scoped, tag = 'scoped memory for tpu_custom_call.1']
    #allocation9 [shape = 'u8[512]{0}', space=smem, size = 0x200, scoped, tag = 'input window, operand 2, single buffered']
    #allocation10 [shape = 'u8[512]{0}', space=smem, size = 0x200, scoped, tag = 'input window, operand 3, single buffered']
    #allocation11 [shape = 'u8[1024]{0}', space=smem, size = 0x400, scoped, tag = 'input window, operand 4, single buffered']
    #allocation12 [shape = 's32[1]{0}', space=sflag, size = 0x4, scoped, tag = 'scoped memory for tpu_custom_call.1']
    #allocation13 [shape = 'u8[8192]{0}', space=vmem, size = 0x2000, scoped, tag = 'output window, operand 0']
    %10 = vsyncpa [#allocation3], 0
    %s11 = scalar_lea.sflag [#allocation3], 1
    %12 = vsyncpa %s11, 0
    %13 = vsyncpa [#allocation8], 0
    %s14 = scalar_lea.sflag [#allocation8], 1
    %15 = vsyncpa %s14, 0
    %16 = vsyncpa [#allocation6], 0
    %17 = vsyncpa [#allocation5], 0
    %18 = vsyncpa [#allocation12], 0
    %19 = vsyncpa [#allocation4], 0
    %s20 = scalar_lea.sflag [#allocation4], 1
    %21 = vsyncpa %s20, 0
    loop: start=0, step=1, limit=6
    $region2: #{tpu_custom_call.1} parent=1 // loop_pre_header
      _
    $region3: #{tpu_custom_call.1} parent=1 // loop_header
      %s23 = sphi 0, %s27
      %p24 = scmp.ge.s32.totalorder %s23, 6
      %s30 = sphi 0, %s42
      %s31 = sphi 0, %s38
      %s32 = sphi 0, %s30
      %s33 = sphi 0, %s31
      %s34 = sphi 0, %s32
      %s35 = sphi 0, %s33
      %s45 = sphi 0, %s47
      %s48 = sphi 0, %s45
      %s49 = sphi 0, %s48
      %s65 = sphi 0, %s49
      %s71 = sphi 0, %s73
      %s74 = sphi 0, %s71
      %s75 = sphi 0, %s74
      %s91 = sphi 0, %s75
      %s95 = sphi 0, %s95
      %s97 = sphi 0, %s95
      %s98 = sphi 0, %s97
      %s112 = sphi 0, %s98
      %s116 = sphi 0, %s116
      %s118 = sphi 0, %s116
      %s119 = sphi 0, %s118
      %s133 = sphi 0, %s119
      %s137 = sphi 0, %s137
      %s139 = sphi 0, %s137
      %s140 = sphi 0, %s139
      %s154 = sphi 0, %s140
      %s160 = sphi 0, %s162
      %s163 = sphi 0, %s160
      %s164 = sphi 0, %s163
      %s180 = sphi 0, %s164
    $region4: #{tpu_custom_call.1} parent=1 // loop_header_branch
      %26 = sbr.rel (%p24) target = $region8
    $region5: #{tpu_custom_call.1} parent=1 // loop_body
      %s28 = ssub.s32 %s23, 1
      %s29 = ssub.s32 %s23, 2
      %s36 = sadd.s32 1, %s31
      %p37 = scmp.ge.s32.totalorder %s36, 2
      %s38 = scalar_select %p37, 0, %s36
      %s39 = sadd.s32 1, %s30
      %s40 = scalar_select %p37, %s39, %s30
      %p41 = scmp.ge.s32.totalorder %s40, 2
      %s42 = scalar_select %p41, 0, %s40
      %s43 = ssub.s32 %s30, %s42
      %p44 = scmp.eq.s32.totalorder %s43, 0
      %s46 = sadd.s32 %s45, 1
      %s47 = scalar_select %p44, %s45, %s46
      %p50 = pneg %p44
      %p51 = scmp.eq.s32.totalorder %s23, 3
      %p52 = por %p50, %p51
      %p53 = scmp.ne.s32.totalorder %s45, %s48
      %p54 = scmp.eq.s32.totalorder %s23, 0
      %p55 = por %p53, %p54
      %p56 = scmp.ne.s32.totalorder %s45, %s48
      %p57 = scmp.eq.s32.totalorder %s28, 3
      %p58 = por %p56, %p57
      %p59 = scmp.ne.s32.totalorder %s48, %s49
      %p60 = scmp.eq.s32.totalorder %s28, 0
      %p61 = por %p59, %p60
      %p62 = scmp.ne.s32.totalorder %s48, %s49
      %p63 = scmp.eq.s32.totalorder %s29, 3
      %p64 = por %p62, %p63
      %p66 = scmp.ne.s32.totalorder %s49, %s65
      %p67 = scmp.eq.s32.totalorder %s29, 0
      %p68 = por %p66, %p67
      %s69 = ssub.s32 %s30, %s42
      %p70 = scmp.eq.s32.totalorder %s69, 0
      %s72 = sadd.s32 %s71, 1
      %s73 = scalar_select %p70, %s71, %s72
      %p76 = pneg %p70
      %p77 = scmp.eq.s32.totalorder %s23, 3
      %p78 = por %p76, %p77
      %p79 = scmp.ne.s32.totalorder %s71, %s74
      %p80 = scmp.eq.s32.totalorder %s23, 0
      %p81 = por %p79, %p80
      %p82 = scmp.ne.s32.totalorder %s71, %s74
      %p83 = scmp.eq.s32.totalorder %s28, 3
      %p84 = por %p82, %p83
      %p85 = scmp.ne.s32.totalorder %s74, %s75
      %p86 = scmp.eq.s32.totalorder %s28, 0
      %p87 = por %p85, %p86
      %p88 = scmp.ne.s32.totalorder %s74, %s75
      %p89 = scmp.eq.s32.totalorder %s29, 3
      %p90 = por %p88, %p89
      %p92 = scmp.ne.s32.totalorder %s75, %s91
      %p93 = scmp.eq.s32.totalorder %s29, 0
      %p94 = por %p92, %p93
      %s96 = sadd.s32 %s95, 1
      %p99 = scmp.eq.s32.totalorder %s23, 3
      %p100 = scmp.ne.s32.totalorder %s95, %s97
      %p101 = scmp.eq.s32.totalorder %s23, 0
      %p102 = por %p100, %p101
      %p103 = scmp.ne.s32.totalorder %s95, %s97
      %p104 = scmp.eq.s32.totalorder %s28, 3
      %p105 = por %p103, %p104
      %p106 = scmp.ne.s32.totalorder %s97, %s98
      %p107 = scmp.eq.s32.totalorder %s28, 0
      %p108 = por %p106, %p107
      %p109 = scmp.ne.s32.totalorder %s97, %s98
      %p110 = scmp.eq.s32.totalorder %s29, 3
      %p111 = por %p109, %p110
      %p113 = scmp.ne.s32.totalorder %s98, %s112
      %p114 = scmp.eq.s32.totalorder %s29, 0
      %p115 = por %p113, %p114
      %s117 = sadd.s32 %s116, 1
      %p120 = scmp.eq.s32.totalorder %s23, 3
      %p121 = scmp.ne.s32.totalorder %s116, %s118
      %p122 = scmp.eq.s32.totalorder %s23, 0
      %p123 = por %p121, %p122
      %p124 = scmp.ne.s32.totalorder %s116, %s118
      %p125 = scmp.eq.s32.totalorder %s28, 3
      %p126 = por %p124, %p125
      %p127 = scmp.ne.s32.totalorder %s118, %s119
      %p128 = scmp.eq.s32.totalorder %s28, 0
      %p129 = por %p127, %p128
      %p130 = scmp.ne.s32.totalorder %s118, %s119
      %p131 = scmp.eq.s32.totalorder %s29, 3
      %p132 = por %p130, %p131
      %p134 = scmp.ne.s32.totalorder %s119, %s133
      %p135 = scmp.eq.s32.totalorder %s29, 0
      %p136 = por %p134, %p135
      %s138 = sadd.s32 %s137, 1
      %p141 = scmp.eq.s32.totalorder %s23, 3
      %p142 = scmp.ne.s32.totalorder %s137, %s139
      %p143 = scmp.eq.s32.totalorder %s23, 0
      %p144 = por %p142, %p143
      %p145 = scmp.ne.s32.totalorder %s137, %s139
      %p146 = scmp.eq.s32.totalorder %s28, 3
      %p147 = por %p145, %p146
      %p148 = scmp.ne.s32.totalorder %s139, %s140
      %p149 = scmp.eq.s32.totalorder %s28, 0
      %p150 = por %p148, %p149
      %p151 = scmp.ne.s32.totalorder %s139, %s140
      %p152 = scmp.eq.s32.totalorder %s29, 3
      %p153 = por %p151, %p152
      %p155 = scmp.ne.s32.totalorder %s140, %s154
      %p156 = scmp.eq.s32.totalorder %s29, 0
      %p157 = por %p155, %p156
      %s158 = ssub.s32 %s30, %s42
      %p159 = scmp.eq.s32.totalorder %s158, 0
      %s161 = sadd.s32 %s160, 1
      %s162 = scalar_select %p159, %s160, %s161
      %p165 = pneg %p159
      %p166 = scmp.eq.s32.totalorder %s23, 3
      %p167 = por %p165, %p166
      %p168 = scmp.ne.s32.totalorder %s160, %s163
      %p169 = scmp.eq.s32.totalorder %s23, 0
      %p170 = por %p168, %p169
      %p171 = scmp.ne.s32.totalorder %s160, %s163
      %p172 = scmp.eq.s32.totalorder %s28, 3
      %p173 = por %p171, %p172
      %p174 = scmp.ne.s32.totalorder %s163, %s164
      %p175 = scmp.eq.s32.totalorder %s28, 0
      %p176 = por %p174, %p175
      %p177 = scmp.ne.s32.totalorder %s163, %s164
      %p178 = scmp.eq.s32.totalorder %s29, 3
      %p179 = por %p177, %p178
      %p181 = scmp.ne.s32.totalorder %s164, %s180
      %p182 = scmp.eq.s32.totalorder %s29, 0
      %p183 = por %p181, %p182
      %p184 = scmp.le.s32.totalorder 1, %s23
      %p185 = scmp.lt.s32.totalorder %s23, 5
      %p186 = pnand %p184, %p185
      %p187 = pneg %p186
      // Predicated region
      $region9: #{tpu_custom_call.1} parent=5 // pred_check
        _
      $region10: #{tpu_custom_call.1} parent=5 // pred_check_branch
        %189 = sbr.rel (%p186) target = $region12
      $region11: #{tpu_custom_call.1} parent=5 // pred_region
        %s190 = ssub.s32 %s23, 1
        // Predicated region
        $region13: #{tpu_custom_call.1} parent=11 // pred_check
          %p191 = pneg %p108
        $region14: #{tpu_custom_call.1} parent=11 // pred_check_branch
          %193 = sbr.rel (%p191) target = $region16
        $region15: #{tpu_custom_call.1} parent=11 // pred_region
          %195 = vsyncadd [#allocation6], 0
          %s197 = sshll.u32 %s2, 4
          %s198 = int_to_ptr.vmem [resolvable:$true] %s197
          %200 = dma.vmem_to_smem %s198, 16, [#allocation9], [#allocation6]
        $region16: #{tpu_custom_call.1} parent=11 // pred_fallthru
          _
        // Predicated region
        $region17: #{tpu_custom_call.1} parent=11 // pred_check
          %p201 = pneg %p129
        $region18: #{tpu_custom_call.1} parent=11 // pred_check_branch
          %203 = sbr.rel (%p201) target = $region20
        $region19: #{tpu_custom_call.1} parent=11 // pred_region
          %205 = vsyncadd [#allocation5], 0
          %s207 = sshll.u32 %s3, 4
          %s208 = int_to_ptr.hbm [resolvable:$true] %s207
          %210 = dma.hbm_to_smem %s208, 16, [#allocation10], [#allocation5]
        $region20: #{tpu_custom_call.1} parent=11 // pred_fallthru
          _
        // Predicated region
        $region21: #{tpu_custom_call.1} parent=11 // pred_check
          %p211 = pneg %p150
        $region22: #{tpu_custom_call.1} parent=11 // pred_check_branch
          %213 = sbr.rel (%p211) target = $region24
        $region23: #{tpu_custom_call.1} parent=11 // pred_region
          %215 = vsyncadd [#allocation12], 0
          %s217 = sshll.u32 %s4, 4
          %s218 = int_to_ptr.vmem [resolvable:$true] %s217
          %220 = dma.vmem_to_smem %s218, 32, [#allocation11], [#allocation12]
        $region24: #{tpu_custom_call.1} parent=11 // pred_fallthru
          _
      $region12: #{tpu_custom_call.1} parent=5 // pred_fallthru
        _
      %p221 = scmp.lt.s32.totalorder %s23, 4
      // Predicated region
      $region25: #{tpu_custom_call.1} parent=5 // pred_check
        %p222 = pneg %p221
      $region26: #{tpu_custom_call.1} parent=5 // pred_check_branch
        %224 = sbr.rel (%p222) target = $region28
      $region27: #{tpu_custom_call.1} parent=5 // pred_region
        // Predicated region
        $region29: #{tpu_custom_call.1} parent=27 // pred_check
          %p225 = pneg %p55
        $region30: #{tpu_custom_call.1} parent=27 // pred_check_branch
          %227 = sbr.rel (%p225) target = $region32
        $region31: #{tpu_custom_call.1} parent=27 // pred_region
          %s228 = sand.u32 %s45, 1
          %s229 = scalar_lea.sflag [#allocation3], %s228
          %s230 = sand.u32 %s45, 1
          %s231 = smul.addr %s230, 24
          %s232 = scalar_lea.vmem [#allocation2], %s231
          %234 = vsyncadd %s229, 0
          %s235 = smul.addr %s30, 8
          %s236 = scalar_lea.hbm %s0, %s235
          %s237 = sshll.u32 %s236, 4
          %s238 = int_to_ptr.hbm [resolvable:$true] %s237
          %s239 = sshll.u32 %s232, 4
          %s240 = int_to_ptr.vmem [resolvable:$true] %s239
          %245 = dma.hbm_to_vmem [thread:$0]  %s238, 384, %s240, %s229, 256, 128, 8
        $region32: #{tpu_custom_call.1} parent=27 // pred_fallthru
          _
        // Predicated region
        $region33: #{tpu_custom_call.1} parent=27 // pred_check
          %p246 = pneg %p81
        $region34: #{tpu_custom_call.1} parent=27 // pred_check_branch
          %248 = sbr.rel (%p246) target = $region36
        $region35: #{tpu_custom_call.1} parent=27 // pred_region
          %s249 = sand.u32 %s71, 1
          %s250 = scalar_lea.sflag [#allocation8], %s249
          %s251 = sand.u32 %s71, 1
          %s252 = smul.addr %s251, 8
          %s253 = scalar_lea.vmem [#allocation7], %s252
          %255 = vsyncadd %s250, 0
          %s256 = smul.addr %s30, 8
          %s257 = scalar_lea.hbm %s1, %s256
          %s259 = sshll.u32 %s257, 4
          %s260 = int_to_ptr.hbm [resolvable:$true] %s259
          %s261 = sshll.u32 %s253, 4
          %s262 = int_to_ptr.vmem [resolvable:$true] %s261
          %264 = dma.hbm_to_vmem [thread:$0]  %s260, 128, %s262, %s250
        $region36: #{tpu_custom_call.1} parent=27 // pred_fallthru
          _
      $region28: #{tpu_custom_call.1} parent=5 // pred_fallthru
        _
      %p265 = scmp.le.s32.totalorder 1, %s23
      %p266 = scmp.lt.s32.totalorder %s23, 5
      %p267 = pnand %p265, %p266
      %p268 = pneg %p267
      // Predicated region
      $region37: #{tpu_custom_call.1} parent=5 // pred_check
        _
      $region38: #{tpu_custom_call.1} parent=5 // pred_check_branch
        %270 = sbr.rel (%p267) target = $region40
      $region39: #{tpu_custom_call.1} parent=5 // pred_region
        %s271 = ssub.s32 %s23, 1
        %s272 = sand.u32 %s48, 1
        %s273 = scalar_lea.sflag [#allocation3], %s272
        %s274 = sand.u32 %s48, 1
        %s275 = smul.addr %s274, 24
        %s276 = scalar_lea.vmem [#allocation2], %s275
        // Predicated region
        $region41: #{tpu_custom_call.1} parent=39 // pred_check
          %p277 = pneg %p61
        $region42: #{tpu_custom_call.1} parent=39 // pred_check_branch
          %279 = sbr.rel (%p277) target = $region44
        $region43: #{tpu_custom_call.1} parent=39 // pred_region
          %281 = dma.done %s273, 384
        $region44: #{tpu_custom_call.1} parent=39 // pred_fallthru
          _
        %s282 = sand.u32 %s74, 1
        %s283 = scalar_lea.sflag [#allocation8], %s282
        %s284 = sand.u32 %s74, 1
        %s285 = smul.addr %s284, 8
        %s286 = scalar_lea.vmem [#allocation7], %s285
        // Predicated region
        $region45: #{tpu_custom_call.1} parent=39 // pred_check
          %p287 = pneg %p87
        $region46: #{tpu_custom_call.1} parent=39 // pred_check_branch
          %289 = sbr.rel (%p287) target = $region48
        $region47: #{tpu_custom_call.1} parent=39 // pred_region
          %291 = dma.done %s283, 128
        $region48: #{tpu_custom_call.1} parent=39 // pred_fallthru
          _
        // Predicated region
        $region49: #{tpu_custom_call.1} parent=39 // pred_check
          %p292 = pneg %p108
        $region50: #{tpu_custom_call.1} parent=39 // pred_check_branch
          %294 = sbr.rel (%p292) target = $region52
        $region51: #{tpu_custom_call.1} parent=39 // pred_region
          %296 = dma.done [#allocation6], 16
        $region52: #{tpu_custom_call.1} parent=39 // pred_fallthru
          _
        // Predicated region
        $region53: #{tpu_custom_call.1} parent=39 // pred_check
          %p297 = pneg %p129
        $region54: #{tpu_custom_call.1} parent=39 // pred_check_branch
          %299 = sbr.rel (%p297) target = $region56
        $region55: #{tpu_custom_call.1} parent=39 // pred_region
          %301 = dma.done [#allocation5], 16
        $region56: #{tpu_custom_call.1} parent=39 // pred_fallthru
          _
        // Predicated region
        $region57: #{tpu_custom_call.1} parent=39 // pred_check
          %p302 = pneg %p150
        $region58: #{tpu_custom_call.1} parent=39 // pred_check_branch
          %304 = sbr.rel (%p302) target = $region60
        $region59: #{tpu_custom_call.1} parent=39 // pred_region
          %306 = dma.done [#allocation12], 32
        $region60: #{tpu_custom_call.1} parent=39 // pred_fallthru
          _
        %307 = sfence
        %s308 = sand.u32 %s48, 1
        %s309 = scalar_lea.sflag [#allocation3], %s308
        %s310 = sand.u32 %s48, 1
        %s311 = smul.addr %s310, 24
        %s312 = scalar_lea.vmem [#allocation2], %s311
        %p313 = pneg %p61
        %p314 = pneg %p58
        %s315 = sand.u32 %s74, 1
        %s316 = scalar_lea.sflag [#allocation8], %s315
        %s317 = sand.u32 %s74, 1
        %s318 = smul.addr %s317, 8
        %s319 = scalar_lea.vmem [#allocation7], %s318
        %p320 = pneg %p87
        %p321 = pneg %p84
        %p322 = pneg %p108
        %p323 = pneg %p105
        %p324 = pneg %p129
        %p325 = pneg %p126
        %p326 = pneg %p150
        %p327 = pneg %p147
        %p328 = pneg %p176
        %p329 = pneg %p173
        %s330 = sand.u32 %s163, 1
        %s331 = scalar_lea.sflag [#allocation4], %s330
        %s332 = sand.u32 %s163, 1
        %s333 = smul.addr %s332, 8
        %s334 = scalar_lea.vmem [#allocation13], %s333
        %p335 = scmp.eq.s32.totalorder %s33, 0
        // Predicated region
        $region61: #{tpu_custom_call.1} parent=39 // pred_check
          %p336 = pneg %p335
        $region62: #{tpu_custom_call.1} parent=39 // pred_check_branch
          %338 = sbr.rel (%p336) target = $region64
        $region63: #{tpu_custom_call.1} parent=39 // pred_region
          %339 = vst [vmem:[%s334] sm:$0xff] 0.0
        $region64: #{tpu_custom_call.1} parent=39 // pred_fallthru
          _
        %v340 = vld [vmem:[%s276] sm:$0xff]
        %s341 = scalar_lea.vmem %s276, 8 [#allocation2]
        %v342 = vld [vmem:[%s341] sm:$0xff]
        %s343 = scalar_lea.vmem %s276, 16 [#allocation2]
        %v344 = vld [vmem:[%s343] sm:$0xff]
        %v345 = vld [vmem:[%s286] sm:$0xff]
        %s346 = smul.u32 %s33, 8
        %s347 = sld [smem:[#allocation9 + %s346]]
        %s348 = smul.u32 %s33, 24
        %s349 = sld [smem:[#allocation10 + %s348]]
        %s350 = sadd.s32 %s348, 1
        %s351 = sld [smem:[#allocation10 + %s350]]
        %s352 = sadd.s32 %s348, 2
        %s353 = sld [smem:[#allocation10 + %s352]]
        %v354 = vstv %s349
        %v355 = vsub.f32 %v340, %v354
        %v356 = vstv %s351
        %v357 = vsub.f32 %v342, %v356
        %v358 = vstv %s353
        %v359 = vsub.f32 %v344, %v358
        %v360 = vmul.f32 %v355, %v355
        %v361 = vmul.f32 %v357, %v357
        %v362 = vadd.f32 %v360, %v361
        %v363 = vmul.f32 %v359, %v359
        %v364 = vadd.f32 %v362, %v363
        %v365 = vrsqrt.pop %v364
        %v366 = vmul.f32 %v365, %v364
        %v367 = vmul.f32 %v366, %v365
        %v368 = vmul.f32 0.5, %v367
        %v369 = vsub.f32 1.5, %v368
        %v370 = vmul.f32 %v365, %v369
        %v371 = vmul.f32 %v364, %v370
        %vm372 = vcmp.eq.f32.partialorder %v364, inf
        %v373 = vsel %vm372, %v364, %v371
        %vm374 = vcmp.eq.f32.partialorder %v364, 0.0
        %v375 = vand.u32 %v364, 2147483648
        %v376 = vsel %vm374, %v375, %v373
        %v377 = vadd.f32 %v364, 1e-24
        %v378 = vrsqrt.pop %v377
        %v379 = vmul.f32 %v378, %v377
        %v380 = vmul.f32 %v379, %v378
        %v381 = vmul.f32 0.5, %v380
        %v382 = vsub.f32 1.5, %v381
        %v383 = vmul.f32 %v378, %v382
        %vm384 = vweird.f32 %v377
        %vm385 = vweird.f32 %v378
        %vm386 = vmor %vm384, %vm385
        %v387 = vsel %vm386, %v378, %v383
        %v388 = vmul.f32 %v355, %v387
        %v389 = vmul.f32 %v357, %v387
        %v390 = vmul.f32 %v359, %v387
        %v391 = vadd.f32 %v376, 1e-08
        %v392 = vmul.f32 %v391, %v391
        %v393 = vstv %s347
        %vm394 = vcmp.eq.s32.totalorder %v345, %v393
        %v395 = vmul.f32 %v392, 0.5
        %v396 = vsub.f32 0.40696454, %v395
        %v397 = vmul.f32 %v396, 1.442695
        %v398 = vpow.pop %v397
        %v399 = vsel %vm394, %v398, 0.0
        %v400 = vmul.f32 %v392, 1.25
        %v401 = vsub.f32 1.0941826, %v400
        %v402 = vmul.f32 %v401, 1.442695
        %v403 = vpow.pop %v402
        %v404 = vsel %vm394, %v403, 0.0
        %v405 = vmul.f32 %v392, 0.8
        %v406 = vsub.f32 0.79173666, %v405
        %v407 = vmul.f32 %v406, 1.442695
        %v408 = vpow.pop %v407
        %v409 = vmul.f32 %v408, %v391
        %v410 = vsel %vm394, %v409, 0.0
        %v411 = vmul.f32 %v392, 1.6
        %v412 = vsub.f32 1.7816007, %v411
        %v413 = vmul.f32 %v412, 1.442695
        %v414 = vpow.pop %v413
        %v415 = vmul.f32 %v414, %v392
        %v416 = vsel %vm394, %v415, 0.0
        %v417 = vmul.f32 %v388, 0.48860252
        %v418 = vmul.f32 %v389, 0.48860252
        %v419 = vmul.f32 %v390, 0.48860252
        %v420 = vmul.f32 %v388, %v390
        %v421 = vmul.f32 %v420, 1.0925485
        %v422 = vmul.f32 %v388, %v389
        %v423 = vmul.f32 %v422, 1.0925485
        %v424 = vmul.f32 %v389, %v389
        %v425 = vmul.f32 %v388, %v388
        %v426 = vmul.f32 %v390, %v390
        %v427 = vadd.f32 %v425, %v426
        %v428 = vmul.f32 %v427, 0.5
        %v429 = vsub.f32 %v424, %v428
        %v430 = vmul.f32 %v429, 0.63078314
        %v431 = vmul.f32 %v389, %v390
        %v432 = vmul.f32 %v431, 1.0925485
        %v433 = vsub.f32 %v426, %v425
        %v434 = vmul.f32 %v433, 0.54627424
        %s435 = smul.u32 %s33, 80
        %s436 = sld [smem:[#allocation11 + %s435]]
        %s437 = smul.f32 %s436, 0.2820948
        %v438 = vstv %s437
        %v439 = vmul.f32 %v438, %v399
        %v440 = vadd.f32 %v439, 0.0
        %s441 = sadd.s32 %s435, 1
        %s442 = sld [smem:[#allocation11 + %s441]]
        %s443 = smul.f32 %s442, 0.2820948
        %v444 = vstv %s443
        %v445 = vmul.f32 %v444, %v404
        %v446 = vadd.f32 %v440, %v445
        %s447 = sadd.s32 %s435, 2
        %s448 = sld [smem:[#allocation11 + %s447]]
        %v449 = vstv %s448
        %v450 = vmul.f32 %v449, %v417
        %v451 = vmul.f32 %v450, %v410
        %v452 = vadd.f32 %v446, %v451
        %s453 = sadd.s32 %s435, 3
        %s454 = sld [smem:[#allocation11 + %s453]]
        %v455 = vstv %s454
        %v456 = vmul.f32 %v455, %v418
        %v457 = vmul.f32 %v456, %v410
        %v458 = vadd.f32 %v452, %v457
        %s459 = sadd.s32 %s435, 4
        %s460 = sld [smem:[#allocation11 + %s459]]
        %v461 = vstv %s460
        %v462 = vmul.f32 %v461, %v419
        %v463 = vmul.f32 %v462, %v410
        %v464 = vadd.f32 %v458, %v463
        %s465 = sadd.s32 %s435, 5
        %s466 = sld [smem:[#allocation11 + %s465]]
        %v467 = vstv %s466
        %v468 = vmul.f32 %v467, %v421
        %v469 = vmul.f32 %v468, %v416
        %v470 = vadd.f32 %v464, %v469
        %s471 = sadd.s32 %s435, 6
        %s472 = sld [smem:[#allocation11 + %s471]]
        %v473 = vstv %s472
        %v474 = vmul.f32 %v473, %v423
        %v475 = vmul.f32 %v474, %v416
        %v476 = vadd.f32 %v470, %v475
        %s477 = sadd.s32 %s435, 7
        %s478 = sld [smem:[#allocation11 + %s477]]
        %v479 = vstv %s478
        %v480 = vmul.f32 %v479, %v430
        %v481 = vmul.f32 %v480, %v416
        %v482 = vadd.f32 %v476, %v481
        %s483 = sadd.s32 %s435, 8
        %s484 = sld [smem:[#allocation11 + %s483]]
        %v485 = vstv %s484
        %v486 = vmul.f32 %v485, %v432
        %v487 = vmul.f32 %v486, %v416
        %v488 = vadd.f32 %v482, %v487
        %s489 = sadd.s32 %s435, 9
        %s490 = sld [smem:[#allocation11 + %s489]]
        %v491 = vstv %s490
        %v492 = vmul.f32 %v491, %v434
        %v493 = vmul.f32 %v492, %v416
        %v494 = vadd.f32 %v488, %v493
        %s495 = sadd.s32 %s346, 1
        %s496 = sld [smem:[#allocation9 + %s495]]
        %s497 = smul.u32 %s495, 3
        %s498 = sld [smem:[#allocation10 + %s497]]
        %s499 = sadd.s32 %s497, 1
        %s500 = sld [smem:[#allocation10 + %s499]]
        %s501 = sadd.s32 %s497, 2
        %s502 = sld [smem:[#allocation10 + %s501]]
        %v503 = vstv %s498
        %v504 = vsub.f32 %v340, %v503
        %v505 = vstv %s500
        %v506 = vsub.f32 %v342, %v505
        %v507 = vstv %s502
        %v508 = vsub.f32 %v344, %v507
        %v509 = vmul.f32 %v504, %v504
        %v510 = vmul.f32 %v506, %v506
        %v511 = vadd.f32 %v509, %v510
        %v512 = vmul.f32 %v508, %v508
        %v513 = vadd.f32 %v511, %v512
        %v514 = vrsqrt.pop %v513
        %v515 = vmul.f32 %v514, %v513
        %v516 = vmul.f32 %v515, %v514
        %v517 = vmul.f32 0.5, %v516
        %v518 = vsub.f32 1.5, %v517
        %v519 = vmul.f32 %v514, %v518
        %v520 = vmul.f32 %v513, %v519
        %vm521 = vcmp.eq.f32.partialorder %v513, inf
        %v522 = vsel %vm521, %v513, %v520
        %vm523 = vcmp.eq.f32.partialorder %v513, 0.0
        %v524 = vand.u32 %v513, 2147483648
        %v525 = vsel %vm523, %v524, %v522
        %v526 = vadd.f32 %v513, 1e-24
        %v527 = vrsqrt.pop %v526
        %v528 = vmul.f32 %v527, %v526
        %v529 = vmul.f32 %v528, %v527
        %v530 = vmul.f32 0.5, %v529
        %v531 = vsub.f32 1.5, %v530
        %v532 = vmul.f32 %v527, %v531
        %vm533 = vweird.f32 %v526
        %vm534 = vweird.f32 %v527
        %vm535 = vmor %vm533, %vm534
        %v536 = vsel %vm535, %v527, %v532
        %v537 = vmul.f32 %v504, %v536
        %v538 = vmul.f32 %v506, %v536
        %v539 = vmul.f32 %v508, %v536
        %v540 = vadd.f32 %v525, 1e-08
        %v541 = vmul.f32 %v540, %v540
        %v542 = vstv %s496
        %vm543 = vcmp.eq.s32.totalorder %v345, %v542
        %v544 = vmul.f32 %v541, 0.5
        %v545 = vsub.f32 0.40696454, %v544
        %v546 = vmul.f32 %v545, 1.442695
        %v547 = vpow.pop %v546
        %v548 = vsel %vm543, %v547, 0.0
        %v549 = vmul.f32 %v541, 1.25
        %v550 = vsub.f32 1.0941826, %v549
        %v551 = vmul.f32 %v550, 1.442695
        %v552 = vpow.pop %v551
        %v553 = vsel %vm543, %v552, 0.0
        %v554 = vmul.f32 %v541, 0.8
        %v555 = vsub.f32 0.79173666, %v554
        %v556 = vmul.f32 %v555, 1.442695
        %v557 = vpow.pop %v556
        %v558 = vmul.f32 %v557, %v540
        %v559 = vsel %vm543, %v558, 0.0
        %v560 = vmul.f32 %v541, 1.6
        %v561 = vsub.f32 1.7816007, %v560
        %v562 = vmul.f32 %v561, 1.442695
        %v563 = vpow.pop %v562
        %v564 = vmul.f32 %v563, %v541
        %v565 = vsel %vm543, %v564, 0.0
        %v566 = vmul.f32 %v537, 0.48860252
        %v567 = vmul.f32 %v538, 0.48860252
        %v568 = vmul.f32 %v539, 0.48860252
        %v569 = vmul.f32 %v537, %v539
        %v570 = vmul.f32 %v569, 1.0925485
        %v571 = vmul.f32 %v537, %v538
        %v572 = vmul.f32 %v571, 1.0925485
        %v573 = vmul.f32 %v538, %v538
        %v574 = vmul.f32 %v537, %v537
        %v575 = vmul.f32 %v539, %v539
        %v576 = vadd.f32 %v574, %v575
        %v577 = vmul.f32 %v576, 0.5
        %v578 = vsub.f32 %v573, %v577
        %v579 = vmul.f32 %v578, 0.63078314
        %v580 = vmul.f32 %v538, %v539
        %v581 = vmul.f32 %v580, 1.0925485
        %v582 = vsub.f32 %v575, %v574
        %v583 = vmul.f32 %v582, 0.54627424
        %s584 = smul.u32 %s495, 10
        %s585 = sld [smem:[#allocation11 + %s584]]
        %s586 = smul.f32 %s585, 0.2820948
        %v587 = vstv %s586
        %v588 = vmul.f32 %v587, %v548
        %v589 = vadd.f32 %v494, %v588
        %s590 = sadd.s32 %s584, 1
        %s591 = sld [smem:[#allocation11 + %s590]]
        %s592 = smul.f32 %s591, 0.2820948
        %v593 = vstv %s592
        %v594 = vmul.f32 %v593, %v553
        %v595 = vadd.f32 %v589, %v594
        %s596 = sadd.s32 %s584, 2
        %s597 = sld [smem:[#allocation11 + %s596]]
        %v598 = vstv %s597
        %v599 = vmul.f32 %v598, %v566
        %v600 = vmul.f32 %v599, %v559
        %v601 = vadd.f32 %v595, %v600
        %s602 = sadd.s32 %s584, 3
        %s603 = sld [smem:[#allocation11 + %s602]]
        %v604 = vstv %s603
        %v605 = vmul.f32 %v604, %v567
        %v606 = vmul.f32 %v605, %v559
        %v607 = vadd.f32 %v601, %v606
        %s608 = sadd.s32 %s584, 4
        %s609 = sld [smem:[#allocation11 + %s608]]
        %v610 = vstv %s609
        %v611 = vmul.f32 %v610, %v568
        %v612 = vmul.f32 %v611, %v559
        %v613 = vadd.f32 %v607, %v612
        %s614 = sadd.s32 %s584, 5
        %s615 = sld [smem:[#allocation11 + %s614]]
        %v616 = vstv %s615
        %v617 = vmul.f32 %v616, %v570
        %v618 = vmul.f32 %v617, %v565
        %v619 = vadd.f32 %v613, %v618
        %s620 = sadd.s32 %s584, 6
        %s621 = sld [smem:[#allocation11 + %s620]]
        %v622 = vstv %s621
        %v623 = vmul.f32 %v622, %v572
        %v624 = vmul.f32 %v623, %v565
        %v625 = vadd.f32 %v619, %v624
        %s626 = sadd.s32 %s584, 7
        %s627 = sld [smem:[#allocation11 + %s626]]
        %v628 = vstv %s627
        %v629 = vmul.f32 %v628, %v579
        %v630 = vmul.f32 %v629, %v565
        %v631 = vadd.f32 %v625, %v630
        %s632 = sadd.s32 %s584, 8
        %s633 = sld [smem:[#allocation11 + %s632]]
        %v634 = vstv %s633
        %v635 = vmul.f32 %v634, %v581
        %v636 = vmul.f32 %v635, %v565
        %v637 = vadd.f32 %v631, %v636
        %s638 = sadd.s32 %s584, 9
        %s639 = sld [smem:[#allocation11 + %s638]]
        %v640 = vstv %s639
        %v641 = vmul.f32 %v640, %v583
        %v642 = vmul.f32 %v641, %v565
        %v643 = vadd.f32 %v637, %v642
        %s644 = sadd.s32 %s346, 2
        %s645 = sld [smem:[#allocation9 + %s644]]
        %s646 = smul.u32 %s644, 3
        %s647 = sld [smem:[#allocation10 + %s646]]
        %s648 = sadd.s32 %s646, 1
        %s649 = sld [smem:[#allocation10 + %s648]]
        %s650 = sadd.s32 %s646, 2
        %s651 = sld [smem:[#allocation10 + %s650]]
        %v652 = vstv %s647
        %v653 = vsub.f32 %v340, %v652
        %v654 = vstv %s649
        %v655 = vsub.f32 %v342, %v654
        %v656 = vstv %s651
        %v657 = vsub.f32 %v344, %v656
        %v658 = vmul.f32 %v653, %v653
        %v659 = vmul.f32 %v655, %v655
        %v660 = vadd.f32 %v658, %v659
        %v661 = vmul.f32 %v657, %v657
        %v662 = vadd.f32 %v660, %v661
        %v663 = vrsqrt.pop %v662
        %v664 = vmul.f32 %v663, %v662
        %v665 = vmul.f32 %v664, %v663
        %v666 = vmul.f32 0.5, %v665
        %v667 = vsub.f32 1.5, %v666
        %v668 = vmul.f32 %v663, %v667
        %v669 = vmul.f32 %v662, %v668
        %vm670 = vcmp.eq.f32.partialorder %v662, inf
        %v671 = vsel %vm670, %v662, %v669
        %vm672 = vcmp.eq.f32.partialorder %v662, 0.0
        %v673 = vand.u32 %v662, 2147483648
        %v674 = vsel %vm672, %v673, %v671
        %v675 = vadd.f32 %v662, 1e-24
        %v676 = vrsqrt.pop %v675
        %v677 = vmul.f32 %v676, %v675
        %v678 = vmul.f32 %v677, %v676
        %v679 = vmul.f32 0.5, %v678
        %v680 = vsub.f32 1.5, %v679
        %v681 = vmul.f32 %v676, %v680
        %vm682 = vweird.f32 %v675
        %vm683 = vweird.f32 %v676
        %vm684 = vmor %vm682, %vm683
        %v685 = vsel %vm684, %v676, %v681
        %v686 = vmul.f32 %v653, %v685
        %v687 = vmul.f32 %v655, %v685
        %v688 = vmul.f32 %v657, %v685
        %v689 = vadd.f32 %v674, 1e-08
        %v690 = vmul.f32 %v689, %v689
        %v691 = vstv %s645
        %vm692 = vcmp.eq.s32.totalorder %v345, %v691
        %v693 = vmul.f32 %v690, 0.5
        %v694 = vsub.f32 0.40696454, %v693
        %v695 = vmul.f32 %v694, 1.442695
        %v696 = vpow.pop %v695
        %v697 = vsel %vm692, %v696, 0.0
        %v698 = vmul.f32 %v690, 1.25
        %v699 = vsub.f32 1.0941826, %v698
        %v700 = vmul.f32 %v699, 1.442695
        %v701 = vpow.pop %v700
        %v702 = vsel %vm692, %v701, 0.0
        %v703 = vmul.f32 %v690, 0.8
        %v704 = vsub.f32 0.79173666, %v703
        %v705 = vmul.f32 %v704, 1.442695
        %v706 = vpow.pop %v705
        %v707 = vmul.f32 %v706, %v689
        %v708 = vsel %vm692, %v707, 0.0
        %v709 = vmul.f32 %v690, 1.6
        %v710 = vsub.f32 1.7816007, %v709
        %v711 = vmul.f32 %v710, 1.442695
        %v712 = vpow.pop %v711
        %v713 = vmul.f32 %v712, %v690
        %v714 = vsel %vm692, %v713, 0.0
        %v715 = vmul.f32 %v686, 0.48860252
        %v716 = vmul.f32 %v687, 0.48860252
        %v717 = vmul.f32 %v688, 0.48860252
        %v718 = vmul.f32 %v686, %v688
        %v719 = vmul.f32 %v718, 1.0925485
        %v720 = vmul.f32 %v686, %v687
        %v721 = vmul.f32 %v720, 1.0925485
        %v722 = vmul.f32 %v687, %v687
        %v723 = vmul.f32 %v686, %v686
        %v724 = vmul.f32 %v688, %v688
        %v725 = vadd.f32 %v723, %v724
        %v726 = vmul.f32 %v725, 0.5
        %v727 = vsub.f32 %v722, %v726
        %v728 = vmul.f32 %v727, 0.63078314
        %v729 = vmul.f32 %v687, %v688
        %v730 = vmul.f32 %v729, 1.0925485
        %v731 = vsub.f32 %v724, %v723
        %v732 = vmul.f32 %v731, 0.54627424
        %s733 = smul.u32 %s644, 10
        %s734 = sld [smem:[#allocation11 + %s733]]
        %s735 = smul.f32 %s734, 0.2820948
        %v736 = vstv %s735
        %v737 = vmul.f32 %v736, %v697
        %v738 = vadd.f32 %v643, %v737
        %s739 = sadd.s32 %s733, 1
        %s740 = sld [smem:[#allocation11 + %s739]]
        %s741 = smul.f32 %s740, 0.2820948
        %v742 = vstv %s741
        %v743 = vmul.f32 %v742, %v702
        %v744 = vadd.f32 %v738, %v743
        %s745 = sadd.s32 %s733, 2
        %s746 = sld [smem:[#allocation11 + %s745]]
        %v747 = vstv %s746
        %v748 = vmul.f32 %v747, %v715
        %v749 = vmul.f32 %v748, %v708
        %v750 = vadd.f32 %v744, %v749
        %s751 = sadd.s32 %s733, 3
        %s752 = sld [smem:[#allocation11 + %s751]]
        %v753 = vstv %s752
        %v754 = vmul.f32 %v753, %v716
        %v755 = vmul.f32 %v754, %v708
        %v756 = vadd.f32 %v750, %v755
        %s757 = sadd.s32 %s733, 4
        %s758 = sld [smem:[#allocation11 + %s757]]
        %v759 = vstv %s758
        %v760 = vmul.f32 %v759, %v717
        %v761 = vmul.f32 %v760, %v708
        %v762 = vadd.f32 %v756, %v761
        %s763 = sadd.s32 %s733, 5
        %s764 = sld [smem:[#allocation11 + %s763]]
        %v765 = vstv %s764
        %v766 = vmul.f32 %v765, %v719
        %v767 = vmul.f32 %v766, %v714
        %v768 = vadd.f32 %v762, %v767
        %s769 = sadd.s32 %s733, 6
        %s770 = sld [smem:[#allocation11 + %s769]]
        %v771 = vstv %s770
        %v772 = vmul.f32 %v771, %v721
        %v773 = vmul.f32 %v772, %v714
        %v774 = vadd.f32 %v768, %v773
        %s775 = sadd.s32 %s733, 7
        %s776 = sld [smem:[#allocation11 + %s775]]
        %v777 = vstv %s776
        %v778 = vmul.f32 %v777, %v728
        %v779 = vmul.f32 %v778, %v714
        %v780 = vadd.f32 %v774, %v779
        %s781 = sadd.s32 %s733, 8
        %s782 = sld [smem:[#allocation11 + %s781]]
        %v783 = vstv %s782
        %v784 = vmul.f32 %v783, %v730
        %v785 = vmul.f32 %v784, %v714
        %v786 = vadd.f32 %v780, %v785
        %s787 = sadd.s32 %s733, 9
        %s788 = sld [smem:[#allocation11 + %s787]]
        %v789 = vstv %s788
        %v790 = vmul.f32 %v789, %v732
        %v791 = vmul.f32 %v790, %v714
        %v792 = vadd.f32 %v786, %v791
        %s793 = sadd.s32 %s346, 3
        %s794 = sld [smem:[#allocation9 + %s793]]
        %s795 = smul.u32 %s793, 3
        %s796 = sld [smem:[#allocation10 + %s795]]
        %s797 = sadd.s32 %s795, 1
        %s798 = sld [smem:[#allocation10 + %s797]]
        %s799 = sadd.s32 %s795, 2
        %s800 = sld [smem:[#allocation10 + %s799]]
        %v801 = vstv %s796
        %v802 = vsub.f32 %v340, %v801
        %v803 = vstv %s798
        %v804 = vsub.f32 %v342, %v803
        %v805 = vstv %s800
        %v806 = vsub.f32 %v344, %v805
        %v807 = vmul.f32 %v802, %v802
        %v808 = vmul.f32 %v804, %v804
        %v809 = vadd.f32 %v807, %v808
        %v810 = vmul.f32 %v806, %v806
        %v811 = vadd.f32 %v809, %v810
        %v812 = vrsqrt.pop %v811
        %v813 = vmul.f32 %v812, %v811
        %v814 = vmul.f32 %v813, %v812
        %v815 = vmul.f32 0.5, %v814
        %v816 = vsub.f32 1.5, %v815
        %v817 = vmul.f32 %v812, %v816
        %v818 = vmul.f32 %v811, %v817
        %vm819 = vcmp.eq.f32.partialorder %v811, inf
        %v820 = vsel %vm819, %v811, %v818
        %vm821 = vcmp.eq.f32.partialorder %v811, 0.0
        %v822 = vand.u32 %v811, 2147483648
        %v823 = vsel %vm821, %v822, %v820
        %v824 = vadd.f32 %v811, 1e-24
        %v825 = vrsqrt.pop %v824
        %v826 = vmul.f32 %v825, %v824
        %v827 = vmul.f32 %v826, %v825
        %v828 = vmul.f32 0.5, %v827
        %v829 = vsub.f32 1.5, %v828
        %v830 = vmul.f32 %v825, %v829
        %vm831 = vweird.f32 %v824
        %vm832 = vweird.f32 %v825
        %vm833 = vmor %vm831, %vm832
        %v834 = vsel %vm833, %v825, %v830
        %v835 = vmul.f32 %v802, %v834
        %v836 = vmul.f32 %v804, %v834
        %v837 = vmul.f32 %v806, %v834
        %v838 = vadd.f32 %v823, 1e-08
        %v839 = vmul.f32 %v838, %v838
        %v840 = vstv %s794
        %vm841 = vcmp.eq.s32.totalorder %v345, %v840
        %v842 = vmul.f32 %v839, 0.5
        %v843 = vsub.f32 0.40696454, %v842
        %v844 = vmul.f32 %v843, 1.442695
        %v845 = vpow.pop %v844
        %v846 = vsel %vm841, %v845, 0.0
        %v847 = vmul.f32 %v839, 1.25
        %v848 = vsub.f32 1.0941826, %v847
        %v849 = vmul.f32 %v848, 1.442695
        %v850 = vpow.pop %v849
        %v851 = vsel %vm841, %v850, 0.0
        %v852 = vmul.f32 %v839, 0.8
        %v853 = vsub.f32 0.79173666, %v852
        %v854 = vmul.f32 %v853, 1.442695
        %v855 = vpow.pop %v854
        %v856 = vmul.f32 %v855, %v838
        %v857 = vsel %vm841, %v856, 0.0
        %v858 = vmul.f32 %v839, 1.6
        %v859 = vsub.f32 1.7816007, %v858
        %v860 = vmul.f32 %v859, 1.442695
        %v861 = vpow.pop %v860
        %v862 = vmul.f32 %v861, %v839
        %v863 = vsel %vm841, %v862, 0.0
        %v864 = vmul.f32 %v835, 0.48860252
        %v865 = vmul.f32 %v836, 0.48860252
        %v866 = vmul.f32 %v837, 0.48860252
        %v867 = vmul.f32 %v835, %v837
        %v868 = vmul.f32 %v867, 1.0925485
        %v869 = vmul.f32 %v835, %v836
        %v870 = vmul.f32 %v869, 1.0925485
        %v871 = vmul.f32 %v836, %v836
        %v872 = vmul.f32 %v835, %v835
        %v873 = vmul.f32 %v837, %v837
        %v874 = vadd.f32 %v872, %v873
        %v875 = vmul.f32 %v874, 0.5
        %v876 = vsub.f32 %v871, %v875
        %v877 = vmul.f32 %v876, 0.63078314
        %v878 = vmul.f32 %v836, %v837
        %v879 = vmul.f32 %v878, 1.0925485
        %v880 = vsub.f32 %v873, %v872
        %v881 = vmul.f32 %v880, 0.54627424
        %s882 = smul.u32 %s793, 10
        %s883 = sld [smem:[#allocation11 + %s882]]
        %s884 = smul.f32 %s883, 0.2820948
        %v885 = vstv %s884
        %v886 = vmul.f32 %v885, %v846
        %v887 = vadd.f32 %v792, %v886
        %s888 = sadd.s32 %s882, 1
        %s889 = sld [smem:[#allocation11 + %s888]]
        %s890 = smul.f32 %s889, 0.2820948
        %v891 = vstv %s890
        %v892 = vmul.f32 %v891, %v851
        %v893 = vadd.f32 %v887, %v892
        %s894 = sadd.s32 %s882, 2
        %s895 = sld [smem:[#allocation11 + %s894]]
        %v896 = vstv %s895
        %v897 = vmul.f32 %v896, %v864
        %v898 = vmul.f32 %v897, %v857
        %v899 = vadd.f32 %v893, %v898
        %s900 = sadd.s32 %s882, 3
        %s901 = sld [smem:[#allocation11 + %s900]]
        %v902 = vstv %s901
        %v903 = vmul.f32 %v902, %v865
        %v904 = vmul.f32 %v903, %v857
        %v905 = vadd.f32 %v899, %v904
        %s906 = sadd.s32 %s882, 4
        %s907 = sld [smem:[#allocation11 + %s906]]
        %v908 = vstv %s907
        %v909 = vmul.f32 %v908, %v866
        %v910 = vmul.f32 %v909, %v857
        %v911 = vadd.f32 %v905, %v910
        %s912 = sadd.s32 %s882, 5
        %s913 = sld [smem:[#allocation11 + %s912]]
        %v914 = vstv %s913
        %v915 = vmul.f32 %v914, %v868
        %v916 = vmul.f32 %v915, %v863
        %v917 = vadd.f32 %v911, %v916
        %s918 = sadd.s32 %s882, 6
        %s919 = sld [smem:[#allocation11 + %s918]]
        %v920 = vstv %s919
        %v921 = vmul.f32 %v920, %v870
        %v922 = vmul.f32 %v921, %v863
        %v923 = vadd.f32 %v917, %v922
        %s924 = sadd.s32 %s882, 7
        %s925 = sld [smem:[#allocation11 + %s924]]
        %v926 = vstv %s925
        %v927 = vmul.f32 %v926, %v877
        %v928 = vmul.f32 %v927, %v863
        %v929 = vadd.f32 %v923, %v928
        %s930 = sadd.s32 %s882, 8
        %s931 = sld [smem:[#allocation11 + %s930]]
        %v932 = vstv %s931
        %v933 = vmul.f32 %v932, %v879
        %v934 = vmul.f32 %v933, %v863
        %v935 = vadd.f32 %v929, %v934
        %s936 = sadd.s32 %s882, 9
        %s937 = sld [smem:[#allocation11 + %s936]]
        %v938 = vstv %s937
        %v939 = vmul.f32 %v938, %v881
        %v940 = vmul.f32 %v939, %v863
        %v941 = vadd.f32 %v935, %v940
        %s942 = sadd.s32 %s346, 4
        %s943 = sld [smem:[#allocation9 + %s942]]
        %s944 = smul.u32 %s942, 3
        %s945 = sld [smem:[#allocation10 + %s944]]
        %s946 = sadd.s32 %s944, 1
        %s947 = sld [smem:[#allocation10 + %s946]]
        %s948 = sadd.s32 %s944, 2
        %s949 = sld [smem:[#allocation10 + %s948]]
        %v950 = vstv %s945
        %v951 = vsub.f32 %v340, %v950
        %v952 = vstv %s947
        %v953 = vsub.f32 %v342, %v952
        %v954 = vstv %s949
        %v955 = vsub.f32 %v344, %v954
        %v956 = vmul.f32 %v951, %v951
        %v957 = vmul.f32 %v953, %v953
        %v958 = vadd.f32 %v956, %v957
        %v959 = vmul.f32 %v955, %v955
        %v960 = vadd.f32 %v958, %v959
        %v961 = vrsqrt.pop %v960
        %v962 = vmul.f32 %v961, %v960
        %v963 = vmul.f32 %v962, %v961
        %v964 = vmul.f32 0.5, %v963
        %v965 = vsub.f32 1.5, %v964
        %v966 = vmul.f32 %v961, %v965
        %v967 = vmul.f32 %v960, %v966
        %vm968 = vcmp.eq.f32.partialorder %v960, inf
        %v969 = vsel %vm968, %v960, %v967
        %vm970 = vcmp.eq.f32.partialorder %v960, 0.0
        %v971 = vand.u32 %v960, 2147483648
        %v972 = vsel %vm970, %v971, %v969
        %v973 = vadd.f32 %v960, 1e-24
        %v974 = vrsqrt.pop %v973
        %v975 = vmul.f32 %v974, %v973
        %v976 = vmul.f32 %v975, %v974
        %v977 = vmul.f32 0.5, %v976
        %v978 = vsub.f32 1.5, %v977
        %v979 = vmul.f32 %v974, %v978
        %vm980 = vweird.f32 %v973
        %vm981 = vweird.f32 %v974
        %vm982 = vmor %vm980, %vm981
        %v983 = vsel %vm982, %v974, %v979
        %v984 = vmul.f32 %v951, %v983
        %v985 = vmul.f32 %v953, %v983
        %v986 = vmul.f32 %v955, %v983
        %v987 = vadd.f32 %v972, 1e-08
        %v988 = vmul.f32 %v987, %v987
        %v989 = vstv %s943
        %vm990 = vcmp.eq.s32.totalorder %v345, %v989
        %v991 = vmul.f32 %v988, 0.5
        %v992 = vsub.f32 0.40696454, %v991
        %v993 = vmul.f32 %v992, 1.442695
        %v994 = vpow.pop %v993
        %v995 = vsel %vm990, %v994, 0.0
        %v996 = vmul.f32 %v988, 1.25
        %v997 = vsub.f32 1.0941826, %v996
        %v998 = vmul.f32 %v997, 1.442695
        %v999 = vpow.pop %v998
        %v1000 = vsel %vm990, %v999, 0.0
        %v1001 = vmul.f32 %v988, 0.8
        %v1002 = vsub.f32 0.79173666, %v1001
        %v1003 = vmul.f32 %v1002, 1.442695
        %v1004 = vpow.pop %v1003
        %v1005 = vmul.f32 %v1004, %v987
        %v1006 = vsel %vm990, %v1005, 0.0
        %v1007 = vmul.f32 %v988, 1.6
        %v1008 = vsub.f32 1.7816007, %v1007
        %v1009 = vmul.f32 %v1008, 1.442695
        %v1010 = vpow.pop %v1009
        %v1011 = vmul.f32 %v1010, %v988
        %v1012 = vsel %vm990, %v1011, 0.0
        %v1013 = vmul.f32 %v984, 0.48860252
        %v1014 = vmul.f32 %v985, 0.48860252
        %v1015 = vmul.f32 %v986, 0.48860252
        %v1016 = vmul.f32 %v984, %v986
        %v1017 = vmul.f32 %v1016, 1.0925485
        %v1018 = vmul.f32 %v984, %v985
        %v1019 = vmul.f32 %v1018, 1.0925485
        %v1020 = vmul.f32 %v985, %v985
        %v1021 = vmul.f32 %v984, %v984
        %v1022 = vmul.f32 %v986, %v986
        %v1023 = vadd.f32 %v1021, %v1022
        %v1024 = vmul.f32 %v1023, 0.5
        %v1025 = vsub.f32 %v1020, %v1024
        %v1026 = vmul.f32 %v1025, 0.63078314
        %v1027 = vmul.f32 %v985, %v986
        %v1028 = vmul.f32 %v1027, 1.0925485
        %v1029 = vsub.f32 %v1022, %v1021
        %v1030 = vmul.f32 %v1029, 0.54627424
        %s1031 = smul.u32 %s942, 10
        %s1032 = sld [smem:[#allocation11 + %s1031]]
        %s1033 = smul.f32 %s1032, 0.2820948
        %v1034 = vstv %s1033
        %v1035 = vmul.f32 %v1034, %v995
        %v1036 = vadd.f32 %v941, %v1035
        %s1037 = sadd.s32 %s1031, 1
        %s1038 = sld [smem:[#allocation11 + %s1037]]
        %s1039 = smul.f32 %s1038, 0.2820948
        %v1040 = vstv %s1039
        %v1041 = vmul.f32 %v1040, %v1000
        %v1042 = vadd.f32 %v1036, %v1041
        %s1043 = sadd.s32 %s1031, 2
        %s1044 = sld [smem:[#allocation11 + %s1043]]
        %v1045 = vstv %s1044
        %v1046 = vmul.f32 %v1045, %v1013
        %v1047 = vmul.f32 %v1046, %v1006
        %v1048 = vadd.f32 %v1042, %v1047
        %s1049 = sadd.s32 %s1031, 3
        %s1050 = sld [smem:[#allocation11 + %s1049]]
        %v1051 = vstv %s1050
        %v1052 = vmul.f32 %v1051, %v1014
        %v1053 = vmul.f32 %v1052, %v1006
        %v1054 = vadd.f32 %v1048, %v1053
        %s1055 = sadd.s32 %s1031, 4
        %s1056 = sld [smem:[#allocation11 + %s1055]]
        %v1057 = vstv %s1056
        %v1058 = vmul.f32 %v1057, %v1015
        %v1059 = vmul.f32 %v1058, %v1006
        %v1060 = vadd.f32 %v1054, %v1059
        %s1061 = sadd.s32 %s1031, 5
        %s1062 = sld [smem:[#allocation11 + %s1061]]
        %v1063 = vstv %s1062
        %v1064 = vmul.f32 %v1063, %v1017
        %v1065 = vmul.f32 %v1064, %v1012
        %v1066 = vadd.f32 %v1060, %v1065
        %s1067 = sadd.s32 %s1031, 6
        %s1068 = sld [smem:[#allocation11 + %s1067]]
        %v1069 = vstv %s1068
        %v1070 = vmul.f32 %v1069, %v1019
        %v1071 = vmul.f32 %v1070, %v1012
        %v1072 = vadd.f32 %v1066, %v1071
        %s1073 = sadd.s32 %s1031, 7
        %s1074 = sld [smem:[#allocation11 + %s1073]]
        %v1075 = vstv %s1074
        %v1076 = vmul.f32 %v1075, %v1026
        %v1077 = vmul.f32 %v1076, %v1012
        %v1078 = vadd.f32 %v1072, %v1077
        %s1079 = sadd.s32 %s1031, 8
        %s1080 = sld [smem:[#allocation11 + %s1079]]
        %v1081 = vstv %s1080
        %v1082 = vmul.f32 %v1081, %v1028
        %v1083 = vmul.f32 %v1082, %v1012
        %v1084 = vadd.f32 %v1078, %v1083
        %s1085 = sadd.s32 %s1031, 9
        %s1086 = sld [smem:[#allocation11 + %s1085]]
        %v1087 = vstv %s1086
        %v1088 = vmul.f32 %v1087, %v1030
        %v1089 = vmul.f32 %v1088, %v1012
        %v1090 = vadd.f32 %v1084, %v1089
        %s1091 = sadd.s32 %s346, 5
        %s1092 = sld [smem:[#allocation9 + %s1091]]
        %s1093 = smul.u32 %s1091, 3
        %s1094 = sld [smem:[#allocation10 + %s1093]]
        %s1095 = sadd.s32 %s1093, 1
        %s1096 = sld [smem:[#allocation10 + %s1095]]
        %s1097 = sadd.s32 %s1093, 2
        %s1098 = sld [smem:[#allocation10 + %s1097]]
        %v1099 = vstv %s1094
        %v1100 = vsub.f32 %v340, %v1099
        %v1101 = vstv %s1096
        %v1102 = vsub.f32 %v342, %v1101
        %v1103 = vstv %s1098
        %v1104 = vsub.f32 %v344, %v1103
        %v1105 = vmul.f32 %v1100, %v1100
        %v1106 = vmul.f32 %v1102, %v1102
        %v1107 = vadd.f32 %v1105, %v1106
        %v1108 = vmul.f32 %v1104, %v1104
        %v1109 = vadd.f32 %v1107, %v1108
        %v1110 = vrsqrt.pop %v1109
        %v1111 = vmul.f32 %v1110, %v1109
        %v1112 = vmul.f32 %v1111, %v1110
        %v1113 = vmul.f32 0.5, %v1112
        %v1114 = vsub.f32 1.5, %v1113
        %v1115 = vmul.f32 %v1110, %v1114
        %v1116 = vmul.f32 %v1109, %v1115
        %vm1117 = vcmp.eq.f32.partialorder %v1109, inf
        %v1118 = vsel %vm1117, %v1109, %v1116
        %vm1119 = vcmp.eq.f32.partialorder %v1109, 0.0
        %v1120 = vand.u32 %v1109, 2147483648
        %v1121 = vsel %vm1119, %v1120, %v1118
        %v1122 = vadd.f32 %v1109, 1e-24
        %v1123 = vrsqrt.pop %v1122
        %v1124 = vmul.f32 %v1123, %v1122
        %v1125 = vmul.f32 %v1124, %v1123
        %v1126 = vmul.f32 0.5, %v1125
        %v1127 = vsub.f32 1.5, %v1126
        %v1128 = vmul.f32 %v1123, %v1127
        %vm1129 = vweird.f32 %v1122
        %vm1130 = vweird.f32 %v1123
        %vm1131 = vmor %vm1129, %vm1130
        %v1132 = vsel %vm1131, %v1123, %v1128
        %v1133 = vmul.f32 %v1100, %v1132
        %v1134 = vmul.f32 %v1102, %v1132
        %v1135 = vmul.f32 %v1104, %v1132
        %v1136 = vadd.f32 %v1121, 1e-08
        %v1137 = vmul.f32 %v1136, %v1136
        %v1138 = vstv %s1092
        %vm1139 = vcmp.eq.s32.totalorder %v345, %v1138
        %v1140 = vmul.f32 %v1137, 0.5
        %v1141 = vsub.f32 0.40696454, %v1140
        %v1142 = vmul.f32 %v1141, 1.442695
        %v1143 = vpow.pop %v1142
        %v1144 = vsel %vm1139, %v1143, 0.0
        %v1145 = vmul.f32 %v1137, 1.25
        %v1146 = vsub.f32 1.0941826, %v1145
        %v1147 = vmul.f32 %v1146, 1.442695
        %v1148 = vpow.pop %v1147
        %v1149 = vsel %vm1139, %v1148, 0.0
        %v1150 = vmul.f32 %v1137, 0.8
        %v1151 = vsub.f32 0.79173666, %v1150
        %v1152 = vmul.f32 %v1151, 1.442695
        %v1153 = vpow.pop %v1152
        %v1154 = vmul.f32 %v1153, %v1136
        %v1155 = vsel %vm1139, %v1154, 0.0
        %v1156 = vmul.f32 %v1137, 1.6
        %v1157 = vsub.f32 1.7816007, %v1156
        %v1158 = vmul.f32 %v1157, 1.442695
        %v1159 = vpow.pop %v1158
        %v1160 = vmul.f32 %v1159, %v1137
        %v1161 = vsel %vm1139, %v1160, 0.0
        %v1162 = vmul.f32 %v1133, 0.48860252
        %v1163 = vmul.f32 %v1134, 0.48860252
        %v1164 = vmul.f32 %v1135, 0.48860252
        %v1165 = vmul.f32 %v1133, %v1135
        %v1166 = vmul.f32 %v1165, 1.0925485
        %v1167 = vmul.f32 %v1133, %v1134
        %v1168 = vmul.f32 %v1167, 1.0925485
        %v1169 = vmul.f32 %v1134, %v1134
        %v1170 = vmul.f32 %v1133, %v1133
        %v1171 = vmul.f32 %v1135, %v1135
        %v1172 = vadd.f32 %v1170, %v1171
        %v1173 = vmul.f32 %v1172, 0.5
        %v1174 = vsub.f32 %v1169, %v1173
        %v1175 = vmul.f32 %v1174, 0.63078314
        %v1176 = vmul.f32 %v1134, %v1135
        %v1177 = vmul.f32 %v1176, 1.0925485
        %v1178 = vsub.f32 %v1171, %v1170
        %v1179 = vmul.f32 %v1178, 0.54627424
        %s1180 = smul.u32 %s1091, 10
        %s1181 = sld [smem:[#allocation11 + %s1180]]
        %s1182 = smul.f32 %s1181, 0.2820948
        %v1183 = vstv %s1182
        %v1184 = vmul.f32 %v1183, %v1144
        %v1185 = vadd.f32 %v1090, %v1184
        %s1186 = sadd.s32 %s1180, 1
        %s1187 = sld [smem:[#allocation11 + %s1186]]
        %s1188 = smul.f32 %s1187, 0.2820948
        %v1189 = vstv %s1188
        %v1190 = vmul.f32 %v1189, %v1149
        %v1191 = vadd.f32 %v1185, %v1190
        %s1192 = sadd.s32 %s1180, 2
        %s1193 = sld [smem:[#allocation11 + %s1192]]
        %v1194 = vstv %s1193
        %v1195 = vmul.f32 %v1194, %v1162
        %v1196 = vmul.f32 %v1195, %v1155
        %v1197 = vadd.f32 %v1191, %v1196
        %s1198 = sadd.s32 %s1180, 3
        %s1199 = sld [smem:[#allocation11 + %s1198]]
        %v1200 = vstv %s1199
        %v1201 = vmul.f32 %v1200, %v1163
        %v1202 = vmul.f32 %v1201, %v1155
        %v1203 = vadd.f32 %v1197, %v1202
        %s1204 = sadd.s32 %s1180, 4
        %s1205 = sld [smem:[#allocation11 + %s1204]]
        %v1206 = vstv %s1205
        %v1207 = vmul.f32 %v1206, %v1164
        %v1208 = vmul.f32 %v1207, %v1155
        %v1209 = vadd.f32 %v1203, %v1208
        %s1210 = sadd.s32 %s1180, 5
        %s1211 = sld [smem:[#allocation11 + %s1210]]
        %v1212 = vstv %s1211
        %v1213 = vmul.f32 %v1212, %v1166
        %v1214 = vmul.f32 %v1213, %v1161
        %v1215 = vadd.f32 %v1209, %v1214
        %s1216 = sadd.s32 %s1180, 6
        %s1217 = sld [smem:[#allocation11 + %s1216]]
        %v1218 = vstv %s1217
        %v1219 = vmul.f32 %v1218, %v1168
        %v1220 = vmul.f32 %v1219, %v1161
        %v1221 = vadd.f32 %v1215, %v1220
        %s1222 = sadd.s32 %s1180, 7
        %s1223 = sld [smem:[#allocation11 + %s1222]]
        %v1224 = vstv %s1223
        %v1225 = vmul.f32 %v1224, %v1175
        %v1226 = vmul.f32 %v1225, %v1161
        %v1227 = vadd.f32 %v1221, %v1226
        %s1228 = sadd.s32 %s1180, 8
        %s1229 = sld [smem:[#allocation11 + %s1228]]
        %v1230 = vstv %s1229
        %v1231 = vmul.f32 %v1230, %v1177
        %v1232 = vmul.f32 %v1231, %v1161
        %v1233 = vadd.f32 %v1227, %v1232
        %s1234 = sadd.s32 %s1180, 9
        %s1235 = sld [smem:[#allocation11 + %s1234]]
        %v1236 = vstv %s1235
        %v1237 = vmul.f32 %v1236, %v1179
        %v1238 = vmul.f32 %v1237, %v1161
        %v1239 = vadd.f32 %v1233, %v1238
        %s1240 = sadd.s32 %s346, 6
        %s1241 = sld [smem:[#allocation9 + %s1240]]
        %s1242 = smul.u32 %s1240, 3
        %s1243 = sld [smem:[#allocation10 + %s1242]]
        %s1244 = sadd.s32 %s1242, 1
        %s1245 = sld [smem:[#allocation10 + %s1244]]
        %s1246 = sadd.s32 %s1242, 2
        %s1247 = sld [smem:[#allocation10 + %s1246]]
        %v1248 = vstv %s1243
        %v1249 = vsub.f32 %v340, %v1248
        %v1250 = vstv %s1245
        %v1251 = vsub.f32 %v342, %v1250
        %v1252 = vstv %s1247
        %v1253 = vsub.f32 %v344, %v1252
        %v1254 = vmul.f32 %v1249, %v1249
        %v1255 = vmul.f32 %v1251, %v1251
        %v1256 = vadd.f32 %v1254, %v1255
        %v1257 = vmul.f32 %v1253, %v1253
        %v1258 = vadd.f32 %v1256, %v1257
        %v1259 = vrsqrt.pop %v1258
        %v1260 = vmul.f32 %v1259, %v1258
        %v1261 = vmul.f32 %v1260, %v1259
        %v1262 = vmul.f32 0.5, %v1261
        %v1263 = vsub.f32 1.5, %v1262
        %v1264 = vmul.f32 %v1259, %v1263
        %v1265 = vmul.f32 %v1258, %v1264
        %vm1266 = vcmp.eq.f32.partialorder %v1258, inf
        %v1267 = vsel %vm1266, %v1258, %v1265
        %vm1268 = vcmp.eq.f32.partialorder %v1258, 0.0
        %v1269 = vand.u32 %v1258, 2147483648
        %v1270 = vsel %vm1268, %v1269, %v1267
        %v1271 = vadd.f32 %v1258, 1e-24
        %v1272 = vrsqrt.pop %v1271
        %v1273 = vmul.f32 %v1272, %v1271
        %v1274 = vmul.f32 %v1273, %v1272
        %v1275 = vmul.f32 0.5, %v1274
        %v1276 = vsub.f32 1.5, %v1275
        %v1277 = vmul.f32 %v1272, %v1276
        %vm1278 = vweird.f32 %v1271
        %vm1279 = vweird.f32 %v1272
        %vm1280 = vmor %vm1278, %vm1279
        %v1281 = vsel %vm1280, %v1272, %v1277
        %v1282 = vmul.f32 %v1249, %v1281
        %v1283 = vmul.f32 %v1251, %v1281
        %v1284 = vmul.f32 %v1253, %v1281
        %v1285 = vadd.f32 %v1270, 1e-08
        %v1286 = vmul.f32 %v1285, %v1285
        %v1287 = vstv %s1241
        %vm1288 = vcmp.eq.s32.totalorder %v345, %v1287
        %v1289 = vmul.f32 %v1286, 0.5
        %v1290 = vsub.f32 0.40696454, %v1289
        %v1291 = vmul.f32 %v1290, 1.442695
        %v1292 = vpow.pop %v1291
        %v1293 = vsel %vm1288, %v1292, 0.0
        %v1294 = vmul.f32 %v1286, 1.25
        %v1295 = vsub.f32 1.0941826, %v1294
        %v1296 = vmul.f32 %v1295, 1.442695
        %v1297 = vpow.pop %v1296
        %v1298 = vsel %vm1288, %v1297, 0.0
        %v1299 = vmul.f32 %v1286, 0.8
        %v1300 = vsub.f32 0.79173666, %v1299
        %v1301 = vmul.f32 %v1300, 1.442695
        %v1302 = vpow.pop %v1301
        %v1303 = vmul.f32 %v1302, %v1285
        %v1304 = vsel %vm1288, %v1303, 0.0
        %v1305 = vmul.f32 %v1286, 1.6
        %v1306 = vsub.f32 1.7816007, %v1305
        %v1307 = vmul.f32 %v1306, 1.442695
        %v1308 = vpow.pop %v1307
        %v1309 = vmul.f32 %v1308, %v1286
        %v1310 = vsel %vm1288, %v1309, 0.0
        %v1311 = vmul.f32 %v1282, 0.48860252
        %v1312 = vmul.f32 %v1283, 0.48860252
        %v1313 = vmul.f32 %v1284, 0.48860252
        %v1314 = vmul.f32 %v1282, %v1284
        %v1315 = vmul.f32 %v1314, 1.0925485
        %v1316 = vmul.f32 %v1282, %v1283
        %v1317 = vmul.f32 %v1316, 1.0925485
        %v1318 = vmul.f32 %v1283, %v1283
        %v1319 = vmul.f32 %v1282, %v1282
        %v1320 = vmul.f32 %v1284, %v1284
        %v1321 = vadd.f32 %v1319, %v1320
        %v1322 = vmul.f32 %v1321, 0.5
        %v1323 = vsub.f32 %v1318, %v1322
        %v1324 = vmul.f32 %v1323, 0.63078314
        %v1325 = vmul.f32 %v1283, %v1284
        %v1326 = vmul.f32 %v1325, 1.0925485
        %v1327 = vsub.f32 %v1320, %v1319
        %v1328 = vmul.f32 %v1327, 0.54627424
        %s1329 = smul.u32 %s1240, 10
        %s1330 = sld [smem:[#allocation11 + %s1329]]
        %s1331 = smul.f32 %s1330, 0.2820948
        %v1332 = vstv %s1331
        %v1333 = vmul.f32 %v1332, %v1293
        %v1334 = vadd.f32 %v1239, %v1333
        %s1335 = sadd.s32 %s1329, 1
        %s1336 = sld [smem:[#allocation11 + %s1335]]
        %s1337 = smul.f32 %s1336, 0.2820948
        %v1338 = vstv %s1337
        %v1339 = vmul.f32 %v1338, %v1298
        %v1340 = vadd.f32 %v1334, %v1339
        %s1341 = sadd.s32 %s1329, 2
        %s1342 = sld [smem:[#allocation11 + %s1341]]
        %v1343 = vstv %s1342
        %v1344 = vmul.f32 %v1343, %v1311
        %v1345 = vmul.f32 %v1344, %v1304
        %v1346 = vadd.f32 %v1340, %v1345
        %s1347 = sadd.s32 %s1329, 3
        %s1348 = sld [smem:[#allocation11 + %s1347]]
        %v1349 = vstv %s1348
        %v1350 = vmul.f32 %v1349, %v1312
        %v1351 = vmul.f32 %v1350, %v1304
        %v1352 = vadd.f32 %v1346, %v1351
        %s1353 = sadd.s32 %s1329, 4
        %s1354 = sld [smem:[#allocation11 + %s1353]]
        %v1355 = vstv %s1354
        %v1356 = vmul.f32 %v1355, %v1313
        %v1357 = vmul.f32 %v1356, %v1304
        %v1358 = vadd.f32 %v1352, %v1357
        %s1359 = sadd.s32 %s1329, 5
        %s1360 = sld [smem:[#allocation11 + %s1359]]
        %v1361 = vstv %s1360
        %v1362 = vmul.f32 %v1361, %v1315
        %v1363 = vmul.f32 %v1362, %v1310
        %v1364 = vadd.f32 %v1358, %v1363
        %s1365 = sadd.s32 %s1329, 6
        %s1366 = sld [smem:[#allocation11 + %s1365]]
        %v1367 = vstv %s1366
        %v1368 = vmul.f32 %v1367, %v1317
        %v1369 = vmul.f32 %v1368, %v1310
        %v1370 = vadd.f32 %v1364, %v1369
        %s1371 = sadd.s32 %s1329, 7
        %s1372 = sld [smem:[#allocation11 + %s1371]]
        %v1373 = vstv %s1372
        %v1374 = vmul.f32 %v1373, %v1324
        %v1375 = vmul.f32 %v1374, %v1310
        %v1376 = vadd.f32 %v1370, %v1375
        %s1377 = sadd.s32 %s1329, 8
        %s1378 = sld [smem:[#allocation11 + %s1377]]
        %v1379 = vstv %s1378
        %v1380 = vmul.f32 %v1379, %v1326
        %v1381 = vmul.f32 %v1380, %v1310
        %v1382 = vadd.f32 %v1376, %v1381
        %s1383 = sadd.s32 %s1329, 9
        %s1384 = sld [smem:[#allocation11 + %s1383]]
        %v1385 = vstv %s1384
        %v1386 = vmul.f32 %v1385, %v1328
        %v1387 = vmul.f32 %v1386, %v1310
        %v1388 = vadd.f32 %v1382, %v1387
        %s1389 = sadd.s32 %s346, 7
        %s1390 = sld [smem:[#allocation9 + %s1389]]
        %s1391 = smul.u32 %s1389, 3
        %s1392 = sld [smem:[#allocation10 + %s1391]]
        %s1393 = sadd.s32 %s1391, 1
        %s1394 = sld [smem:[#allocation10 + %s1393]]
        %s1395 = sadd.s32 %s1391, 2
        %s1396 = sld [smem:[#allocation10 + %s1395]]
        %v1397 = vstv %s1392
        %v1398 = vsub.f32 %v340, %v1397
        %v1399 = vstv %s1394
        %v1400 = vsub.f32 %v342, %v1399
        %v1401 = vstv %s1396
        %v1402 = vsub.f32 %v344, %v1401
        %v1403 = vmul.f32 %v1398, %v1398
        %v1404 = vmul.f32 %v1400, %v1400
        %v1405 = vadd.f32 %v1403, %v1404
        %v1406 = vmul.f32 %v1402, %v1402
        %v1407 = vadd.f32 %v1405, %v1406
        %v1408 = vrsqrt.pop %v1407
        %v1409 = vmul.f32 %v1408, %v1407
        %v1410 = vmul.f32 %v1409, %v1408
        %v1411 = vmul.f32 0.5, %v1410
        %v1412 = vsub.f32 1.5, %v1411
        %v1413 = vmul.f32 %v1408, %v1412
        %v1414 = vmul.f32 %v1407, %v1413
        %vm1415 = vcmp.eq.f32.partialorder %v1407, inf
        %v1416 = vsel %vm1415, %v1407, %v1414
        %vm1417 = vcmp.eq.f32.partialorder %v1407, 0.0
        %v1418 = vand.u32 %v1407, 2147483648
        %v1419 = vsel %vm1417, %v1418, %v1416
        %v1420 = vadd.f32 %v1407, 1e-24
        %v1421 = vrsqrt.pop %v1420
        %v1422 = vmul.f32 %v1421, %v1420
        %v1423 = vmul.f32 %v1422, %v1421
        %v1424 = vmul.f32 0.5, %v1423
        %v1425 = vsub.f32 1.5, %v1424
        %v1426 = vmul.f32 %v1421, %v1425
        %vm1427 = vweird.f32 %v1420
        %vm1428 = vweird.f32 %v1421
        %vm1429 = vmor %vm1427, %vm1428
        %v1430 = vsel %vm1429, %v1421, %v1426
        %v1431 = vmul.f32 %v1398, %v1430
        %v1432 = vmul.f32 %v1400, %v1430
        %v1433 = vmul.f32 %v1402, %v1430
        %v1434 = vadd.f32 %v1419, 1e-08
        %v1435 = vmul.f32 %v1434, %v1434
        %v1436 = vstv %s1390
        %vm1437 = vcmp.eq.s32.totalorder %v345, %v1436
        %v1438 = vmul.f32 %v1435, 0.5
        %v1439 = vsub.f32 0.40696454, %v1438
        %v1440 = vmul.f32 %v1439, 1.442695
        %v1441 = vpow.pop %v1440
        %v1442 = vsel %vm1437, %v1441, 0.0
        %v1443 = vmul.f32 %v1435, 1.25
        %v1444 = vsub.f32 1.0941826, %v1443
        %v1445 = vmul.f32 %v1444, 1.442695
        %v1446 = vpow.pop %v1445
        %v1447 = vsel %vm1437, %v1446, 0.0
        %v1448 = vmul.f32 %v1435, 0.8
        %v1449 = vsub.f32 0.79173666, %v1448
        %v1450 = vmul.f32 %v1449, 1.442695
        %v1451 = vpow.pop %v1450
        %v1452 = vmul.f32 %v1451, %v1434
        %v1453 = vsel %vm1437, %v1452, 0.0
        %v1454 = vmul.f32 %v1435, 1.6
        %v1455 = vsub.f32 1.7816007, %v1454
        %v1456 = vmul.f32 %v1455, 1.442695
        %v1457 = vpow.pop %v1456
        %v1458 = vmul.f32 %v1457, %v1435
        %v1459 = vsel %vm1437, %v1458, 0.0
        %v1460 = vmul.f32 %v1431, 0.48860252
        %v1461 = vmul.f32 %v1432, 0.48860252
        %v1462 = vmul.f32 %v1433, 0.48860252
        %v1463 = vmul.f32 %v1431, %v1433
        %v1464 = vmul.f32 %v1463, 1.0925485
        %v1465 = vmul.f32 %v1431, %v1432
        %v1466 = vmul.f32 %v1465, 1.0925485
        %v1467 = vmul.f32 %v1432, %v1432
        %v1468 = vmul.f32 %v1431, %v1431
        %v1469 = vmul.f32 %v1433, %v1433
        %v1470 = vadd.f32 %v1468, %v1469
        %v1471 = vmul.f32 %v1470, 0.5
        %v1472 = vsub.f32 %v1467, %v1471
        %v1473 = vmul.f32 %v1472, 0.63078314
        %v1474 = vmul.f32 %v1432, %v1433
        %v1475 = vmul.f32 %v1474, 1.0925485
        %v1476 = vsub.f32 %v1469, %v1468
        %v1477 = vmul.f32 %v1476, 0.54627424
        %s1478 = smul.u32 %s1389, 10
        %s1479 = sld [smem:[#allocation11 + %s1478]]
        %s1480 = smul.f32 %s1479, 0.2820948
        %v1481 = vstv %s1480
        %v1482 = vmul.f32 %v1481, %v1442
        %v1483 = vadd.f32 %v1388, %v1482
        %s1484 = sadd.s32 %s1478, 1
        %s1485 = sld [smem:[#allocation11 + %s1484]]
        %s1486 = smul.f32 %s1485, 0.2820948
        %v1487 = vstv %s1486
        %v1488 = vmul.f32 %v1487, %v1447
        %v1489 = vadd.f32 %v1483, %v1488
        %s1490 = sadd.s32 %s1478, 2
        %s1491 = sld [smem:[#allocation11 + %s1490]]
        %v1492 = vstv %s1491
        %v1493 = vmul.f32 %v1492, %v1460
        %v1494 = vmul.f32 %v1493, %v1453
        %v1495 = vadd.f32 %v1489, %v1494
        %s1496 = sadd.s32 %s1478, 3
        %s1497 = sld [smem:[#allocation11 + %s1496]]
        %v1498 = vstv %s1497
        %v1499 = vmul.f32 %v1498, %v1461
        %v1500 = vmul.f32 %v1499, %v1453
        %v1501 = vadd.f32 %v1495, %v1500
        %s1502 = sadd.s32 %s1478, 4
        %s1503 = sld [smem:[#allocation11 + %s1502]]
        %v1504 = vstv %s1503
        %v1505 = vmul.f32 %v1504, %v1462
        %v1506 = vmul.f32 %v1505, %v1453
        %v1507 = vadd.f32 %v1501, %v1506
        %s1508 = sadd.s32 %s1478, 5
        %s1509 = sld [smem:[#allocation11 + %s1508]]
        %v1510 = vstv %s1509
        %v1511 = vmul.f32 %v1510, %v1464
        %v1512 = vmul.f32 %v1511, %v1459
        %v1513 = vadd.f32 %v1507, %v1512
        %s1514 = sadd.s32 %s1478, 6
        %s1515 = sld [smem:[#allocation11 + %s1514]]
        %v1516 = vstv %s1515
        %v1517 = vmul.f32 %v1516, %v1466
        %v1518 = vmul.f32 %v1517, %v1459
        %v1519 = vadd.f32 %v1513, %v1518
        %s1520 = sadd.s32 %s1478, 7
        %s1521 = sld [smem:[#allocation11 + %s1520]]
        %v1522 = vstv %s1521
        %v1523 = vmul.f32 %v1522, %v1473
        %v1524 = vmul.f32 %v1523, %v1459
        %v1525 = vadd.f32 %v1519, %v1524
        %s1526 = sadd.s32 %s1478, 8
        %s1527 = sld [smem:[#allocation11 + %s1526]]
        %v1528 = vstv %s1527
        %v1529 = vmul.f32 %v1528, %v1475
        %v1530 = vmul.f32 %v1529, %v1459
        %v1531 = vadd.f32 %v1525, %v1530
        %s1532 = sadd.s32 %s1478, 9
        %s1533 = sld [smem:[#allocation11 + %s1532]]
        %v1534 = vstv %s1533
        %v1535 = vmul.f32 %v1534, %v1477
        %v1536 = vmul.f32 %v1535, %v1459
        %v1537 = vadd.f32 %v1531, %v1536
        %v1538 = vld [vmem:[%s334] sm:$0xff]
        %v1539 = vadd.f32 %v1538, %v1537
        %1540 = vst [vmem:[%s334] sm:$0xff] %v1539
        %s1541 = sand.u32 %s163, 1
        %s1542 = scalar_lea.sflag [#allocation4], %s1541
        %s1543 = sand.u32 %s163, 1
        %s1544 = smul.addr %s1543, 8
        %s1545 = scalar_lea.vmem [#allocation13], %s1544
        // Predicated region
        $region65: #{tpu_custom_call.1} parent=39 // pred_check
          %p1546 = pneg %p173
        $region66: #{tpu_custom_call.1} parent=39 // pred_check_branch
          %1548 = sbr.rel (%p1546) target = $region68
        $region67: #{tpu_custom_call.1} parent=39 // pred_region
          %1550 = vsyncadd %s1542, 0
          %s1551 = smul.addr %s32, 8
          %s1552 = scalar_lea.hbm %s5, %s1551
          %s1554 = sshll.u32 %s1545, 4
          %s1555 = int_to_ptr.vmem [resolvable:$true] %s1554
          %s1556 = sshll.u32 %s1552, 4
          %s1557 = int_to_ptr.hbm [resolvable:$true] %s1556
          %1559 = dma.vmem_to_hbm [thread:$0]  %s1555, 128, %s1557, %s1542
        $region68: #{tpu_custom_call.1} parent=39 // pred_fallthru
          _
      $region40: #{tpu_custom_call.1} parent=5 // pred_fallthru
        _
      %p1560 = scmp.le.s32.totalorder 2, %s23
      // Predicated region
      $region69: #{tpu_custom_call.1} parent=5 // pred_check
        %p1561 = pneg %p1560
      $region70: #{tpu_custom_call.1} parent=5 // pred_check_branch
        %1563 = sbr.rel (%p1561) target = $region72
      $region71: #{tpu_custom_call.1} parent=5 // pred_region
        %s1564 = ssub.s32 %s23, 2
        // Predicated region
        $region73: #{tpu_custom_call.1} parent=71 // pred_check
          %p1565 = pneg %p179
        $region74: #{tpu_custom_call.1} parent=71 // pred_check_branch
          %1567 = sbr.rel (%p1565) target = $region76
        $region75: #{tpu_custom_call.1} parent=71 // pred_region
          %s1568 = sand.u32 %s164, 1
          %s1569 = scalar_lea.sflag [#allocation4], %s1568
          %s1570 = sand.u32 %s164, 1
          %s1571 = smul.addr %s1570, 8
          %s1572 = scalar_lea.vmem [#allocation13], %s1571
          %1574 = dma.done %s1569, 128
        $region76: #{tpu_custom_call.1} parent=71 // pred_fallthru
          _
      $region72: #{tpu_custom_call.1} parent=5 // pred_fallthru
        _
    $region6: #{tpu_custom_call.1} parent=1 // loop_footer
      %s27 = sadd.s32 1, %s23
    $region7: #{tpu_custom_call.1} parent=1 // loop_footer_branch
      %22 = sbr.rel target = $region3
    $region8: #{tpu_custom_call.1} parent=1 // loop_exit
      _
    %1575 = vsyncpa [#allocation3], 1
    %s1576 = scalar_lea.sflag [#allocation3], 1
    %1577 = vsyncpa %s1576, 1
    %1578 = vsyncpa [#allocation8], 1
    %s1579 = scalar_lea.sflag [#allocation8], 1
    %1580 = vsyncpa %s1579, 1
    %1581 = vsyncpa [#allocation4], 1
    %s1582 = scalar_lea.sflag [#allocation4], 1
    %1583 = vsyncpa %s1582, 1
    %1584 = vsyncpa [#allocation5], 1
    %s1585 = scalar_lea.sflag [#allocation5], 1
    %1586 = vsyncpa %s1585, 1
    %1587 = vsyncpa [#allocation6], 1
    %s1588 = scalar_lea.sflag [#allocation6], 1
    %1589 = vsyncpa %s1588, 1
    %1590 = vsyncpa [#allocation12], 1

</llo_original>
